<compile_context>
chip_gen: v7x
topology: tpu7x:2x2x1
jax: 0.10.0
libtpu: 0.0.40
codegen_flags: <defaults>
</compile_context>

<pallas_src>
import functools

import jax
import jax.numpy as jnp
import numpy as np
from jax import lax
from jax.experimental import pallas as pl
from jax.experimental.pallas import tpu as pltpu

EPS = 1e-5   # nn.InstanceNorm2d default eps
IMG = 8      # sublane-aligned column offset of the image in the padded scratch


def _resnet_block_kernel(x_ref, w1_ref, w2_ref, o_ref,
                         pad_ref, col_ref, acc_ref, *, H, W, C):
    """One batch element per grid step (NHWC inside the kernel).

    x_ref    : (1, H, W, C)        f32 input tile
    w*_ref   : (3, 3*C, C)         f32 conv weights, dy-slabs of [w[dy,0];w[dy,1];w[dy,2]]
    o_ref    : (1, H, W, C)        f32 output tile
    pad_ref  : (H+2, W+16, C)      padded image, reused by both convs
    col_ref  : (H+2, W, 3*C)       dx-taps folded onto the channel/lane axis
    acc_ref  : (H*W, C)            f32 conv accumulator
    """
    PW = W + 2 * IMG
    inv_hw = 1.0 / (H * W)

    # --- zero only the halo bands of the reused padded scratch -------------
    # (interior [1:H+1, IMG:IMG+W] is fully overwritten before each conv)
    zrow = jnp.zeros((1, PW, C), jnp.float32)
    pad_ref[0:1, :, :] = zrow                      # top halo row
    pad_ref[H + 1:H + 2, :, :] = zrow              # bottom halo row
    zcol = jnp.zeros((H + 2, 8, C), jnp.float32)
    pad_ref[:, 0:8, :] = zcol                      # covers left zero column  (IMG-1)
    pad_ref[:, PW - 8:PW, :] = zcol                # covers right zero column (IMG+W)

    def conv3x3(w_ref):
        """3x3 'same' conv of the image currently in pad_ref -> acc_ref."""
        # Fold the three dx taps into the matmul contraction dimension:
        #   col[:, x, dx*C + cin] = pad[:, IMG-1+dx + x, cin]
        # Only the two off-centre slices are sublane-unaligned (2 relayouts).
        left = pad_ref[:, IMG - 1:IMG - 1 + W, :]    # dx = 0
        centre = pad_ref[:, IMG:IMG + W, :]          # dx = 1 (aligned)
        right = pad_ref[:, IMG + 1:IMG + 1 + W, :]   # dx = 2
        col_ref[...] = jnp.concatenate([left, centre, right], axis=-1)
        for dy in range(3):
            # Leading-axis row slice (no sublane relayout); reshape is free
            # when W is a multiple of 8.
            patch = col_ref[dy:dy + H].reshape(H * W, 3 * C)
            t = jnp.dot(patch, w_ref[dy], preferred_element_type=jnp.float32)
            if dy == 0:
                acc_ref[...] = t          # no zero-init sweep needed
            else:
                acc_ref[...] += t
        # NOTE: the conv bias is intentionally omitted -- it is cancelled
        # exactly by the affine-free InstanceNorm below.

    def instance_norm():
        """Affine-free InstanceNorm2d of acc_ref (one-pass statistics)."""
        a = acc_ref[...]
        s1 = jnp.sum(a, axis=0, keepdims=True)            # (1, C)
        s2 = jnp.sum(a * a, axis=0, keepdims=True)        # (1, C)
        mu = s1 * inv_hw
        var = s2 * inv_hw - mu * mu                       # biased variance
        return (a - mu) * lax.rsqrt(var + EPS)

    # ------------------ conv1 -> InstanceNorm -> ReLU ------------------
    pad_ref[1:H + 1, IMG:IMG + W, :] = x_ref[0]
    conv3x3(w1_ref)
    y = jnp.maximum(instance_norm(), 0.0)

    # ------------------ conv2 -> InstanceNorm ------------------
    pad_ref[1:H + 1, IMG:IMG + W, :] = y.reshape(H, W, C)
    conv3x3(w2_ref)
    z = instance_norm()

    # ------------------ residual / skip connection ------------------
    o_ref[0] = x_ref[0] + z.reshape(H, W, C)


def resnet_block(x_nchw, w1_hwio, b1, w2_hwio, b2):
    """ResnetBlock forward.  x_nchw: (N, C, H, W) f32.  Weights in HWIO.

    b1/b2 are accepted for interface parity with nn.Conv2d(bias=True) but are
    not used: a per-channel bias is cancelled exactly by the affine-free
    InstanceNorm that follows each convolution (the reference keeps them).
    """
    del b1, b2
    N, C, H, W = x_nchw.shape
    x = jnp.transpose(x_nchw, (0, 2, 3, 1)).astype(jnp.float32)   # -> NHWC
    # HWIO (3,3,C,C) -> (3, 3C, C): per-dy slab [w[dy,0]; w[dy,1]; w[dy,2]]
    # stacked along the input-channel (contraction) axis.
    w1 = w1_hwio.astype(jnp.float32).reshape(3, 3 * C, C)
    w2 = w2_hwio.astype(jnp.float32).reshape(3, 3 * C, C)

    kernel = functools.partial(_resnet_block_kernel, H=H, W=W, C=C)

    out_nhwc = pl.pallas_call(
        kernel,
        out_shape=jax.ShapeDtypeStruct((N, H, W, C), jnp.float32),
        grid_spec=pltpu.PrefetchScalarGridSpec(
            num_scalar_prefetch=0,
            grid=(N,),
            in_specs=[
                pl.BlockSpec((1, H, W, C), lambda n: (n, 0, 0, 0)),    # x
                pl.BlockSpec((3, 3 * C, C), lambda n: (0, 0, 0)),      # w1 slabs
                pl.BlockSpec((3, 3 * C, C), lambda n: (0, 0, 0)),      # w2 slabs
            ],
            out_specs=pl.BlockSpec((1, H, W, C), lambda n: (n, 0, 0, 0)),
            scratch_shapes=[
                pltpu.VMEM((H + 2, W + 2 * IMG, C), jnp.float32),  # padded image
                pltpu.VMEM((H + 2, W, 3 * C), jnp.float32),        # dx-folded cols
                pltpu.VMEM((H * W, C), jnp.float32),               # f32 accumulator
            ],
        ),
        compiler_params=pltpu.CompilerParams(
            dimension_semantics=("parallel",)),   # N>=2 keeps both v7x cores busy
    )(x, w1, w2)

    return jnp.transpose(out_nhwc, (0, 3, 1, 2))  # back to NCHW


def resnet_block_ref(x_nchw, w1, b1, w2, b2):
    """Pure-JAX (XLA) reference; keeps biases and HIGHEST precision."""
    x = jnp.transpose(x_nchw, (0, 2, 3, 1)).astype(jnp.float32)

    def conv(h, w, b):
        y = lax.conv_general_dilated(
            h, w, window_strides=(1, 1), padding=((1, 1), (1, 1)),
            dimension_numbers=('NHWC', 'HWIO', 'NHWC'),
            precision=lax.Precision.HIGHEST)
        return y + b.reshape(1, 1, 1, -1)

    def inorm(h):
        mu = jnp.mean(h, axis=(1, 2), keepdims=True)
        var = jnp.mean((h - mu) ** 2, axis=(1, 2), keepdims=True)
        return (h - mu) * lax.rsqrt(var + EPS)

    y = jnp.maximum(inorm(conv(x, w1, b1)), 0.0)
    z = inorm(conv(y, w2, b2))
    return jnp.transpose(x + z, (0, 3, 1, 2))


if __name__ == "__main__":
    N, C, H, W = 2, 4, 16, 16   # dim = 4

    key = jax.random.PRNGKey(0)
    kx, k1, kb1, k2, kb2 = jax.random.split(key, 5)

    x = jax.random.normal(kx, (N, C, H, W), jnp.float32)
    fan_in = 9 * C
    # conv weights in HWIO layout, deterministic synthetic init
    w1 = jax.random.normal(k1, (3, 3, C, C), jnp.float32) / jnp.sqrt(fan_in)
    b1 = 0.1 * jax.random.normal(kb1, (C,), jnp.float32)
    w2 = jax.random.normal(k2, (3, 3, C, C), jnp.float32) / jnp.sqrt(fan_in)
    b2 = 0.1 * jax.random.normal(kb2, (C,), jnp.float32)

    out = jax.block_until_ready(resnet_block(x, w1, b1, w2, b2))
    ref = jax.block_until_ready(resnet_block_ref(x, w1, b1, w2, b2))

    assert out.shape == x.shape and out.dtype == jnp.float32
    # Kernel uses DEFAULT (bf16-pass) MXU precision while the reference runs
    # at HIGHEST, so tolerance is sized for bf16 matmuls.
    np.testing.assert_allclose(np.asarray(out), np.asarray(ref),
                               rtol=2e-2, atol=2e-2)
    print("KERNEL_OK")
</pallas_src>

<mosaic_0001>
module attributes {stable_mosaic.version = 11 : i64} {
  func.func @_resnet_block_kernel(%arg0: i32, %arg1: memref<1x16x16x4xf32, #tpu.memory_space<vmem>>, %arg2: memref<3x12x4xf32, #tpu.memory_space<vmem>>, %arg3: memref<3x12x4xf32, #tpu.memory_space<vmem>>, %arg4: memref<1x16x16x4xf32, #tpu.memory_space<vmem>>, %arg5: memref<18x32x4xf32, #tpu.memory_space<vmem>>, %arg6: memref<18x16x12xf32, #tpu.memory_space<vmem>>, %arg7: memref<256x4xf32, #tpu.memory_space<vmem>>) attributes {dimension_semantics = [#tpu.dimension_semantics<parallel>], iteration_bounds = array<i64: 2>, scalar_prefetch = 0 : i64, scratch_operands = 3 : i64, tpu.core_type = #tpu.core_type<tc>, window_params = [{transform_indices = @transform_0, window_bounds = array<i64: 1, 16, 16, 4>}, {pipeline_mode = #tpu.pipeline_mode<synchronous>, transform_indices = @transform_1, window_bounds = array<i64: 3, 12, 4>}, {pipeline_mode = #tpu.pipeline_mode<synchronous>, transform_indices = @transform_2, window_bounds = array<i64: 3, 12, 4>}, {transform_indices = @transform_3, window_bounds = array<i64: 1, 16, 16, 4>}]} {
    %cst = arith.constant 0.000000e+00 : f32
    %0 = vector.broadcast %cst : f32 to vector<1x32x4xf32>
    %c0 = arith.constant 0 : index
    %c0_0 = arith.constant 0 : index
    %c0_1 = arith.constant 0 : index
    %1 = vector.load %arg5[%c0, %c0_0, %c0_1] : memref<18x32x4xf32, #tpu.memory_space<vmem>>, vector<1x32x4xf32>
    tpu.vector_store %arg5[%c0, %c0_0, %c0_1], %0 {strides = array<i32>} : memref<18x32x4xf32, #tpu.memory_space<vmem>>, vector<1x32x4xf32>,
    %c17 = arith.constant 17 : index
    %c0_2 = arith.constant 0 : index
    %c0_3 = arith.constant 0 : index
    %2 = vector.load %arg5[%c17, %c0_2, %c0_3] : memref<18x32x4xf32, #tpu.memory_space<vmem>>, vector<1x32x4xf32>
    tpu.vector_store %arg5[%c17, %c0_2, %c0_3], %0 {strides = array<i32>} : memref<18x32x4xf32, #tpu.memory_space<vmem>>, vector<1x32x4xf32>,
    %cst_4 = arith.constant 0.000000e+00 : f32
    %3 = vector.broadcast %cst_4 : f32 to vector<18x8x4xf32>
    %c0_5 = arith.constant 0 : index
    %c0_6 = arith.constant 0 : index
    %c0_7 = arith.constant 0 : index
    %4 = vector.load %arg5[%c0_5, %c0_6, %c0_7] : memref<18x32x4xf32, #tpu.memory_space<vmem>>, vector<18x8x4xf32>
    tpu.vector_store %arg5[%c0_5, %c0_6, %c0_7], %3 {strides = array<i32>} : memref<18x32x4xf32, #tpu.memory_space<vmem>>, vector<18x8x4xf32>,
    %c0_8 = arith.constant 0 : index
    %c24 = arith.constant 24 : index
    %c0_9 = arith.constant 0 : index
    %5 = vector.load %arg5[%c0_8, %c24, %c0_9] : memref<18x32x4xf32, #tpu.memory_space<vmem>>, vector<18x8x4xf32>
    tpu.vector_store %arg5[%c0_8, %c24, %c0_9], %3 {strides = array<i32>} : memref<18x32x4xf32, #tpu.memory_space<vmem>>, vector<18x8x4xf32>,
    %c0_10 = arith.constant 0 : index
    %c0_11 = arith.constant 0 : index
    %c0_12 = arith.constant 0 : index
    %c0_13 = arith.constant 0 : index
    %6 = vector.load %arg1[%c0_10, %c0_11, %c0_12, %c0_13] : memref<1x16x16x4xf32, #tpu.memory_space<vmem>>, vector<1x16x16x4xf32>
    %7 = vector.shape_cast %6 : vector<1x16x16x4xf32> to vector<16x16x4xf32>
    %c1 = arith.constant 1 : index
    %c8 = arith.constant 8 : index
    %c0_14 = arith.constant 0 : index
    %8 = vector.load %arg5[%c1, %c8, %c0_14] : memref<18x32x4xf32, #tpu.memory_space<vmem>>, vector<16x16x4xf32>
    tpu.vector_store %arg5[%c1, %c8, %c0_14], %7 {strides = array<i32>} : memref<18x32x4xf32, #tpu.memory_space<vmem>>, vector<16x16x4xf32>,
    %c0_15 = arith.constant 0 : index
    %c7 = arith.constant 7 : index
    %c0_16 = arith.constant 0 : index
    %9 = vector.load %arg5[%c0_15, %c7, %c0_16] : memref<18x32x4xf32, #tpu.memory_space<vmem>>, vector<18x16x4xf32>
    %c0_17 = arith.constant 0 : index
    %c8_18 = arith.constant 8 : index
    %c0_19 = arith.constant 0 : index
    %10 = vector.load %arg5[%c0_17, %c8_18, %c0_19] : memref<18x32x4xf32, #tpu.memory_space<vmem>>, vector<18x16x4xf32>
    %c0_20 = arith.constant 0 : index
    %c9 = arith.constant 9 : index
    %c0_21 = arith.constant 0 : index
    %11 = vector.load %arg5[%c0_20, %c9, %c0_21] : memref<18x32x4xf32, #tpu.memory_space<vmem>>, vector<18x16x4xf32>
    %12 = tpu.concatenate %9, %10, %11 in 2 : vector<18x16x4xf32>, vector<18x16x4xf32>, vector<18x16x4xf32> -> vector<18x16x12xf32>
    %c0_22 = arith.constant 0 : index
    %c0_23 = arith.constant 0 : index
    %c0_24 = arith.constant 0 : index
    %13 = vector.load %arg6[%c0_22, %c0_23, %c0_24] : memref<18x16x12xf32, #tpu.memory_space<vmem>>, vector<18x16x12xf32>
    tpu.vector_store %arg6[%c0_22, %c0_23, %c0_24], %12 {strides = array<i32>} : memref<18x16x12xf32, #tpu.memory_space<vmem>>, vector<18x16x12xf32>,
    %c0_25 = arith.constant 0 : index
    %c0_26 = arith.constant 0 : index
    %c0_27 = arith.constant 0 : index
    %14 = vector.load %arg6[%c0_25, %c0_26, %c0_27] : memref<18x16x12xf32, #tpu.memory_space<vmem>>, vector<16x16x12xf32>
    %15 = vector.shape_cast %14 : vector<16x16x12xf32> to vector<256x12xf32>
    %c0_28 = arith.constant 0 : index
    %c0_29 = arith.constant 0 : index
    %c0_30 = arith.constant 0 : index
    %16 = vector.load %arg2[%c0_28, %c0_29, %c0_30] : memref<3x12x4xf32, #tpu.memory_space<vmem>>, vector<1x12x4xf32>
    %17 = vector.shape_cast %16 : vector<1x12x4xf32> to vector<12x4xf32>
    %cst_31 = arith.constant dense<0.000000e+00> : vector<256x4xf32>
    %18 = tpu.matmul %15, %17, %cst_31 {dimension_numbers = #tpu.dot_dimension_numbers<[1], [0], [0], [1], [0, 0, 1, 1], [], []>} : vector<256x12xf32>, vector<12x4xf32>, vector<256x4xf32> -> vector<256x4xf32>
    %c0_32 = arith.constant 0 : index
    %c0_33 = arith.constant 0 : index
    %19 = vector.load %arg7[%c0_32, %c0_33] : memref<256x4xf32, #tpu.memory_space<vmem>>, vector<256x4xf32>
    tpu.vector_store %arg7[%c0_32, %c0_33], %18 {strides = array<i32>} : memref<256x4xf32, #tpu.memory_space<vmem>>, vector<256x4xf32>,
    %c1_34 = arith.constant 1 : index
    %c0_35 = arith.constant 0 : index
    %c0_36 = arith.constant 0 : index
    %20 = vector.load %arg6[%c1_34, %c0_35, %c0_36] : memref<18x16x12xf32, #tpu.memory_space<vmem>>, vector<16x16x12xf32>
    %21 = vector.shape_cast %20 : vector<16x16x12xf32> to vector<256x12xf32>
    %c1_37 = arith.constant 1 : index
    %c0_38 = arith.constant 0 : index
    %c0_39 = arith.constant 0 : index
    %22 = vector.load %arg2[%c1_37, %c0_38, %c0_39] : memref<3x12x4xf32, #tpu.memory_space<vmem>>, vector<1x12x4xf32>
    %23 = vector.shape_cast %22 : vector<1x12x4xf32> to vector<12x4xf32>
    %cst_40 = arith.constant dense<0.000000e+00> : vector<256x4xf32>
    %24 = tpu.matmul %21, %23, %cst_40 {dimension_numbers = #tpu.dot_dimension_numbers<[1], [0], [0], [1], [0, 0, 1, 1], [], []>} : vector<256x12xf32>, vector<12x4xf32>, vector<256x4xf32> -> vector<256x4xf32>
    %c0_41 = arith.constant 0 : index
    %c0_42 = arith.constant 0 : index
    %25 = vector.load %arg7[%c0_41, %c0_42] : memref<256x4xf32, #tpu.memory_space<vmem>>, vector<256x4xf32>
    %26 = arith.addf %25, %24 : vector<256x4xf32>
    %c0_43 = arith.constant 0 : index
    %c0_44 = arith.constant 0 : index
    %27 = vector.load %arg7[%c0_43, %c0_44] : memref<256x4xf32, #tpu.memory_space<vmem>>, vector<256x4xf32>
    tpu.vector_store %arg7[%c0_43, %c0_44], %26 {strides = array<i32>} : memref<256x4xf32, #tpu.memory_space<vmem>>, vector<256x4xf32>,
    %c2 = arith.constant 2 : index
    %c0_45 = arith.constant 0 : index
    %c0_46 = arith.constant 0 : index
    %28 = vector.load %arg6[%c2, %c0_45, %c0_46] : memref<18x16x12xf32, #tpu.memory_space<vmem>>, vector<16x16x12xf32>
    %29 = vector.shape_cast %28 : vector<16x16x12xf32> to vector<256x12xf32>
    %c2_47 = arith.constant 2 : index
    %c0_48 = arith.constant 0 : index
    %c0_49 = arith.constant 0 : index
    %30 = vector.load %arg2[%c2_47, %c0_48, %c0_49] : memref<3x12x4xf32, #tpu.memory_space<vmem>>, vector<1x12x4xf32>
    %31 = vector.shape_cast %30 : vector<1x12x4xf32> to vector<12x4xf32>
    %cst_50 = arith.constant dense<0.000000e+00> : vector<256x4xf32>
    %32 = tpu.matmul %29, %31, %cst_50 {dimension_numbers = #tpu.dot_dimension_numbers<[1], [0], [0], [1], [0, 0, 1, 1], [], []>} : vector<256x12xf32>, vector<12x4xf32>, vector<256x4xf32> -> vector<256x4xf32>
    %c0_51 = arith.constant 0 : index
    %c0_52 = arith.constant 0 : index
    %33 = vector.load %arg7[%c0_51, %c0_52] : memref<256x4xf32, #tpu.memory_space<vmem>>, vector<256x4xf32>
    %34 = arith.addf %33, %32 : vector<256x4xf32>
    %c0_53 = arith.constant 0 : index
    %c0_54 = arith.constant 0 : index
    %35 = vector.load %arg7[%c0_53, %c0_54] : memref<256x4xf32, #tpu.memory_space<vmem>>, vector<256x4xf32>
    tpu.vector_store %arg7[%c0_53, %c0_54], %34 {strides = array<i32>} : memref<256x4xf32, #tpu.memory_space<vmem>>, vector<256x4xf32>,
    %c0_55 = arith.constant 0 : index
    %c0_56 = arith.constant 0 : index
    %36 = vector.load %arg7[%c0_55, %c0_56] : memref<256x4xf32, #tpu.memory_space<vmem>>, vector<256x4xf32>
    %cst_57 = arith.constant dense<0.000000e+00> : vector<4xf32>
    %37 = vector.multi_reduction <add>, %36, %cst_57 [0] : vector<256x4xf32> to vector<4xf32>
    %38 = vector.shape_cast %37 : vector<4xf32> to vector<1x4xf32>
    %39 = arith.mulf %36, %36 : vector<256x4xf32>
    %cst_58 = arith.constant dense<0.000000e+00> : vector<4xf32>
    %40 = vector.multi_reduction <add>, %39, %cst_58 [0] : vector<256x4xf32> to vector<4xf32>
    %41 = vector.shape_cast %40 : vector<4xf32> to vector<1x4xf32>
    %cst_59 = arith.constant 3.906250e-03 : f32
    %42 = vector.broadcast %cst_59 : f32 to vector<1x4xf32>
    %43 = arith.mulf %38, %42 : vector<1x4xf32>
    %cst_60 = arith.constant 3.906250e-03 : f32
    %44 = vector.broadcast %cst_60 : f32 to vector<1x4xf32>
    %45 = arith.mulf %41, %44 : vector<1x4xf32>
    %46 = arith.mulf %43, %43 : vector<1x4xf32>
    %47 = arith.subf %45, %46 : vector<1x4xf32>
    %48 = vector.broadcast %43 : vector<1x4xf32> to vector<256x4xf32>
    %49 = arith.subf %36, %48 : vector<256x4xf32>
    %cst_61 = arith.constant 9.99999974E-6 : f32
    %50 = vector.broadcast %cst_61 : f32 to vector<1x4xf32>
    %51 = arith.addf %47, %50 : vector<1x4xf32>
    %52 = math.rsqrt %51 : vector<1x4xf32>
    %53 = vector.broadcast %52 : vector<1x4xf32> to vector<256x4xf32>
    %54 = arith.mulf %49, %53 : vector<256x4xf32>
    %cst_62 = arith.constant 0.000000e+00 : f32
    %55 = vector.broadcast %cst_62 : f32 to vector<256x4xf32>
    %56 = arith.maximumf %54, %55 : vector<256x4xf32>
    %57 = vector.shape_cast %56 : vector<256x4xf32> to vector<16x16x4xf32>
    %c1_63 = arith.constant 1 : index
    %c8_64 = arith.constant 8 : index
    %c0_65 = arith.constant 0 : index
    %58 = vector.load %arg5[%c1_63, %c8_64, %c0_65] : memref<18x32x4xf32, #tpu.memory_space<vmem>>, vector<16x16x4xf32>
    tpu.vector_store %arg5[%c1_63, %c8_64, %c0_65], %57 {strides = array<i32>} : memref<18x32x4xf32, #tpu.memory_space<vmem>>, vector<16x16x4xf32>,
    %c0_66 = arith.constant 0 : index
    %c7_67 = arith.constant 7 : index
    %c0_68 = arith.constant 0 : index
    %59 = vector.load %arg5[%c0_66, %c7_67, %c0_68] : memref<18x32x4xf32, #tpu.memory_space<vmem>>, vector<18x16x4xf32>
    %c0_69 = arith.constant 0 : index
    %c8_70 = arith.constant 8 : index
    %c0_71 = arith.constant 0 : index
    %60 = vector.load %arg5[%c0_69, %c8_70, %c0_71] : memref<18x32x4xf32, #tpu.memory_space<vmem>>, vector<18x16x4xf32>
    %c0_72 = arith.constant 0 : index
    %c9_73 = arith.constant 9 : index
    %c0_74 = arith.constant 0 : index
    %61 = vector.load %arg5[%c0_72, %c9_73, %c0_74] : memref<18x32x4xf32, #tpu.memory_space<vmem>>, vector<18x16x4xf32>
    %62 = tpu.concatenate %59, %60, %61 in 2 : vector<18x16x4xf32>, vector<18x16x4xf32>, vector<18x16x4xf32> -> vector<18x16x12xf32>
    %c0_75 = arith.constant 0 : index
    %c0_76 = arith.constant 0 : index
    %c0_77 = arith.constant 0 : index
    %63 = vector.load %arg6[%c0_75, %c0_76, %c0_77] : memref<18x16x12xf32, #tpu.memory_space<vmem>>, vector<18x16x12xf32>
    tpu.vector_store %arg6[%c0_75, %c0_76, %c0_77], %62 {strides = array<i32>} : memref<18x16x12xf32, #tpu.memory_space<vmem>>, vector<18x16x12xf32>,
    %c0_78 = arith.constant 0 : index
    %c0_79 = arith.constant 0 : index
    %c0_80 = arith.constant 0 : index
    %64 = vector.load %arg6[%c0_78, %c0_79, %c0_80] : memref<18x16x12xf32, #tpu.memory_space<vmem>>, vector<16x16x12xf32>
    %65 = vector.shape_cast %64 : vector<16x16x12xf32> to vector<256x12xf32>
    %c0_81 = arith.constant 0 : index
    %c0_82 = arith.constant 0 : index
    %c0_83 = arith.constant 0 : index
    %66 = vector.load %arg3[%c0_81, %c0_82, %c0_83] : memref<3x12x4xf32, #tpu.memory_space<vmem>>, vector<1x12x4xf32>
    %67 = vector.shape_cast %66 : vector<1x12x4xf32> to vector<12x4xf32>
    %cst_84 = arith.constant dense<0.000000e+00> : vector<256x4xf32>
    %68 = tpu.matmul %65, %67, %cst_84 {dimension_numbers = #tpu.dot_dimension_numbers<[1], [0], [0], [1], [0, 0, 1, 1], [], []>} : vector<256x12xf32>, vector<12x4xf32>, vector<256x4xf32> -> vector<256x4xf32>
    %c0_85 = arith.constant 0 : index
    %c0_86 = arith.constant 0 : index
    %69 = vector.load %arg7[%c0_85, %c0_86] : memref<256x4xf32, #tpu.memory_space<vmem>>, vector<256x4xf32>
    tpu.vector_store %arg7[%c0_85, %c0_86], %68 {strides = array<i32>} : memref<256x4xf32, #tpu.memory_space<vmem>>, vector<256x4xf32>,
    %c1_87 = arith.constant 1 : index
    %c0_88 = arith.constant 0 : index
    %c0_89 = arith.constant 0 : index
    %70 = vector.load %arg6[%c1_87, %c0_88, %c0_89] : memref<18x16x12xf32, #tpu.memory_space<vmem>>, vector<16x16x12xf32>
    %71 = vector.shape_cast %70 : vector<16x16x12xf32> to vector<256x12xf32>
    %c1_90 = arith.constant 1 : index
    %c0_91 = arith.constant 0 : index
    %c0_92 = arith.constant 0 : index
    %72 = vector.load %arg3[%c1_90, %c0_91, %c0_92] : memref<3x12x4xf32, #tpu.memory_space<vmem>>, vector<1x12x4xf32>
    %73 = vector.shape_cast %72 : vector<1x12x4xf32> to vector<12x4xf32>
    %cst_93 = arith.constant dense<0.000000e+00> : vector<256x4xf32>
    %74 = tpu.matmul %71, %73, %cst_93 {dimension_numbers = #tpu.dot_dimension_numbers<[1], [0], [0], [1], [0, 0, 1, 1], [], []>} : vector<256x12xf32>, vector<12x4xf32>, vector<256x4xf32> -> vector<256x4xf32>
    %c0_94 = arith.constant 0 : index
    %c0_95 = arith.constant 0 : index
    %75 = vector.load %arg7[%c0_94, %c0_95] : memref<256x4xf32, #tpu.memory_space<vmem>>, vector<256x4xf32>
    %76 = arith.addf %75, %74 : vector<256x4xf32>
    %c0_96 = arith.constant 0 : index
    %c0_97 = arith.constant 0 : index
    %77 = vector.load %arg7[%c0_96, %c0_97] : memref<256x4xf32, #tpu.memory_space<vmem>>, vector<256x4xf32>
    tpu.vector_store %arg7[%c0_96, %c0_97], %76 {strides = array<i32>} : memref<256x4xf32, #tpu.memory_space<vmem>>, vector<256x4xf32>,
    %c2_98 = arith.constant 2 : index
    %c0_99 = arith.constant 0 : index
    %c0_100 = arith.constant 0 : index
    %78 = vector.load %arg6[%c2_98, %c0_99, %c0_100] : memref<18x16x12xf32, #tpu.memory_space<vmem>>, vector<16x16x12xf32>
    %79 = vector.shape_cast %78 : vector<16x16x12xf32> to vector<256x12xf32>
    %c2_101 = arith.constant 2 : index
    %c0_102 = arith.constant 0 : index
    %c0_103 = arith.constant 0 : index
    %80 = vector.load %arg3[%c2_101, %c0_102, %c0_103] : memref<3x12x4xf32, #tpu.memory_space<vmem>>, vector<1x12x4xf32>
    %81 = vector.shape_cast %80 : vector<1x12x4xf32> to vector<12x4xf32>
    %cst_104 = arith.constant dense<0.000000e+00> : vector<256x4xf32>
    %82 = tpu.matmul %79, %81, %cst_104 {dimension_numbers = #tpu.dot_dimension_numbers<[1], [0], [0], [1], [0, 0, 1, 1], [], []>} : vector<256x12xf32>, vector<12x4xf32>, vector<256x4xf32> -> vector<256x4xf32>
    %c0_105 = arith.constant 0 : index
    %c0_106 = arith.constant 0 : index
    %83 = vector.load %arg7[%c0_105, %c0_106] : memref<256x4xf32, #tpu.memory_space<vmem>>, vector<256x4xf32>
    %84 = arith.addf %83, %82 : vector<256x4xf32>
    %c0_107 = arith.constant 0 : index
    %c0_108 = arith.constant 0 : index
    %85 = vector.load %arg7[%c0_107, %c0_108] : memref<256x4xf32, #tpu.memory_space<vmem>>, vector<256x4xf32>
    tpu.vector_store %arg7[%c0_107, %c0_108], %84 {strides = array<i32>} : memref<256x4xf32, #tpu.memory_space<vmem>>, vector<256x4xf32>,
    %c0_109 = arith.constant 0 : index
    %c0_110 = arith.constant 0 : index
    %86 = vector.load %arg7[%c0_109, %c0_110] : memref<256x4xf32, #tpu.memory_space<vmem>>, vector<256x4xf32>
    %cst_111 = arith.constant dense<0.000000e+00> : vector<4xf32>
    %87 = vector.multi_reduction <add>, %86, %cst_111 [0] : vector<256x4xf32> to vector<4xf32>
    %88 = vector.shape_cast %87 : vector<4xf32> to vector<1x4xf32>
    %89 = arith.mulf %86, %86 : vector<256x4xf32>
    %cst_112 = arith.constant dense<0.000000e+00> : vector<4xf32>
    %90 = vector.multi_reduction <add>, %89, %cst_112 [0] : vector<256x4xf32> to vector<4xf32>
    %91 = vector.shape_cast %90 : vector<4xf32> to vector<1x4xf32>
    %cst_113 = arith.constant 3.906250e-03 : f32
    %92 = vector.broadcast %cst_113 : f32 to vector<1x4xf32>
    %93 = arith.mulf %88, %92 : vector<1x4xf32>
    %cst_114 = arith.constant 3.906250e-03 : f32
    %94 = vector.broadcast %cst_114 : f32 to vector<1x4xf32>
    %95 = arith.mulf %91, %94 : vector<1x4xf32>
    %96 = arith.mulf %93, %93 : vector<1x4xf32>
    %97 = arith.subf %95, %96 : vector<1x4xf32>
    %98 = vector.broadcast %93 : vector<1x4xf32> to vector<256x4xf32>
    %99 = arith.subf %86, %98 : vector<256x4xf32>
    %cst_115 = arith.constant 9.99999974E-6 : f32
    %100 = vector.broadcast %cst_115 : f32 to vector<1x4xf32>
    %101 = arith.addf %97, %100 : vector<1x4xf32>
    %102 = math.rsqrt %101 : vector<1x4xf32>
    %103 = vector.broadcast %102 : vector<1x4xf32> to vector<256x4xf32>
    %104 = arith.mulf %99, %103 : vector<256x4xf32>
    %c0_116 = arith.constant 0 : index
    %c0_117 = arith.constant 0 : index
    %c0_118 = arith.constant 0 : index
    %c0_119 = arith.constant 0 : index
    %105 = vector.load %arg1[%c0_116, %c0_117, %c0_118, %c0_119] : memref<1x16x16x4xf32, #tpu.memory_space<vmem>>, vector<1x16x16x4xf32>
    %106 = vector.shape_cast %105 : vector<1x16x16x4xf32> to vector<16x16x4xf32>
    %107 = vector.shape_cast %104 : vector<256x4xf32> to vector<16x16x4xf32>
    %108 = arith.addf %106, %107 : vector<16x16x4xf32>
    %c0_120 = arith.constant 0 : index
    %c0_121 = arith.constant 0 : index
    %c0_122 = arith.constant 0 : index
    %c0_123 = arith.constant 0 : index
    %109 = vector.load %arg4[%c0_120, %c0_121, %c0_122, %c0_123] : memref<1x16x16x4xf32, #tpu.memory_space<vmem>>, vector<1x16x16x4xf32>
    %110 = vector.shape_cast %109 : vector<1x16x16x4xf32> to vector<16x16x4xf32>
    %111 = vector.shape_cast %108 : vector<16x16x4xf32> to vector<1x16x16x4xf32>
    tpu.vector_store %arg4[%c0_120, %c0_121, %c0_122, %c0_123], %111 {strides = array<i32>} : memref<1x16x16x4xf32, #tpu.memory_space<vmem>>, vector<1x16x16x4xf32>,
    return
  }
  func.func @transform_0(%arg0: i32) -> (i32, i32, i32, i32) {
    %c0_i32 = arith.constant 0 : i32
    %c0_i32_0 = arith.constant 0 : i32
    %c0_i32_1 = arith.constant 0 : i32
    %c0_i32_2 = arith.constant 0 : i32
    return %arg0, %c0_i32, %c0_i32_0, %c0_i32_1 : i32, i32, i32, i32
  }
  func.func @transform_1(%arg0: i32) -> (i32, i32, i32) {
    %c0_i32 = arith.constant 0 : i32
    %c0_i32_0 = arith.constant 0 : i32
    %c0_i32_1 = arith.constant 0 : i32
    %c0_i32_2 = arith.constant 0 : i32
    return %c0_i32, %c0_i32_0, %c0_i32_1 : i32, i32, i32
  }
  func.func @transform_2(%arg0: i32) -> (i32, i32, i32) {
    %c0_i32 = arith.constant 0 : i32
    %c0_i32_0 = arith.constant 0 : i32
    %c0_i32_1 = arith.constant 0 : i32
    %c0_i32_2 = arith.constant 0 : i32
    return %c0_i32, %c0_i32_0, %c0_i32_1 : i32, i32, i32
  }
  func.func @transform_3(%arg0: i32) -> (i32, i32, i32, i32) {
    %c0_i32 = arith.constant 0 : i32
    %c0_i32_0 = arith.constant 0 : i32
    %c0_i32_1 = arith.constant 0 : i32
    %c0_i32_2 = arith.constant 0 : i32
    return %arg0, %c0_i32, %c0_i32_0, %c0_i32_1 : i32, i32, i32, i32
  }
}

</mosaic_0001>

<llo_original>
// kernel: tpu_custom_call.1
$region0: #{tpu_custom_call.1}
  #allocation0 [shape = 'u32[]', space=smem, size = 0x4, offset = 0x4, fixed_abs, tag = 'smem constant byte address 0x4 - core index']
  #allocation1 [shape = 'u32[144,128]{1,0:T(1,128)}', space=vmem, size = 0x12000, scoped, tag = 'internal scratch']
  #allocation2 [shape = 'f32[18,32,4]{2,1,0:T(8,128)}', space=vmem, size = 0x48000, scoped, tag = 'scratch operand']
  #allocation3 [shape = 'f32[18,16,12]{2,1,0:T(8,128)}', space=vmem, size = 0x24000, scoped, tag = 'scratch operand']
  #allocation4 [shape = 'f32[256,4]{1,0:T(8,128)}', space=vmem, size = 0x20000, scoped, tag = 'scratch operand']
  %s0 = inlined_call_operand.vmem [shape: f32[2,16,16,4], index: 0, kind: input, shape index: {}]
  %s1 = inlined_call_operand.vmem [shape: f32[3,12,4], index: 1, kind: input, shape index: {}]
  %s2 = inlined_call_operand.vmem [shape: f32[3,12,4], index: 2, kind: input, shape index: {}]
  %s3 = inlined_call_operand.vmem [shape: f32[2,16,16,4], index: 3, kind: output, shape index: {}]
  %s4 = sld [smem:[#allocation0]]
  $region45: #{tpu_custom_call.1} parent=0
    _
  %s6 = ssub.s32 1, %s4
  %s7 = scalar_select 0, %s6, %s4
  loop: start=0, step=1, limit=4
  $region2: #{tpu_custom_call.1} parent=0 // loop_pre_header
    _
  $region3: #{tpu_custom_call.1} parent=0 // loop_header
    %s9 = sphi 0, %s13
    %p10 = scmp.ge.s32.totalorder %s9, 4
    %s19 = sphi 0, %s21
    %s22 = sphi 0, %s19
    %s23 = sphi 0, %s22
    %s39 = sphi 0, %s23
    %s43 = sphi 0, %s43
    %s45 = sphi 0, %s43
    %s46 = sphi 0, %s45
    %s60 = sphi 0, %s46
    %s64 = sphi 0, %s64
    %s66 = sphi 0, %s64
    %s67 = sphi 0, %s66
    %s81 = sphi 0, %s67
    %s87 = sphi 0, %s89
    %s90 = sphi 0, %s87
    %s91 = sphi 0, %s90
    %s107 = sphi 0, %s91
  $region4: #{tpu_custom_call.1} parent=0 // loop_header_branch
    %12 = sbr.rel (%p10) target = $region8
  $region5: #{tpu_custom_call.1} parent=0 // loop_body
    %s14 = ssub.s32 %s9, 1
    %s15 = ssub.s32 %s9, 2
    %s16 = sadd.s32 %s9, 1
    %s17 = ssub.s32 %s9, %s16
    %p18 = scmp.eq.s32.totalorder %s17, 0
    %s20 = sadd.s32 %s19, 1
    %s21 = scalar_select %p18, %s19, %s20
    %p24 = pneg %p18
    %p25 = scmp.eq.s32.totalorder %s9, 1
    %p26 = por %p24, %p25
    %p27 = scmp.ne.s32.totalorder %s19, %s22
    %p28 = scmp.eq.s32.totalorder %s9, 0
    %p29 = por %p27, %p28
    %p30 = scmp.ne.s32.totalorder %s19, %s22
    %p31 = scmp.eq.s32.totalorder %s14, 1
    %p32 = por %p30, %p31
    %p33 = scmp.ne.s32.totalorder %s22, %s23
    %p34 = scmp.eq.s32.totalorder %s14, 0
    %p35 = por %p33, %p34
    %p36 = scmp.ne.s32.totalorder %s22, %s23
    %p37 = scmp.eq.s32.totalorder %s15, 1
    %p38 = por %p36, %p37
    %p40 = scmp.ne.s32.totalorder %s23, %s39
    %p41 = scmp.eq.s32.totalorder %s15, 0
    %p42 = por %p40, %p41
    %s44 = sadd.s32 %s43, 1
    %p47 = scmp.eq.s32.totalorder %s9, 1
    %p48 = scmp.ne.s32.totalorder %s43, %s45
    %p49 = scmp.eq.s32.totalorder %s9, 0
    %p50 = por %p48, %p49
    %p51 = scmp.ne.s32.totalorder %s43, %s45
    %p52 = scmp.eq.s32.totalorder %s14, 1
    %p53 = por %p51, %p52
    %p54 = scmp.ne.s32.totalorder %s45, %s46
    %p55 = scmp.eq.s32.totalorder %s14, 0
    %p56 = por %p54, %p55
    %p57 = scmp.ne.s32.totalorder %s45, %s46
    %p58 = scmp.eq.s32.totalorder %s15, 1
    %p59 = por %p57, %p58
    %p61 = scmp.ne.s32.totalorder %s46, %s60
    %p62 = scmp.eq.s32.totalorder %s15, 0
    %p63 = por %p61, %p62
    %s65 = sadd.s32 %s64, 1
    %p68 = scmp.eq.s32.totalorder %s9, 1
    %p69 = scmp.ne.s32.totalorder %s64, %s66
    %p70 = scmp.eq.s32.totalorder %s9, 0
    %p71 = por %p69, %p70
    %p72 = scmp.ne.s32.totalorder %s64, %s66
    %p73 = scmp.eq.s32.totalorder %s14, 1
    %p74 = por %p72, %p73
    %p75 = scmp.ne.s32.totalorder %s66, %s67
    %p76 = scmp.eq.s32.totalorder %s14, 0
    %p77 = por %p75, %p76
    %p78 = scmp.ne.s32.totalorder %s66, %s67
    %p79 = scmp.eq.s32.totalorder %s15, 1
    %p80 = por %p78, %p79
    %p82 = scmp.ne.s32.totalorder %s67, %s81
    %p83 = scmp.eq.s32.totalorder %s15, 0
    %p84 = por %p82, %p83
    %s85 = ssub.s32 %s9, %s16
    %p86 = scmp.eq.s32.totalorder %s85, 0
    %s88 = sadd.s32 %s87, 1
    %s89 = scalar_select %p86, %s87, %s88
    %p92 = pneg %p86
    %p93 = scmp.eq.s32.totalorder %s9, 1
    %p94 = por %p92, %p93
    %p95 = scmp.ne.s32.totalorder %s87, %s90
    %p96 = scmp.eq.s32.totalorder %s9, 0
    %p97 = por %p95, %p96
    %p98 = scmp.ne.s32.totalorder %s87, %s90
    %p99 = scmp.eq.s32.totalorder %s14, 1
    %p100 = por %p98, %p99
    %p101 = scmp.ne.s32.totalorder %s90, %s91
    %p102 = scmp.eq.s32.totalorder %s14, 0
    %p103 = por %p101, %p102
    %p104 = scmp.ne.s32.totalorder %s90, %s91
    %p105 = scmp.eq.s32.totalorder %s15, 1
    %p106 = por %p104, %p105
    %p108 = scmp.ne.s32.totalorder %s91, %s107
    %p109 = scmp.eq.s32.totalorder %s15, 0
    %p110 = por %p108, %p109
    %p111 = scmp.le.s32.totalorder 1, %s9
    %p112 = scmp.lt.s32.totalorder %s9, 3
    %p113 = pnand %p111, %p112
    %p114 = pneg %p113
    // Predicated region
    $region9: #{tpu_custom_call.1} parent=5 // pred_check
      _
    $region10: #{tpu_custom_call.1} parent=5 // pred_check_branch
      %116 = sbr.rel (%p113) target = $region12
    $region11: #{tpu_custom_call.1} parent=5 // pred_region
      %s117 = ssub.s32 %s9, 1
      // Predicated region
      $region13: #{tpu_custom_call.1} parent=11 // pred_check
        %p118 = pneg %p56
      $region14: #{tpu_custom_call.1} parent=11 // pred_check_branch
        %120 = sbr.rel (%p118) target = $region16
      $region15: #{tpu_custom_call.1} parent=11 // pred_region
        _
      $region16: #{tpu_custom_call.1} parent=11 // pred_fallthru
        _
      // Predicated region
      $region17: #{tpu_custom_call.1} parent=11 // pred_check
        %p121 = pneg %p77
      $region18: #{tpu_custom_call.1} parent=11 // pred_check_branch
        %123 = sbr.rel (%p121) target = $region20
      $region19: #{tpu_custom_call.1} parent=11 // pred_region
        _
      $region20: #{tpu_custom_call.1} parent=11 // pred_fallthru
        _
    $region12: #{tpu_custom_call.1} parent=5 // pred_fallthru
      _
    %p124 = scmp.lt.s32.totalorder %s9, 2
    // Predicated region
    $region21: #{tpu_custom_call.1} parent=5 // pred_check
      %p125 = pneg %p124
    $region22: #{tpu_custom_call.1} parent=5 // pred_check_branch
      %127 = sbr.rel (%p125) target = $region24
    $region23: #{tpu_custom_call.1} parent=5 // pred_region
      // Predicated region
      $region25: #{tpu_custom_call.1} parent=23 // pred_check
        %p128 = pneg %p29
      $region26: #{tpu_custom_call.1} parent=23 // pred_check_branch
        %130 = sbr.rel (%p128) target = $region28
      $region27: #{tpu_custom_call.1} parent=23 // pred_region
        %p131 = scmp.lt.s32.totalorder %s9, 1
        %s132 = scalar_select %p131, %s9, 1
        %s133 = smul.addr %s132, 32
        %s134 = smul.addr %s133, 8
        %s135 = scalar_lea.vmem %s0, %s134
      $region28: #{tpu_custom_call.1} parent=23 // pred_fallthru
        _
    $region24: #{tpu_custom_call.1} parent=5 // pred_fallthru
      _
    %p136 = scmp.le.s32.totalorder 1, %s9
    %p137 = scmp.lt.s32.totalorder %s9, 3
    %p138 = pnand %p136, %p137
    %p139 = pneg %p138
    // Predicated region
    $region29: #{tpu_custom_call.1} parent=5 // pred_check
      _
    $region30: #{tpu_custom_call.1} parent=5 // pred_check_branch
      %141 = sbr.rel (%p138) target = $region32
    $region31: #{tpu_custom_call.1} parent=5 // pred_region
      %s142 = ssub.s32 %s9, 1
      %p143 = scmp.lt.s32.totalorder %s14, 1
      %s144 = scalar_select %p143, %s14, 1
      %s145 = smul.addr %s144, 32
      %s146 = smul.addr %s145, 8
      %s147 = scalar_lea.vmem %s0, %s146
      %p148 = pneg %p35
      %p149 = pneg %p32
      %p150 = pneg %p56
      %p151 = pneg %p53
      %p152 = pneg %p77
      %p153 = pneg %p74
      %p154 = pneg %p103
      %p155 = pneg %p100
      %p156 = scmp.lt.s32.totalorder %s14, 1
      %s157 = scalar_select %p156, %s14, 1
      %s158 = smul.addr %s157, 32
      %s159 = smul.addr %s158, 8
      %s160 = scalar_lea.vmem %s3, %s159
      %p161 = scmp.lt.s32.totalorder %s14, 1
      %s162 = scalar_select %p161, %s14, 1
      %s163 = smul.addr %s162, 32
      %s164 = smul.addr %s163, 8
      %s165 = scalar_lea.vmem %s0, %s164
      %p166 = scmp.lt.s32.totalorder %s14, 1
      %s167 = scalar_select %p166, %s14, 1
      %s168 = smul.addr %s167, 32
      %s169 = smul.addr %s168, 8
      %s170 = scalar_lea.vmem %s3, %s169
      %vm171 = vcmask 31744
      %172 = vst.msk [vmem:[#allocation2] sm:$0xff] %vm171, 0.0
      %173 = vst.msk [vmem:[#allocation2 + $0x8] sm:$0xff] %vm171, 0.0
      %174 = vst.msk [vmem:[#allocation2 + $0x10] sm:$0xff] %vm171, 0.0
      %175 = vst.msk [vmem:[#allocation2 + $0x18] sm:$0xff] %vm171, 0.0
      %s176 = scalar_lea.vmem [#allocation2], 544
      %177 = vst.msk [vmem:[%s176] sm:$0xff] %vm171, 0.0
      %178 = vst.msk [vmem:[%s176 + $0x8] sm:$0xff] %vm171, 0.0
      %179 = vst.msk [vmem:[%s176 + $0x10] sm:$0xff] %vm171, 0.0
      %180 = vst.msk [vmem:[%s176 + $0x18] sm:$0xff] %vm171, 0.0
      %181 = vst.msk [vmem:[#allocation2] sm:$0xff] %vm171, 0.0
      %182 = vst.msk [vmem:[#allocation2 + $0x20] sm:$0xff] %vm171, 0.0
      %183 = vst.msk [vmem:[#allocation2 + $0x40] sm:$0xff] %vm171, 0.0
      %184 = vst.msk [vmem:[#allocation2 + $0x60] sm:$0xff] %vm171, 0.0
      %185 = vst.msk [vmem:[#allocation2 + $0x80] sm:$0xff] %vm171, 0.0
      %186 = vst.msk [vmem:[#allocation2 + $0xa0] sm:$0xff] %vm171, 0.0
      %187 = vst.msk [vmem:[#allocation2 + $0xc0] sm:$0xff] %vm171, 0.0
      %188 = vst.msk [vmem:[#allocation2 + $0xe0] sm:$0xff] %vm171, 0.0
      %189 = vst.msk [vmem:[#allocation2 + $0x100] sm:$0xff] %vm171, 0.0
      %190 = vst.msk [vmem:[#allocation2 + $0x120] sm:$0xff] %vm171, 0.0
      %191 = vst.msk [vmem:[#allocation2 + $0x140] sm:$0xff] %vm171, 0.0
      %192 = vst.msk [vmem:[#allocation2 + $0x160] sm:$0xff] %vm171, 0.0
      %193 = vst.msk [vmem:[#allocation2 + $0x180] sm:$0xff] %vm171, 0.0
      %194 = vst.msk [vmem:[#allocation2 + $0x1a0] sm:$0xff] %vm171, 0.0
      %195 = vst.msk [vmem:[#allocation2 + $0x1c0] sm:$0xff] %vm171, 0.0
      %196 = vst.msk [vmem:[#allocation2 + $0x1e0] sm:$0xff] %vm171, 0.0
      %197 = vst.msk [vmem:[#allocation2 + $0x200] sm:$0xff] %vm171, 0.0
      %198 = vst.msk [vmem:[#allocation2 + $0x220] sm:$0xff] %vm171, 0.0
      %199 = vst.msk [vmem:[#allocation2 + $0x18] sm:$0xff] %vm171, 0.0
      %200 = vst.msk [vmem:[#allocation2 + $0x38] sm:$0xff] %vm171, 0.0
      %201 = vst.msk [vmem:[#allocation2 + $0x58] sm:$0xff] %vm171, 0.0
      %202 = vst.msk [vmem:[#allocation2 + $0x78] sm:$0xff] %vm171, 0.0
      %203 = vst.msk [vmem:[#allocation2 + $0x98] sm:$0xff] %vm171, 0.0
      %204 = vst.msk [vmem:[#allocation2 + $0xb8] sm:$0xff] %vm171, 0.0
      %205 = vst.msk [vmem:[#allocation2 + $0xd8] sm:$0xff] %vm171, 0.0
      %206 = vst.msk [vmem:[#allocation2 + $0xf8] sm:$0xff] %vm171, 0.0
      %207 = vst.msk [vmem:[#allocation2 + $0x118] sm:$0xff] %vm171, 0.0
      %208 = vst.msk [vmem:[#allocation2 + $0x138] sm:$0xff] %vm171, 0.0
      %209 = vst.msk [vmem:[#allocation2 + $0x158] sm:$0xff] %vm171, 0.0
      %210 = vst.msk [vmem:[#allocation2 + $0x178] sm:$0xff] %vm171, 0.0
      %211 = vst.msk [vmem:[#allocation2 + $0x198] sm:$0xff] %vm171, 0.0
      %212 = vst.msk [vmem:[#allocation2 + $0x1b8] sm:$0xff] %vm171, 0.0
      %213 = vst.msk [vmem:[#allocation2 + $0x1d8] sm:$0xff] %vm171, 0.0
      %214 = vst.msk [vmem:[#allocation2 + $0x1f8] sm:$0xff] %vm171, 0.0
      %215 = vst.msk [vmem:[#allocation2 + $0x218] sm:$0xff] %vm171, 0.0
      %216 = vst.msk [vmem:[#allocation2 + $0x238] sm:$0xff] %vm171, 0.0
      %v217 = vld [vmem:[%s165] sm:$0xff]
      %v218 = vld [vmem:[%s165 + $0x8] sm:$0xff]
      %v219 = vld [vmem:[%s165 + $0x10] sm:$0xff]
      %v220 = vld [vmem:[%s165 + $0x18] sm:$0xff]
      %v221 = vld [vmem:[%s165 + $0x20] sm:$0xff]
      %v222 = vld [vmem:[%s165 + $0x28] sm:$0xff]
      %v223 = vld [vmem:[%s165 + $0x30] sm:$0xff]
      %v224 = vld [vmem:[%s165 + $0x38] sm:$0xff]
      %v225 = vld [vmem:[%s165 + $0x40] sm:$0xff]
      %v226 = vld [vmem:[%s165 + $0x48] sm:$0xff]
      %v227 = vld [vmem:[%s165 + $0x50] sm:$0xff]
      %v228 = vld [vmem:[%s165 + $0x58] sm:$0xff]
      %v229 = vld [vmem:[%s165 + $0x60] sm:$0xff]
      %v230 = vld [vmem:[%s165 + $0x68] sm:$0xff]
      %v231 = vld [vmem:[%s165 + $0x70] sm:$0xff]
      %v232 = vld [vmem:[%s165 + $0x78] sm:$0xff]
      %v233 = vld [vmem:[%s165 + $0x80] sm:$0xff]
      %v234 = vld [vmem:[%s165 + $0x88] sm:$0xff]
      %v235 = vld [vmem:[%s165 + $0x90] sm:$0xff]
      %v236 = vld [vmem:[%s165 + $0x98] sm:$0xff]
      %v237 = vld [vmem:[%s165 + $0xa0] sm:$0xff]
      %v238 = vld [vmem:[%s165 + $0xa8] sm:$0xff]
      %v239 = vld [vmem:[%s165 + $0xb0] sm:$0xff]
      %v240 = vld [vmem:[%s165 + $0xb8] sm:$0xff]
      %v241 = vld [vmem:[%s165 + $0xc0] sm:$0xff]
      %v242 = vld [vmem:[%s165 + $0xc8] sm:$0xff]
      %v243 = vld [vmem:[%s165 + $0xd0] sm:$0xff]
      %v244 = vld [vmem:[%s165 + $0xd8] sm:$0xff]
      %v245 = vld [vmem:[%s165 + $0xe0] sm:$0xff]
      %v246 = vld [vmem:[%s165 + $0xe8] sm:$0xff]
      %v247 = vld [vmem:[%s165 + $0xf0] sm:$0xff]
      %v248 = vld [vmem:[%s165 + $0xf8] sm:$0xff]
      %s249 = scalar_lea.vmem [#allocation2], 32
      %250 = vst.msk [vmem:[%s249 + $0x8] sm:$0xff] %vm171, %v217
      %251 = vst.msk [vmem:[%s249 + $0x10] sm:$0xff] %vm171, %v218
      %252 = vst.msk [vmem:[%s249 + $0x28] sm:$0xff] %vm171, %v219
      %253 = vst.msk [vmem:[%s249 + $0x30] sm:$0xff] %vm171, %v220
      %254 = vst.msk [vmem:[%s249 + $0x48] sm:$0xff] %vm171, %v221
      %255 = vst.msk [vmem:[%s249 + $0x50] sm:$0xff] %vm171, %v222
      %256 = vst.msk [vmem:[%s249 + $0x68] sm:$0xff] %vm171, %v223
      %257 = vst.msk [vmem:[%s249 + $0x70] sm:$0xff] %vm171, %v224
      %258 = vst.msk [vmem:[%s249 + $0x88] sm:$0xff] %vm171, %v225
      %259 = vst.msk [vmem:[%s249 + $0x90] sm:$0xff] %vm171, %v226
      %260 = vst.msk [vmem:[%s249 + $0xa8] sm:$0xff] %vm171, %v227
      %261 = vst.msk [vmem:[%s249 + $0xb0] sm:$0xff] %vm171, %v228
      %262 = vst.msk [vmem:[%s249 + $0xc8] sm:$0xff] %vm171, %v229
      %263 = vst.msk [vmem:[%s249 + $0xd0] sm:$0xff] %vm171, %v230
      %264 = vst.msk [vmem:[%s249 + $0xe8] sm:$0xff] %vm171, %v231
      %265 = vst.msk [vmem:[%s249 + $0xf0] sm:$0xff] %vm171, %v232
      %266 = vst.msk [vmem:[%s249 + $0x108] sm:$0xff] %vm171, %v233
      %267 = vst.msk [vmem:[%s249 + $0x110] sm:$0xff] %vm171, %v234
      %268 = vst.msk [vmem:[%s249 + $0x128] sm:$0xff] %vm171, %v235
      %269 = vst.msk [vmem:[%s249 + $0x130] sm:$0xff] %vm171, %v236
      %270 = vst.msk [vmem:[%s249 + $0x148] sm:$0xff] %vm171, %v237
      %271 = vst.msk [vmem:[%s249 + $0x150] sm:$0xff] %vm171, %v238
      %272 = vst.msk [vmem:[%s249 + $0x168] sm:$0xff] %vm171, %v239
      %273 = vst.msk [vmem:[%s249 + $0x170] sm:$0xff] %vm171, %v240
      %274 = vst.msk [vmem:[%s249 + $0x188] sm:$0xff] %vm171, %v241
      %275 = vst.msk [vmem:[%s249 + $0x190] sm:$0xff] %vm171, %v242
      %276 = vst.msk [vmem:[%s249 + $0x1a8] sm:$0xff] %vm171, %v243
      %277 = vst.msk [vmem:[%s249 + $0x1b0] sm:$0xff] %vm171, %v244
      %278 = vst.msk [vmem:[%s249 + $0x1c8] sm:$0xff] %vm171, %v245
      %279 = vst.msk [vmem:[%s249 + $0x1d0] sm:$0xff] %vm171, %v246
      %280 = vst.msk [vmem:[%s249 + $0x1e8] sm:$0xff] %vm171, %v247
      %281 = vst.msk [vmem:[%s249 + $0x1f0] sm:$0xff] %vm171, %v248
      %v282 = vld [vmem:[#allocation2 + $0x7] sm:$0xff]
      %v283 = vld [vmem:[#allocation2 + $0xf] sm:$0xff]
      %v284 = vld [vmem:[#allocation2 + $0x27] sm:$0xff]
      %v285 = vld [vmem:[#allocation2 + $0x2f] sm:$0xff]
      %v286 = vld [vmem:[#allocation2 + $0x47] sm:$0xff]
      %v287 = vld [vmem:[#allocation2 + $0x4f] sm:$0xff]
      %v288 = vld [vmem:[#allocation2 + $0x67] sm:$0xff]
      %v289 = vld [vmem:[#allocation2 + $0x6f] sm:$0xff]
      %v290 = vld [vmem:[#allocation2 + $0x87] sm:$0xff]
      %v291 = vld [vmem:[#allocation2 + $0x8f] sm:$0xff]
      %v292 = vld [vmem:[#allocation2 + $0xa7] sm:$0xff]
      %v293 = vld [vmem:[#allocation2 + $0xaf] sm:$0xff]
      %v294 = vld [vmem:[#allocation2 + $0xc7] sm:$0xff]
      %v295 = vld [vmem:[#allocation2 + $0xcf] sm:$0xff]
      %v296 = vld [vmem:[#allocation2 + $0xe7] sm:$0xff]
      %v297 = vld [vmem:[#allocation2 + $0xef] sm:$0xff]
      %v298 = vld [vmem:[#allocation2 + $0x107] sm:$0xff]
      %v299 = vld [vmem:[#allocation2 + $0x10f] sm:$0xff]
      %v300 = vld [vmem:[#allocation2 + $0x127] sm:$0xff]
      %v301 = vld [vmem:[#allocation2 + $0x12f] sm:$0xff]
      %v302 = vld [vmem:[#allocation2 + $0x147] sm:$0xff]
      %v303 = vld [vmem:[#allocation2 + $0x14f] sm:$0xff]
      %v304 = vld [vmem:[#allocation2 + $0x167] sm:$0xff]
      %v305 = vld [vmem:[#allocation2 + $0x16f] sm:$0xff]
      %v306 = vld [vmem:[#allocation2 + $0x187] sm:$0xff]
      %v307 = vld [vmem:[#allocation2 + $0x18f] sm:$0xff]
      %v308 = vld [vmem:[#allocation2 + $0x1a7] sm:$0xff]
      %v309 = vld [vmem:[#allocation2 + $0x1af] sm:$0xff]
      %v310 = vld [vmem:[#allocation2 + $0x1c7] sm:$0xff]
      %v311 = vld [vmem:[#allocation2 + $0x1cf] sm:$0xff]
      %v312 = vld [vmem:[#allocation2 + $0x1e7] sm:$0xff]
      %v313 = vld [vmem:[#allocation2 + $0x1ef] sm:$0xff]
      %v314 = vld [vmem:[#allocation2 + $0x207] sm:$0xff]
      %v315 = vld [vmem:[#allocation2 + $0x20f] sm:$0xff]
      %v316 = vld [vmem:[#allocation2 + $0x227] sm:$0xff]
      %v317 = vld [vmem:[#allocation2 + $0x22f] sm:$0xff]
      %v318 = vld [vmem:[#allocation2 + $0x8] sm:$0xff]
      %v319 = vld [vmem:[#allocation2 + $0x10] sm:$0xff]
      %v320 = vld [vmem:[#allocation2 + $0x28] sm:$0xff]
      %v321 = vld [vmem:[#allocation2 + $0x30] sm:$0xff]
      %v322 = vld [vmem:[#allocation2 + $0x48] sm:$0xff]
      %v323 = vld [vmem:[#allocation2 + $0x50] sm:$0xff]
      %v324 = vld [vmem:[#allocation2 + $0x68] sm:$0xff]
      %v325 = vld [vmem:[#allocation2 + $0x70] sm:$0xff]
      %v326 = vld [vmem:[#allocation2 + $0x88] sm:$0xff]
      %v327 = vld [vmem:[#allocation2 + $0x90] sm:$0xff]
      %v328 = vld [vmem:[#allocation2 + $0xa8] sm:$0xff]
      %v329 = vld [vmem:[#allocation2 + $0xb0] sm:$0xff]
      %v330 = vld [vmem:[#allocation2 + $0xc8] sm:$0xff]
      %v331 = vld [vmem:[#allocation2 + $0xd0] sm:$0xff]
      %v332 = vld [vmem:[#allocation2 + $0xe8] sm:$0xff]
      %v333 = vld [vmem:[#allocation2 + $0xf0] sm:$0xff]
      %v334 = vld [vmem:[#allocation2 + $0x108] sm:$0xff]
      %v335 = vld [vmem:[#allocation2 + $0x110] sm:$0xff]
      %v336 = vld [vmem:[#allocation2 + $0x128] sm:$0xff]
      %v337 = vld [vmem:[#allocation2 + $0x130] sm:$0xff]
      %v338 = vld [vmem:[#allocation2 + $0x148] sm:$0xff]
      %v339 = vld [vmem:[#allocation2 + $0x150] sm:$0xff]
      %v340 = vld [vmem:[#allocation2 + $0x168] sm:$0xff]
      %v341 = vld [vmem:[#allocation2 + $0x170] sm:$0xff]
      %v342 = vld [vmem:[#allocation2 + $0x188] sm:$0xff]
      %v343 = vld [vmem:[#allocation2 + $0x190] sm:$0xff]
      %v344 = vld [vmem:[#allocation2 + $0x1a8] sm:$0xff]
      %v345 = vld [vmem:[#allocation2 + $0x1b0] sm:$0xff]
      %v346 = vld [vmem:[#allocation2 + $0x1c8] sm:$0xff]
      %v347 = vld [vmem:[#allocation2 + $0x1d0] sm:$0xff]
      %v348 = vld [vmem:[#allocation2 + $0x1e8] sm:$0xff]
      %v349 = vld [vmem:[#allocation2 + $0x1f0] sm:$0xff]
      %v350 = vld [vmem:[#allocation2 + $0x208] sm:$0xff]
      %v351 = vld [vmem:[#allocation2 + $0x210] sm:$0xff]
      %v352 = vld [vmem:[#allocation2 + $0x228] sm:$0xff]
      %v353 = vld [vmem:[#allocation2 + $0x230] sm:$0xff]
      %v354 = vld [vmem:[#allocation2 + $0x9] sm:$0xff]
      %v355 = vld [vmem:[#allocation2 + $0x11] sm:$0xff]
      %v356 = vld [vmem:[#allocation2 + $0x29] sm:$0xff]
      %v357 = vld [vmem:[#allocation2 + $0x31] sm:$0xff]
      %v358 = vld [vmem:[#allocation2 + $0x49] sm:$0xff]
      %v359 = vld [vmem:[#allocation2 + $0x51] sm:$0xff]
      %v360 = vld [vmem:[#allocation2 + $0x69] sm:$0xff]
      %v361 = vld [vmem:[#allocation2 + $0x71] sm:$0xff]
      %v362 = vld [vmem:[#allocation2 + $0x89] sm:$0xff]
      %v363 = vld [vmem:[#allocation2 + $0x91] sm:$0xff]
      %v364 = vld [vmem:[#allocation2 + $0xa9] sm:$0xff]
      %v365 = vld [vmem:[#allocation2 + $0xb1] sm:$0xff]
      %v366 = vld [vmem:[#allocation2 + $0xc9] sm:$0xff]
      %v367 = vld [vmem:[#allocation2 + $0xd1] sm:$0xff]
      %v368 = vld [vmem:[#allocation2 + $0xe9] sm:$0xff]
      %v369 = vld [vmem:[#allocation2 + $0xf1] sm:$0xff]
      %v370 = vld [vmem:[#allocation2 + $0x109] sm:$0xff]
      %v371 = vld [vmem:[#allocation2 + $0x111] sm:$0xff]
      %v372 = vld [vmem:[#allocation2 + $0x129] sm:$0xff]
      %v373 = vld [vmem:[#allocation2 + $0x131] sm:$0xff]
      %v374 = vld [vmem:[#allocation2 + $0x149] sm:$0xff]
      %v375 = vld [vmem:[#allocation2 + $0x151] sm:$0xff]
      %v376 = vld [vmem:[#allocation2 + $0x169] sm:$0xff]
      %v377 = vld [vmem:[#allocation2 + $0x171] sm:$0xff]
      %v378 = vld [vmem:[#allocation2 + $0x189] sm:$0xff]
      %v379 = vld [vmem:[#allocation2 + $0x191] sm:$0xff]
      %v380 = vld [vmem:[#allocation2 + $0x1a9] sm:$0xff]
      %v381 = vld [vmem:[#allocation2 + $0x1b1] sm:$0xff]
      %v382 = vld [vmem:[#allocation2 + $0x1c9] sm:$0xff]
      %v383 = vld [vmem:[#allocation2 + $0x1d1] sm:$0xff]
      %v384 = vld [vmem:[#allocation2 + $0x1e9] sm:$0xff]
      %v385 = vld [vmem:[#allocation2 + $0x1f1] sm:$0xff]
      %v386 = vld [vmem:[#allocation2 + $0x209] sm:$0xff]
      %v387 = vld [vmem:[#allocation2 + $0x211] sm:$0xff]
      %v388 = vld [vmem:[#allocation2 + $0x229] sm:$0xff]
      %v389 = vld [vmem:[#allocation2 + $0x231] sm:$0xff]
      %426 = vrot.lane.b32.xlu0 %v318, 4
      %v427 = vpop.permute.xlu0 %426
      %428 = vrot.lane.b32.xlu0 %v319, 4
      %v429 = vpop.permute.xlu0 %428
      %430 = vrot.lane.b32.xlu0 %v320, 4
      %v431 = vpop.permute.xlu0 %430
      %432 = vrot.lane.b32.xlu0 %v321, 4
      %v433 = vpop.permute.xlu0 %432
      %434 = vrot.lane.b32.xlu0 %v322, 4
      %v435 = vpop.permute.xlu0 %434
      %436 = vrot.lane.b32.xlu0 %v323, 4
      %v437 = vpop.permute.xlu0 %436
      %438 = vrot.lane.b32.xlu0 %v324, 4
      %v439 = vpop.permute.xlu0 %438
      %440 = vrot.lane.b32.xlu0 %v325, 4
      %v441 = vpop.permute.xlu0 %440
      %442 = vrot.lane.b32.xlu0 %v326, 4
      %v443 = vpop.permute.xlu0 %442
      %444 = vrot.lane.b32.xlu0 %v327, 4
      %v445 = vpop.permute.xlu0 %444
      %446 = vrot.lane.b32.xlu0 %v328, 4
      %v447 = vpop.permute.xlu0 %446
      %448 = vrot.lane.b32.xlu0 %v329, 4
      %v449 = vpop.permute.xlu0 %448
      %450 = vrot.lane.b32.xlu0 %v330, 4
      %v451 = vpop.permute.xlu0 %450
      %452 = vrot.lane.b32.xlu0 %v331, 4
      %v453 = vpop.permute.xlu0 %452
      %454 = vrot.lane.b32.xlu0 %v332, 4
      %v455 = vpop.permute.xlu0 %454
      %456 = vrot.lane.b32.xlu0 %v333, 4
      %v457 = vpop.permute.xlu0 %456
      %458 = vrot.lane.b32.xlu0 %v334, 4
      %v459 = vpop.permute.xlu0 %458
      %460 = vrot.lane.b32.xlu0 %v335, 4
      %v461 = vpop.permute.xlu0 %460
      %462 = vrot.lane.b32.xlu0 %v336, 4
      %v463 = vpop.permute.xlu0 %462
      %464 = vrot.lane.b32.xlu0 %v337, 4
      %v465 = vpop.permute.xlu0 %464
      %466 = vrot.lane.b32.xlu0 %v338, 4
      %v467 = vpop.permute.xlu0 %466
      %468 = vrot.lane.b32.xlu0 %v339, 4
      %v469 = vpop.permute.xlu0 %468
      %470 = vrot.lane.b32.xlu0 %v340, 4
      %v471 = vpop.permute.xlu0 %470
      %472 = vrot.lane.b32.xlu0 %v341, 4
      %v473 = vpop.permute.xlu0 %472
      %474 = vrot.lane.b32.xlu0 %v342, 4
      %v475 = vpop.permute.xlu0 %474
      %476 = vrot.lane.b32.xlu0 %v343, 4
      %v477 = vpop.permute.xlu0 %476
      %478 = vrot.lane.b32.xlu0 %v344, 4
      %v479 = vpop.permute.xlu0 %478
      %480 = vrot.lane.b32.xlu0 %v345, 4
      %v481 = vpop.permute.xlu0 %480
      %482 = vrot.lane.b32.xlu0 %v346, 4
      %v483 = vpop.permute.xlu0 %482
      %484 = vrot.lane.b32.xlu0 %v347, 4
      %v485 = vpop.permute.xlu0 %484
      %486 = vrot.lane.b32.xlu0 %v348, 4
      %v487 = vpop.permute.xlu0 %486
      %488 = vrot.lane.b32.xlu0 %v349, 4
      %v489 = vpop.permute.xlu0 %488
      %490 = vrot.lane.b32.xlu0 %v350, 4
      %v491 = vpop.permute.xlu0 %490
      %492 = vrot.lane.b32.xlu0 %v351, 4
      %v493 = vpop.permute.xlu0 %492
      %494 = vrot.lane.b32.xlu0 %v352, 4
      %v495 = vpop.permute.xlu0 %494
      %496 = vrot.lane.b32.xlu0 %v353, 4
      %v497 = vpop.permute.xlu0 %496
      %570 = vrot.lane.b32.xlu0 %v354, 8
      %v571 = vpop.permute.xlu0 %570
      %572 = vrot.lane.b32.xlu0 %v355, 8
      %v573 = vpop.permute.xlu0 %572
      %574 = vrot.lane.b32.xlu0 %v356, 8
      %v575 = vpop.permute.xlu0 %574
      %576 = vrot.lane.b32.xlu0 %v357, 8
      %v577 = vpop.permute.xlu0 %576
      %578 = vrot.lane.b32.xlu0 %v358, 8
      %v579 = vpop.permute.xlu0 %578
      %580 = vrot.lane.b32.xlu0 %v359, 8
      %v581 = vpop.permute.xlu0 %580
      %582 = vrot.lane.b32.xlu0 %v360, 8
      %v583 = vpop.permute.xlu0 %582
      %584 = vrot.lane.b32.xlu0 %v361, 8
      %v585 = vpop.permute.xlu0 %584
      %586 = vrot.lane.b32.xlu0 %v362, 8
      %v587 = vpop.permute.xlu0 %586
      %588 = vrot.lane.b32.xlu0 %v363, 8
      %v589 = vpop.permute.xlu0 %588
      %590 = vrot.lane.b32.xlu0 %v364, 8
      %v591 = vpop.permute.xlu0 %590
      %592 = vrot.lane.b32.xlu0 %v365, 8
      %v593 = vpop.permute.xlu0 %592
      %594 = vrot.lane.b32.xlu0 %v366, 8
      %v595 = vpop.permute.xlu0 %594
      %596 = vrot.lane.b32.xlu0 %v367, 8
      %v597 = vpop.permute.xlu0 %596
      %598 = vrot.lane.b32.xlu0 %v368, 8
      %v599 = vpop.permute.xlu0 %598
      %600 = vrot.lane.b32.xlu0 %v369, 8
      %v601 = vpop.permute.xlu0 %600
      %602 = vrot.lane.b32.xlu0 %v370, 8
      %v603 = vpop.permute.xlu0 %602
      %604 = vrot.lane.b32.xlu0 %v371, 8
      %v605 = vpop.permute.xlu0 %604
      %606 = vrot.lane.b32.xlu0 %v372, 8
      %v607 = vpop.permute.xlu0 %606
      %608 = vrot.lane.b32.xlu0 %v373, 8
      %v609 = vpop.permute.xlu0 %608
      %610 = vrot.lane.b32.xlu0 %v374, 8
      %v611 = vpop.permute.xlu0 %610
      %612 = vrot.lane.b32.xlu0 %v375, 8
      %v613 = vpop.permute.xlu0 %612
      %614 = vrot.lane.b32.xlu0 %v376, 8
      %v615 = vpop.permute.xlu0 %614
      %616 = vrot.lane.b32.xlu0 %v377, 8
      %v617 = vpop.permute.xlu0 %616
      %618 = vrot.lane.b32.xlu0 %v378, 8
      %v619 = vpop.permute.xlu0 %618
      %620 = vrot.lane.b32.xlu0 %v379, 8
      %v621 = vpop.permute.xlu0 %620
      %622 = vrot.lane.b32.xlu0 %v380, 8
      %v623 = vpop.permute.xlu0 %622
      %624 = vrot.lane.b32.xlu0 %v381, 8
      %v625 = vpop.permute.xlu0 %624
      %626 = vrot.lane.b32.xlu0 %v382, 8
      %v627 = vpop.permute.xlu0 %626
      %628 = vrot.lane.b32.xlu0 %v383, 8
      %v629 = vpop.permute.xlu0 %628
      %630 = vrot.lane.b32.xlu0 %v384, 8
      %v631 = vpop.permute.xlu0 %630
      %632 = vrot.lane.b32.xlu0 %v385, 8
      %v633 = vpop.permute.xlu0 %632
      %634 = vrot.lane.b32.xlu0 %v386, 8
      %v635 = vpop.permute.xlu0 %634
      %636 = vrot.lane.b32.xlu0 %v387, 8
      %v637 = vpop.permute.xlu0 %636
      %638 = vrot.lane.b32.xlu0 %v388, 8
      %v639 = vpop.permute.xlu0 %638
      %640 = vrot.lane.b32.xlu0 %v389, 8
      %v641 = vpop.permute.xlu0 %640
      %v678 = vsel %vm171, %v282, %v427
      %v679 = vsel %vm171, %v283, %v429
      %v680 = vsel %vm171, %v284, %v431
      %v681 = vsel %vm171, %v285, %v433
      %v682 = vsel %vm171, %v286, %v435
      %v683 = vsel %vm171, %v287, %v437
      %v684 = vsel %vm171, %v288, %v439
      %v685 = vsel %vm171, %v289, %v441
      %v686 = vsel %vm171, %v290, %v443
      %v687 = vsel %vm171, %v291, %v445
      %v688 = vsel %vm171, %v292, %v447
      %v689 = vsel %vm171, %v293, %v449
      %v690 = vsel %vm171, %v294, %v451
      %v691 = vsel %vm171, %v295, %v453
      %v692 = vsel %vm171, %v296, %v455
      %v693 = vsel %vm171, %v297, %v457
      %v694 = vsel %vm171, %v298, %v459
      %v695 = vsel %vm171, %v299, %v461
      %v696 = vsel %vm171, %v300, %v463
      %v697 = vsel %vm171, %v301, %v465
      %v698 = vsel %vm171, %v302, %v467
      %v699 = vsel %vm171, %v303, %v469
      %v700 = vsel %vm171, %v304, %v471
      %v701 = vsel %vm171, %v305, %v473
      %v702 = vsel %vm171, %v306, %v475
      %v703 = vsel %vm171, %v307, %v477
      %v704 = vsel %vm171, %v308, %v479
      %v705 = vsel %vm171, %v309, %v481
      %v706 = vsel %vm171, %v310, %v483
      %v707 = vsel %vm171, %v311, %v485
      %v708 = vsel %vm171, %v312, %v487
      %v709 = vsel %vm171, %v313, %v489
      %v710 = vsel %vm171, %v314, %v491
      %v711 = vsel %vm171, %v315, %v493
      %v712 = vsel %vm171, %v316, %v495
      %v713 = vsel %vm171, %v317, %v497
      %vm714 = vcmask 64512
      %v715 = vsel %vm714, %v678, %v571
      %v716 = vsel %vm714, %v679, %v573
      %v717 = vsel %vm714, %v680, %v575
      %v718 = vsel %vm714, %v681, %v577
      %v719 = vsel %vm714, %v682, %v579
      %v720 = vsel %vm714, %v683, %v581
      %v721 = vsel %vm714, %v684, %v583
      %v722 = vsel %vm714, %v685, %v585
      %v723 = vsel %vm714, %v686, %v587
      %v724 = vsel %vm714, %v687, %v589
      %v725 = vsel %vm714, %v688, %v591
      %v726 = vsel %vm714, %v689, %v593
      %v727 = vsel %vm714, %v690, %v595
      %v728 = vsel %vm714, %v691, %v597
      %v729 = vsel %vm714, %v692, %v599
      %v730 = vsel %vm714, %v693, %v601
      %v731 = vsel %vm714, %v694, %v603
      %v732 = vsel %vm714, %v695, %v605
      %v733 = vsel %vm714, %v696, %v607
      %v734 = vsel %vm714, %v697, %v609
      %v735 = vsel %vm714, %v698, %v611
      %v736 = vsel %vm714, %v699, %v613
      %v737 = vsel %vm714, %v700, %v615
      %v738 = vsel %vm714, %v701, %v617
      %v739 = vsel %vm714, %v702, %v619
      %v740 = vsel %vm714, %v703, %v621
      %v741 = vsel %vm714, %v704, %v623
      %v742 = vsel %vm714, %v705, %v625
      %v743 = vsel %vm714, %v706, %v627
      %v744 = vsel %vm714, %v707, %v629
      %v745 = vsel %vm714, %v708, %v631
      %v746 = vsel %vm714, %v709, %v633
      %v747 = vsel %vm714, %v710, %v635
      %v748 = vsel %vm714, %v711, %v637
      %v749 = vsel %vm714, %v712, %v639
      %v750 = vsel %vm714, %v713, %v641
      %vm751 = vcmask 97280
      %752 = vst.msk [vmem:[#allocation3] sm:$0xff] %vm751, %v715
      %753 = vst.msk [vmem:[#allocation3 + $0x8] sm:$0xff] %vm751, %v716
      %754 = vst.msk [vmem:[#allocation3 + $0x10] sm:$0xff] %vm751, %v717
      %755 = vst.msk [vmem:[#allocation3 + $0x18] sm:$0xff] %vm751, %v718
      %756 = vst.msk [vmem:[#allocation3 + $0x20] sm:$0xff] %vm751, %v719
      %757 = vst.msk [vmem:[#allocation3 + $0x28] sm:$0xff] %vm751, %v720
      %758 = vst.msk [vmem:[#allocation3 + $0x30] sm:$0xff] %vm751, %v721
      %759 = vst.msk [vmem:[#allocation3 + $0x38] sm:$0xff] %vm751, %v722
      %760 = vst.msk [vmem:[#allocation3 + $0x40] sm:$0xff] %vm751, %v723
      %761 = vst.msk [vmem:[#allocation3 + $0x48] sm:$0xff] %vm751, %v724
      %762 = vst.msk [vmem:[#allocation3 + $0x50] sm:$0xff] %vm751, %v725
      %763 = vst.msk [vmem:[#allocation3 + $0x58] sm:$0xff] %vm751, %v726
      %764 = vst.msk [vmem:[#allocation3 + $0x60] sm:$0xff] %vm751, %v727
      %765 = vst.msk [vmem:[#allocation3 + $0x68] sm:$0xff] %vm751, %v728
      %766 = vst.msk [vmem:[#allocation3 + $0x70] sm:$0xff] %vm751, %v729
      %767 = vst.msk [vmem:[#allocation3 + $0x78] sm:$0xff] %vm751, %v730
      %768 = vst.msk [vmem:[#allocation3 + $0x80] sm:$0xff] %vm751, %v731
      %769 = vst.msk [vmem:[#allocation3 + $0x88] sm:$0xff] %vm751, %v732
      %770 = vst.msk [vmem:[#allocation3 + $0x90] sm:$0xff] %vm751, %v733
      %771 = vst.msk [vmem:[#allocation3 + $0x98] sm:$0xff] %vm751, %v734
      %772 = vst.msk [vmem:[#allocation3 + $0xa0] sm:$0xff] %vm751, %v735
      %773 = vst.msk [vmem:[#allocation3 + $0xa8] sm:$0xff] %vm751, %v736
      %774 = vst.msk [vmem:[#allocation3 + $0xb0] sm:$0xff] %vm751, %v737
      %775 = vst.msk [vmem:[#allocation3 + $0xb8] sm:$0xff] %vm751, %v738
      %776 = vst.msk [vmem:[#allocation3 + $0xc0] sm:$0xff] %vm751, %v739
      %777 = vst.msk [vmem:[#allocation3 + $0xc8] sm:$0xff] %vm751, %v740
      %778 = vst.msk [vmem:[#allocation3 + $0xd0] sm:$0xff] %vm751, %v741
      %779 = vst.msk [vmem:[#allocation3 + $0xd8] sm:$0xff] %vm751, %v742
      %780 = vst.msk [vmem:[#allocation3 + $0xe0] sm:$0xff] %vm751, %v743
      %781 = vst.msk [vmem:[#allocation3 + $0xe8] sm:$0xff] %vm751, %v744
      %782 = vst.msk [vmem:[#allocation3 + $0xf0] sm:$0xff] %vm751, %v745
      %783 = vst.msk [vmem:[#allocation3 + $0xf8] sm:$0xff] %vm751, %v746
      %784 = vst.msk [vmem:[#allocation3 + $0x100] sm:$0xff] %vm751, %v747
      %785 = vst.msk [vmem:[#allocation3 + $0x108] sm:$0xff] %vm751, %v748
      %786 = vst.msk [vmem:[#allocation3 + $0x110] sm:$0xff] %vm751, %v749
      %787 = vst.msk [vmem:[#allocation3 + $0x118] sm:$0xff] %vm751, %v750
      %v788 = vld [vmem:[#allocation3] sm:$0xff]
      %v789 = vld [vmem:[#allocation3 + $0x8] sm:$0xff]
      %v790 = vld [vmem:[#allocation3 + $0x10] sm:$0xff]
      %v791 = vld [vmem:[#allocation3 + $0x18] sm:$0xff]
      %v792 = vld [vmem:[#allocation3 + $0x20] sm:$0xff]
      %v793 = vld [vmem:[#allocation3 + $0x28] sm:$0xff]
      %v794 = vld [vmem:[#allocation3 + $0x30] sm:$0xff]
      %v795 = vld [vmem:[#allocation3 + $0x38] sm:$0xff]
      %v796 = vld [vmem:[#allocation3 + $0x40] sm:$0xff]
      %v797 = vld [vmem:[#allocation3 + $0x48] sm:$0xff]
      %v798 = vld [vmem:[#allocation3 + $0x50] sm:$0xff]
      %v799 = vld [vmem:[#allocation3 + $0x58] sm:$0xff]
      %v800 = vld [vmem:[#allocation3 + $0x60] sm:$0xff]
      %v801 = vld [vmem:[#allocation3 + $0x68] sm:$0xff]
      %v802 = vld [vmem:[#allocation3 + $0x70] sm:$0xff]
      %v803 = vld [vmem:[#allocation3 + $0x78] sm:$0xff]
      %v804 = vld [vmem:[#allocation3 + $0x80] sm:$0xff]
      %v805 = vld [vmem:[#allocation3 + $0x88] sm:$0xff]
      %v806 = vld [vmem:[#allocation3 + $0x90] sm:$0xff]
      %v807 = vld [vmem:[#allocation3 + $0x98] sm:$0xff]
      %v808 = vld [vmem:[#allocation3 + $0xa0] sm:$0xff]
      %v809 = vld [vmem:[#allocation3 + $0xa8] sm:$0xff]
      %v810 = vld [vmem:[#allocation3 + $0xb0] sm:$0xff]
      %v811 = vld [vmem:[#allocation3 + $0xb8] sm:$0xff]
      %v812 = vld [vmem:[#allocation3 + $0xc0] sm:$0xff]
      %v813 = vld [vmem:[#allocation3 + $0xc8] sm:$0xff]
      %v814 = vld [vmem:[#allocation3 + $0xd0] sm:$0xff]
      %v815 = vld [vmem:[#allocation3 + $0xd8] sm:$0xff]
      %v816 = vld [vmem:[#allocation3 + $0xe0] sm:$0xff]
      %v817 = vld [vmem:[#allocation3 + $0xe8] sm:$0xff]
      %v818 = vld [vmem:[#allocation3 + $0xf0] sm:$0xff]
      %v819 = vld [vmem:[#allocation3 + $0xf8] sm:$0xff]
      %v820 = vld [vmem:[%s1] sm:$0xff]
      %v821 = vld [vmem:[%s1 + $0x8] sm:$0xf]
      %v823 = vsel %vm751, %v788, 0
      %v826 = vsel %vm751, %v789, 0
      %v829 = vsel %vm751, %v790, 0
      %v832 = vsel %vm751, %v791, 0
      %v835 = vsel %vm751, %v792, 0
      %v838 = vsel %vm751, %v793, 0
      %v841 = vsel %vm751, %v794, 0
      %v844 = vsel %vm751, %v795, 0
      %v847 = vsel %vm751, %v796, 0
      %v850 = vsel %vm751, %v797, 0
      %v853 = vsel %vm751, %v798, 0
      %v856 = vsel %vm751, %v799, 0
      %v859 = vsel %vm751, %v800, 0
      %v862 = vsel %vm751, %v801, 0
      %v865 = vsel %vm751, %v802, 0
      %v868 = vsel %vm751, %v803, 0
      %v871 = vsel %vm751, %v804, 0
      %v874 = vsel %vm751, %v805, 0
      %v877 = vsel %vm751, %v806, 0
      %v880 = vsel %vm751, %v807, 0
      %v883 = vsel %vm751, %v808, 0
      %v886 = vsel %vm751, %v809, 0
      %v889 = vsel %vm751, %v810, 0
      %v892 = vsel %vm751, %v811, 0
      %v895 = vsel %vm751, %v812, 0
      %v898 = vsel %vm751, %v813, 0
      %v901 = vsel %vm751, %v814, 0
      %v904 = vsel %vm751, %v815, 0
      %v907 = vsel %vm751, %v816, 0
      %v910 = vsel %vm751, %v817, 0
      %v913 = vsel %vm751, %v818, 0
      %v916 = vsel %vm751, %v819, 0
      %vm918 = vcmask 1043456
      %v920 = vsel %vm918, %v821, 0
      %922 = vmatprep.subr.mxu0 0.0
      %923 = vmatpush1.msra.mxu0 %v820
      %924 = vmatprep.subr.mxu0 0.0
      %925 = vmatpush1.msra.mxu0 %v920
      %926 = vmatprep.subr.mxu0 0.0
      %927 = vmatpush1.msra.mxu0 0.0
      %928 = vmatprep.subr.mxu0 0.0
      %929 = vmatpush1.msra.mxu0 0.0
      %930 = vmatprep.subr.mxu0 0.0
      %931 = vmatpush1.msra.mxu0 0.0
      %932 = vmatprep.subr.mxu0 0.0
      %933 = vmatpush1.msra.mxu0 0.0
      %934 = vmatprep.subr.mxu0 0.0
      %935 = vmatpush1.msra.mxu0 0.0
      %936 = vmatprep.subr.mxu0 0.0
      %937 = vmatpush1.msra.mxu0 0.0
      %938 = vmatprep.subr.mxu0 0.0
      %939 = vmatpush1.msra.mxu0 0.0
      %940 = vmatprep.subr.mxu0 0.0
      %941 = vmatpush1.msra.mxu0 0.0
      %942 = vmatprep.subr.mxu0 0.0
      %943 = vmatpush1.msra.mxu0 0.0
      %944 = vmatprep.subr.mxu0 0.0
      %945 = vmatpush1.msra.mxu0 0.0
      %946 = vmatprep.subr.mxu0 0.0
      %947 = vmatpush1.msra.mxu0 0.0
      %948 = vmatprep.subr.mxu0 0.0
      %949 = vmatpush1.msra.mxu0 0.0
      %950 = vmatprep.subr.mxu0 0.0
      %951 = vmatpush1.msra.mxu0 0.0
      %952 = vmatprep.subr.mxu0 0.0
      %953 = vmatpush1.msra.mxu0 0.0
      %954 = vmatprep.subr.mxu0 0.0
      %955 = vmatpush1.msra.mxu0 0.0
      %956 = vmatprep.subr.mxu0 0.0
      %957 = vmatpush1.msra.mxu0 0.0
      %958 = vmatprep.subr.mxu0 0.0
      %959 = vmatpush1.msra.mxu0 0.0
      %960 = vmatprep.subr.mxu0 0.0
      %961 = vmatpush1.msra.mxu0 0.0
      %962 = vmatprep.subr.mxu0 0.0
      %963 = vmatpush1.msra.mxu0 0.0
      %964 = vmatprep.subr.mxu0 0.0
      %965 = vmatpush1.msra.mxu0 0.0
      %966 = vmatprep.subr.mxu0 0.0
      %967 = vmatpush1.msra.mxu0 0.0
      %968 = vmatprep.subr.mxu0 0.0
      %969 = vmatpush1.msra.mxu0 0.0
      %970 = vmatprep.subr.mxu0 0.0
      %971 = vmatpush1.msra.mxu0 0.0
      %972 = vmatprep.subr.mxu0 0.0
      %973 = vmatpush1.msra.mxu0 0.0
      %974 = vmatprep.subr.mxu0 0.0
      %975 = vmatpush1.msra.mxu0 0.0
      %976 = vmatprep.subr.mxu0 0.0
      %977 = vmatpush1.msra.mxu0 0.0
      %978 = vmatprep.subr.mxu0 0.0
      %979 = vmatpush1.msra.mxu0 0.0
      %980 = vmatprep.subr.mxu0 0.0
      %981 = vmatpush1.msra.mxu0 0.0
      %982 = vmatprep.subr.mxu0 0.0
      %983 = vmatpush1.msra.mxu0 0.0
      %984 = vmatprep.subr.mxu0 0.0
      %985 = vmatpush1.msra.mxu0 0.0
      %986 = vmatprep.mubr.f32.mxu0 0.0
      %987 = vmatmul.mubr.f32.gmra.mrb[0].mxu0 %v823
      %v988 = vpop.f32.mrb[0].mxu0
      %v989 = vadd.f32 0.0, %v988
      %v990 = vpop.f32.mrb[0].mxu0
      %991 = vmatprep.mubr.f32.mxu0 0.0
      %992 = vmatmul.mubr.f32.gmra.mrb[0].mxu0 %v826
      %v993 = vpop.f32.mrb[0].mxu0
      %v994 = vadd.f32 0.0, %v993
      %v995 = vpop.f32.mrb[0].mxu0
      %996 = vmatprep.mubr.f32.mxu0 0.0
      %997 = vmatmul.mubr.f32.gmra.mrb[0].mxu0 %v829
      %v998 = vpop.f32.mrb[0].mxu0
      %v999 = vadd.f32 0.0, %v998
      %v1000 = vpop.f32.mrb[0].mxu0
      %1001 = vmatprep.mubr.f32.mxu0 0.0
      %1002 = vmatmul.mubr.f32.gmra.mrb[0].mxu0 %v832
      %v1003 = vpop.f32.mrb[0].mxu0
      %v1004 = vadd.f32 0.0, %v1003
      %v1005 = vpop.f32.mrb[0].mxu0
      %1006 = vmatprep.mubr.f32.mxu0 0.0
      %1007 = vmatmul.mubr.f32.gmra.mrb[0].mxu0 %v835
      %v1008 = vpop.f32.mrb[0].mxu0
      %v1009 = vadd.f32 0.0, %v1008
      %v1010 = vpop.f32.mrb[0].mxu0
      %1011 = vmatprep.mubr.f32.mxu0 0.0
      %1012 = vmatmul.mubr.f32.gmra.mrb[0].mxu0 %v838
      %v1013 = vpop.f32.mrb[0].mxu0
      %v1014 = vadd.f32 0.0, %v1013
      %v1015 = vpop.f32.mrb[0].mxu0
      %1016 = vmatprep.mubr.f32.mxu0 0.0
      %1017 = vmatmul.mubr.f32.gmra.mrb[0].mxu0 %v841
      %v1018 = vpop.f32.mrb[0].mxu0
      %v1019 = vadd.f32 0.0, %v1018
      %v1020 = vpop.f32.mrb[0].mxu0
      %1021 = vmatprep.mubr.f32.mxu0 0.0
      %1022 = vmatmul.mubr.f32.gmra.mrb[0].mxu0 %v844
      %v1023 = vpop.f32.mrb[0].mxu0
      %v1024 = vadd.f32 0.0, %v1023
      %v1025 = vpop.f32.mrb[0].mxu0
      %1026 = vmatprep.mubr.f32.mxu0 0.0
      %1027 = vmatmul.mubr.f32.gmra.mrb[0].mxu0 %v847
      %v1028 = vpop.f32.mrb[0].mxu0
      %v1029 = vadd.f32 0.0, %v1028
      %v1030 = vpop.f32.mrb[0].mxu0
      %1031 = vmatprep.mubr.f32.mxu0 0.0
      %1032 = vmatmul.mubr.f32.gmra.mrb[0].mxu0 %v850
      %v1033 = vpop.f32.mrb[0].mxu0
      %v1034 = vadd.f32 0.0, %v1033
      %v1035 = vpop.f32.mrb[0].mxu0
      %1036 = vmatprep.mubr.f32.mxu0 0.0
      %1037 = vmatmul.mubr.f32.gmra.mrb[0].mxu0 %v853
      %v1038 = vpop.f32.mrb[0].mxu0
      %v1039 = vadd.f32 0.0, %v1038
      %v1040 = vpop.f32.mrb[0].mxu0
      %1041 = vmatprep.mubr.f32.mxu0 0.0
      %1042 = vmatmul.mubr.f32.gmra.mrb[0].mxu0 %v856
      %v1043 = vpop.f32.mrb[0].mxu0
      %v1044 = vadd.f32 0.0, %v1043
      %v1045 = vpop.f32.mrb[0].mxu0
      %1046 = vmatprep.mubr.f32.mxu0 0.0
      %1047 = vmatmul.mubr.f32.gmra.mrb[0].mxu0 %v859
      %v1048 = vpop.f32.mrb[0].mxu0
      %v1049 = vadd.f32 0.0, %v1048
      %v1050 = vpop.f32.mrb[0].mxu0
      %1051 = vmatprep.mubr.f32.mxu0 0.0
      %1052 = vmatmul.mubr.f32.gmra.mrb[0].mxu0 %v862
      %v1053 = vpop.f32.mrb[0].mxu0
      %v1054 = vadd.f32 0.0, %v1053
      %v1055 = vpop.f32.mrb[0].mxu0
      %1056 = vmatprep.mubr.f32.mxu0 0.0
      %1057 = vmatmul.mubr.f32.gmra.mrb[0].mxu0 %v865
      %v1058 = vpop.f32.mrb[0].mxu0
      %v1059 = vadd.f32 0.0, %v1058
      %v1060 = vpop.f32.mrb[0].mxu0
      %1061 = vmatprep.mubr.f32.mxu0 0.0
      %1062 = vmatmul.mubr.f32.gmra.mrb[0].mxu0 %v868
      %v1063 = vpop.f32.mrb[0].mxu0
      %v1064 = vadd.f32 0.0, %v1063
      %v1065 = vpop.f32.mrb[0].mxu0
      %1066 = vmatprep.mubr.f32.mxu0 0.0
      %1067 = vmatmul.mubr.f32.gmra.mrb[0].mxu0 %v871
      %v1068 = vpop.f32.mrb[0].mxu0
      %v1069 = vadd.f32 0.0, %v1068
      %v1070 = vpop.f32.mrb[0].mxu0
      %1071 = vmatprep.mubr.f32.mxu0 0.0
      %1072 = vmatmul.mubr.f32.gmra.mrb[0].mxu0 %v874
      %v1073 = vpop.f32.mrb[0].mxu0
      %v1074 = vadd.f32 0.0, %v1073
      %v1075 = vpop.f32.mrb[0].mxu0
      %1076 = vmatprep.mubr.f32.mxu0 0.0
      %1077 = vmatmul.mubr.f32.gmra.mrb[0].mxu0 %v877
      %v1078 = vpop.f32.mrb[0].mxu0
      %v1079 = vadd.f32 0.0, %v1078
      %v1080 = vpop.f32.mrb[0].mxu0
      %1081 = vmatprep.mubr.f32.mxu0 0.0
      %1082 = vmatmul.mubr.f32.gmra.mrb[0].mxu0 %v880
      %v1083 = vpop.f32.mrb[0].mxu0
      %v1084 = vadd.f32 0.0, %v1083
      %v1085 = vpop.f32.mrb[0].mxu0
      %1086 = vmatprep.mubr.f32.mxu0 0.0
      %1087 = vmatmul.mubr.f32.gmra.mrb[0].mxu0 %v883
      %v1088 = vpop.f32.mrb[0].mxu0
      %v1089 = vadd.f32 0.0, %v1088
      %v1090 = vpop.f32.mrb[0].mxu0
      %1091 = vmatprep.mubr.f32.mxu0 0.0
      %1092 = vmatmul.mubr.f32.gmra.mrb[0].mxu0 %v886
      %v1093 = vpop.f32.mrb[0].mxu0
      %v1094 = vadd.f32 0.0, %v1093
      %v1095 = vpop.f32.mrb[0].mxu0
      %1096 = vmatprep.mubr.f32.mxu0 0.0
      %1097 = vmatmul.mubr.f32.gmra.mrb[0].mxu0 %v889
      %v1098 = vpop.f32.mrb[0].mxu0
      %v1099 = vadd.f32 0.0, %v1098
      %v1100 = vpop.f32.mrb[0].mxu0
      %1101 = vmatprep.mubr.f32.mxu0 0.0
      %1102 = vmatmul.mubr.f32.gmra.mrb[0].mxu0 %v892
      %v1103 = vpop.f32.mrb[0].mxu0
      %v1104 = vadd.f32 0.0, %v1103
      %v1105 = vpop.f32.mrb[0].mxu0
      %1106 = vmatprep.mubr.f32.mxu0 0.0
      %1107 = vmatmul.mubr.f32.gmra.mrb[0].mxu0 %v895
      %v1108 = vpop.f32.mrb[0].mxu0
      %v1109 = vadd.f32 0.0, %v1108
      %v1110 = vpop.f32.mrb[0].mxu0
      %1111 = vmatprep.mubr.f32.mxu0 0.0
      %1112 = vmatmul.mubr.f32.gmra.mrb[0].mxu0 %v898
      %v1113 = vpop.f32.mrb[0].mxu0
      %v1114 = vadd.f32 0.0, %v1113
      %v1115 = vpop.f32.mrb[0].mxu0
      %1116 = vmatprep.mubr.f32.mxu0 0.0
      %1117 = vmatmul.mubr.f32.gmra.mrb[0].mxu0 %v901
      %v1118 = vpop.f32.mrb[0].mxu0
      %v1119 = vadd.f32 0.0, %v1118
      %v1120 = vpop.f32.mrb[0].mxu0
      %1121 = vmatprep.mubr.f32.mxu0 0.0
      %1122 = vmatmul.mubr.f32.gmra.mrb[0].mxu0 %v904
      %v1123 = vpop.f32.mrb[0].mxu0
      %v1124 = vadd.f32 0.0, %v1123
      %v1125 = vpop.f32.mrb[0].mxu0
      %1126 = vmatprep.mubr.f32.mxu0 0.0
      %1127 = vmatmul.mubr.f32.gmra.mrb[0].mxu0 %v907
      %v1128 = vpop.f32.mrb[0].mxu0
      %v1129 = vadd.f32 0.0, %v1128
      %v1130 = vpop.f32.mrb[0].mxu0
      %1131 = vmatprep.mubr.f32.mxu0 0.0
      %1132 = vmatmul.mubr.f32.gmra.mrb[0].mxu0 %v910
      %v1133 = vpop.f32.mrb[0].mxu0
      %v1134 = vadd.f32 0.0, %v1133
      %v1135 = vpop.f32.mrb[0].mxu0
      %1136 = vmatprep.mubr.f32.mxu0 0.0
      %1137 = vmatmul.mubr.f32.gmra.mrb[0].mxu0 %v913
      %v1138 = vpop.f32.mrb[0].mxu0
      %v1139 = vadd.f32 0.0, %v1138
      %v1140 = vpop.f32.mrb[0].mxu0
      %1141 = vmatprep.mubr.f32.mxu0 0.0
      %1142 = vmatmul.mubr.f32.gmra.mrb[0].mxu0 %v916
      %v1143 = vpop.f32.mrb[0].mxu0
      %v1144 = vadd.f32 0.0, %v1143
      %v1145 = vpop.f32.mrb[0].mxu0
      %1146 = vdwg.mxu0
      %1147 = vst.msk [vmem:[#allocation4] sm:$0xff] %vm171, %v989
      %1148 = vst.msk [vmem:[#allocation4 + $0x8] sm:$0xff] %vm171, %v994
      %1149 = vst.msk [vmem:[#allocation4 + $0x10] sm:$0xff] %vm171, %v999
      %1150 = vst.msk [vmem:[#allocation4 + $0x18] sm:$0xff] %vm171, %v1004
      %1151 = vst.msk [vmem:[#allocation4 + $0x20] sm:$0xff] %vm171, %v1009
      %1152 = vst.msk [vmem:[#allocation4 + $0x28] sm:$0xff] %vm171, %v1014
      %1153 = vst.msk [vmem:[#allocation4 + $0x30] sm:$0xff] %vm171, %v1019
      %1154 = vst.msk [vmem:[#allocation4 + $0x38] sm:$0xff] %vm171, %v1024
      %1155 = vst.msk [vmem:[#allocation4 + $0x40] sm:$0xff] %vm171, %v1029
      %1156 = vst.msk [vmem:[#allocation4 + $0x48] sm:$0xff] %vm171, %v1034
      %1157 = vst.msk [vmem:[#allocation4 + $0x50] sm:$0xff] %vm171, %v1039
      %1158 = vst.msk [vmem:[#allocation4 + $0x58] sm:$0xff] %vm171, %v1044
      %1159 = vst.msk [vmem:[#allocation4 + $0x60] sm:$0xff] %vm171, %v1049
      %1160 = vst.msk [vmem:[#allocation4 + $0x68] sm:$0xff] %vm171, %v1054
      %1161 = vst.msk [vmem:[#allocation4 + $0x70] sm:$0xff] %vm171, %v1059
      %1162 = vst.msk [vmem:[#allocation4 + $0x78] sm:$0xff] %vm171, %v1064
      %1163 = vst.msk [vmem:[#allocation4 + $0x80] sm:$0xff] %vm171, %v1069
      %1164 = vst.msk [vmem:[#allocation4 + $0x88] sm:$0xff] %vm171, %v1074
      %1165 = vst.msk [vmem:[#allocation4 + $0x90] sm:$0xff] %vm171, %v1079
      %1166 = vst.msk [vmem:[#allocation4 + $0x98] sm:$0xff] %vm171, %v1084
      %1167 = vst.msk [vmem:[#allocation4 + $0xa0] sm:$0xff] %vm171, %v1089
      %1168 = vst.msk [vmem:[#allocation4 + $0xa8] sm:$0xff] %vm171, %v1094
      %1169 = vst.msk [vmem:[#allocation4 + $0xb0] sm:$0xff] %vm171, %v1099
      %1170 = vst.msk [vmem:[#allocation4 + $0xb8] sm:$0xff] %vm171, %v1104
      %1171 = vst.msk [vmem:[#allocation4 + $0xc0] sm:$0xff] %vm171, %v1109
      %1172 = vst.msk [vmem:[#allocation4 + $0xc8] sm:$0xff] %vm171, %v1114
      %1173 = vst.msk [vmem:[#allocation4 + $0xd0] sm:$0xff] %vm171, %v1119
      %1174 = vst.msk [vmem:[#allocation4 + $0xd8] sm:$0xff] %vm171, %v1124
      %1175 = vst.msk [vmem:[#allocation4 + $0xe0] sm:$0xff] %vm171, %v1129
      %1176 = vst.msk [vmem:[#allocation4 + $0xe8] sm:$0xff] %vm171, %v1134
      %1177 = vst.msk [vmem:[#allocation4 + $0xf0] sm:$0xff] %vm171, %v1139
      %1178 = vst.msk [vmem:[#allocation4 + $0xf8] sm:$0xff] %vm171, %v1144
      %s1179 = scalar_lea.vmem [#allocation3], 16
      %v1180 = vld [vmem:[%s1179] sm:$0xff]
      %v1181 = vld [vmem:[%s1179 + $0x8] sm:$0xff]
      %v1182 = vld [vmem:[%s1179 + $0x10] sm:$0xff]
      %v1183 = vld [vmem:[%s1179 + $0x18] sm:$0xff]
      %v1184 = vld [vmem:[%s1179 + $0x20] sm:$0xff]
      %v1185 = vld [vmem:[%s1179 + $0x28] sm:$0xff]
      %v1186 = vld [vmem:[%s1179 + $0x30] sm:$0xff]
      %v1187 = vld [vmem:[%s1179 + $0x38] sm:$0xff]
      %v1188 = vld [vmem:[%s1179 + $0x40] sm:$0xff]
      %v1189 = vld [vmem:[%s1179 + $0x48] sm:$0xff]
      %v1190 = vld [vmem:[%s1179 + $0x50] sm:$0xff]
      %v1191 = vld [vmem:[%s1179 + $0x58] sm:$0xff]
      %v1192 = vld [vmem:[%s1179 + $0x60] sm:$0xff]
      %v1193 = vld [vmem:[%s1179 + $0x68] sm:$0xff]
      %v1194 = vld [vmem:[%s1179 + $0x70] sm:$0xff]
      %v1195 = vld [vmem:[%s1179 + $0x78] sm:$0xff]
      %v1196 = vld [vmem:[%s1179 + $0x80] sm:$0xff]
      %v1197 = vld [vmem:[%s1179 + $0x88] sm:$0xff]
      %v1198 = vld [vmem:[%s1179 + $0x90] sm:$0xff]
      %v1199 = vld [vmem:[%s1179 + $0x98] sm:$0xff]
      %v1200 = vld [vmem:[%s1179 + $0xa0] sm:$0xff]
      %v1201 = vld [vmem:[%s1179 + $0xa8] sm:$0xff]
      %v1202 = vld [vmem:[%s1179 + $0xb0] sm:$0xff]
      %v1203 = vld [vmem:[%s1179 + $0xb8] sm:$0xff]
      %v1204 = vld [vmem:[%s1179 + $0xc0] sm:$0xff]
      %v1205 = vld [vmem:[%s1179 + $0xc8] sm:$0xff]
      %v1206 = vld [vmem:[%s1179 + $0xd0] sm:$0xff]
      %v1207 = vld [vmem:[%s1179 + $0xd8] sm:$0xff]
      %v1208 = vld [vmem:[%s1179 + $0xe0] sm:$0xff]
      %v1209 = vld [vmem:[%s1179 + $0xe8] sm:$0xff]
      %v1210 = vld [vmem:[%s1179 + $0xf0] sm:$0xff]
      %v1211 = vld [vmem:[%s1179 + $0xf8] sm:$0xff]
      %s1212 = scalar_lea.vmem %s1, 16
      %v1213 = vld [vmem:[%s1212] sm:$0xff]
      %v1214 = vld [vmem:[%s1212 + $0x8] sm:$0xf]
      %v1216 = vsel %vm751, %v1180, 0
      %v1219 = vsel %vm751, %v1181, 0
      %v1222 = vsel %vm751, %v1182, 0
      %v1225 = vsel %vm751, %v1183, 0
      %v1228 = vsel %vm751, %v1184, 0
      %v1231 = vsel %vm751, %v1185, 0
      %v1234 = vsel %vm751, %v1186, 0
      %v1237 = vsel %vm751, %v1187, 0
      %v1240 = vsel %vm751, %v1188, 0
      %v1243 = vsel %vm751, %v1189, 0
      %v1246 = vsel %vm751, %v1190, 0
      %v1249 = vsel %vm751, %v1191, 0
      %v1252 = vsel %vm751, %v1192, 0
      %v1255 = vsel %vm751, %v1193, 0
      %v1258 = vsel %vm751, %v1194, 0
      %v1261 = vsel %vm751, %v1195, 0
      %v1264 = vsel %vm751, %v1196, 0
      %v1267 = vsel %vm751, %v1197, 0
      %v1270 = vsel %vm751, %v1198, 0
      %v1273 = vsel %vm751, %v1199, 0
      %v1276 = vsel %vm751, %v1200, 0
      %v1279 = vsel %vm751, %v1201, 0
      %v1282 = vsel %vm751, %v1202, 0
      %v1285 = vsel %vm751, %v1203, 0
      %v1288 = vsel %vm751, %v1204, 0
      %v1291 = vsel %vm751, %v1205, 0
      %v1294 = vsel %vm751, %v1206, 0
      %v1297 = vsel %vm751, %v1207, 0
      %v1300 = vsel %vm751, %v1208, 0
      %v1303 = vsel %vm751, %v1209, 0
      %v1306 = vsel %vm751, %v1210, 0
      %v1309 = vsel %vm751, %v1211, 0
      %v1312 = vsel %vm918, %v1214, 0
      %1314 = vmatprep.subr.mxu0 0.0
      %1315 = vmatpush1.msra.mxu0 %v1213
      %1316 = vmatprep.subr.mxu0 0.0
      %1317 = vmatpush1.msra.mxu0 %v1312
      %1318 = vmatprep.subr.mxu0 0.0
      %1319 = vmatpush1.msra.mxu0 0.0
      %1320 = vmatprep.subr.mxu0 0.0
      %1321 = vmatpush1.msra.mxu0 0.0
      %1322 = vmatprep.subr.mxu0 0.0
      %1323 = vmatpush1.msra.mxu0 0.0
      %1324 = vmatprep.subr.mxu0 0.0
      %1325 = vmatpush1.msra.mxu0 0.0
      %1326 = vmatprep.subr.mxu0 0.0
      %1327 = vmatpush1.msra.mxu0 0.0
      %1328 = vmatprep.subr.mxu0 0.0
      %1329 = vmatpush1.msra.mxu0 0.0
      %1330 = vmatprep.subr.mxu0 0.0
      %1331 = vmatpush1.msra.mxu0 0.0
      %1332 = vmatprep.subr.mxu0 0.0
      %1333 = vmatpush1.msra.mxu0 0.0
      %1334 = vmatprep.subr.mxu0 0.0
      %1335 = vmatpush1.msra.mxu0 0.0
      %1336 = vmatprep.subr.mxu0 0.0
      %1337 = vmatpush1.msra.mxu0 0.0
      %1338 = vmatprep.subr.mxu0 0.0
      %1339 = vmatpush1.msra.mxu0 0.0
      %1340 = vmatprep.subr.mxu0 0.0
      %1341 = vmatpush1.msra.mxu0 0.0
      %1342 = vmatprep.subr.mxu0 0.0
      %1343 = vmatpush1.msra.mxu0 0.0
      %1344 = vmatprep.subr.mxu0 0.0
      %1345 = vmatpush1.msra.mxu0 0.0
      %1346 = vmatprep.subr.mxu0 0.0
      %1347 = vmatpush1.msra.mxu0 0.0
      %1348 = vmatprep.subr.mxu0 0.0
      %1349 = vmatpush1.msra.mxu0 0.0
      %1350 = vmatprep.subr.mxu0 0.0
      %1351 = vmatpush1.msra.mxu0 0.0
      %1352 = vmatprep.subr.mxu0 0.0
      %1353 = vmatpush1.msra.mxu0 0.0
      %1354 = vmatprep.subr.mxu0 0.0
      %1355 = vmatpush1.msra.mxu0 0.0
      %1356 = vmatprep.subr.mxu0 0.0
      %1357 = vmatpush1.msra.mxu0 0.0
      %1358 = vmatprep.subr.mxu0 0.0
      %1359 = vmatpush1.msra.mxu0 0.0
      %1360 = vmatprep.subr.mxu0 0.0
      %1361 = vmatpush1.msra.mxu0 0.0
      %1362 = vmatprep.subr.mxu0 0.0
      %1363 = vmatpush1.msra.mxu0 0.0
      %1364 = vmatprep.subr.mxu0 0.0
      %1365 = vmatpush1.msra.mxu0 0.0
      %1366 = vmatprep.subr.mxu0 0.0
      %1367 = vmatpush1.msra.mxu0 0.0
      %1368 = vmatprep.subr.mxu0 0.0
      %1369 = vmatpush1.msra.mxu0 0.0
      %1370 = vmatprep.subr.mxu0 0.0
      %1371 = vmatpush1.msra.mxu0 0.0
      %1372 = vmatprep.subr.mxu0 0.0
      %1373 = vmatpush1.msra.mxu0 0.0
      %1374 = vmatprep.subr.mxu0 0.0
      %1375 = vmatpush1.msra.mxu0 0.0
      %1376 = vmatprep.subr.mxu0 0.0
      %1377 = vmatpush1.msra.mxu0 0.0
      %1378 = vmatprep.mubr.f32.mxu0 0.0
      %1379 = vmatmul.mubr.f32.gmra.mrb[0].mxu0 %v1216
      %v1380 = vpop.f32.mrb[0].mxu0
      %v1381 = vadd.f32 0.0, %v1380
      %v1382 = vpop.f32.mrb[0].mxu0
      %1383 = vmatprep.mubr.f32.mxu0 0.0
      %1384 = vmatmul.mubr.f32.gmra.mrb[0].mxu0 %v1219
      %v1385 = vpop.f32.mrb[0].mxu0
      %v1386 = vadd.f32 0.0, %v1385
      %v1387 = vpop.f32.mrb[0].mxu0
      %1388 = vmatprep.mubr.f32.mxu0 0.0
      %1389 = vmatmul.mubr.f32.gmra.mrb[0].mxu0 %v1222
      %v1390 = vpop.f32.mrb[0].mxu0
      %v1391 = vadd.f32 0.0, %v1390
      %v1392 = vpop.f32.mrb[0].mxu0
      %1393 = vmatprep.mubr.f32.mxu0 0.0
      %1394 = vmatmul.mubr.f32.gmra.mrb[0].mxu0 %v1225
      %v1395 = vpop.f32.mrb[0].mxu0
      %v1396 = vadd.f32 0.0, %v1395
      %v1397 = vpop.f32.mrb[0].mxu0
      %1398 = vmatprep.mubr.f32.mxu0 0.0
      %1399 = vmatmul.mubr.f32.gmra.mrb[0].mxu0 %v1228
      %v1400 = vpop.f32.mrb[0].mxu0
      %v1401 = vadd.f32 0.0, %v1400
      %v1402 = vpop.f32.mrb[0].mxu0
      %1403 = vmatprep.mubr.f32.mxu0 0.0
      %1404 = vmatmul.mubr.f32.gmra.mrb[0].mxu0 %v1231
      %v1405 = vpop.f32.mrb[0].mxu0
      %v1406 = vadd.f32 0.0, %v1405
      %v1407 = vpop.f32.mrb[0].mxu0
      %1408 = vmatprep.mubr.f32.mxu0 0.0
      %1409 = vmatmul.mubr.f32.gmra.mrb[0].mxu0 %v1234
      %v1410 = vpop.f32.mrb[0].mxu0
      %v1411 = vadd.f32 0.0, %v1410
      %v1412 = vpop.f32.mrb[0].mxu0
      %1413 = vmatprep.mubr.f32.mxu0 0.0
      %1414 = vmatmul.mubr.f32.gmra.mrb[0].mxu0 %v1237
      %v1415 = vpop.f32.mrb[0].mxu0
      %v1416 = vadd.f32 0.0, %v1415
      %v1417 = vpop.f32.mrb[0].mxu0
      %1418 = vmatprep.mubr.f32.mxu0 0.0
      %1419 = vmatmul.mubr.f32.gmra.mrb[0].mxu0 %v1240
      %v1420 = vpop.f32.mrb[0].mxu0
      %v1421 = vadd.f32 0.0, %v1420
      %v1422 = vpop.f32.mrb[0].mxu0
      %1423 = vmatprep.mubr.f32.mxu0 0.0
      %1424 = vmatmul.mubr.f32.gmra.mrb[0].mxu0 %v1243
      %v1425 = vpop.f32.mrb[0].mxu0
      %v1426 = vadd.f32 0.0, %v1425
      %v1427 = vpop.f32.mrb[0].mxu0
      %1428 = vmatprep.mubr.f32.mxu0 0.0
      %1429 = vmatmul.mubr.f32.gmra.mrb[0].mxu0 %v1246
      %v1430 = vpop.f32.mrb[0].mxu0
      %v1431 = vadd.f32 0.0, %v1430
      %v1432 = vpop.f32.mrb[0].mxu0
      %1433 = vmatprep.mubr.f32.mxu0 0.0
      %1434 = vmatmul.mubr.f32.gmra.mrb[0].mxu0 %v1249
      %v1435 = vpop.f32.mrb[0].mxu0
      %v1436 = vadd.f32 0.0, %v1435
      %v1437 = vpop.f32.mrb[0].mxu0
      %1438 = vmatprep.mubr.f32.mxu0 0.0
      %1439 = vmatmul.mubr.f32.gmra.mrb[0].mxu0 %v1252
      %v1440 = vpop.f32.mrb[0].mxu0
      %v1441 = vadd.f32 0.0, %v1440
      %v1442 = vpop.f32.mrb[0].mxu0
      %1443 = vmatprep.mubr.f32.mxu0 0.0
      %1444 = vmatmul.mubr.f32.gmra.mrb[0].mxu0 %v1255
      %v1445 = vpop.f32.mrb[0].mxu0
      %v1446 = vadd.f32 0.0, %v1445
      %v1447 = vpop.f32.mrb[0].mxu0
      %1448 = vmatprep.mubr.f32.mxu0 0.0
      %1449 = vmatmul.mubr.f32.gmra.mrb[0].mxu0 %v1258
      %v1450 = vpop.f32.mrb[0].mxu0
      %v1451 = vadd.f32 0.0, %v1450
      %v1452 = vpop.f32.mrb[0].mxu0
      %1453 = vmatprep.mubr.f32.mxu0 0.0
      %1454 = vmatmul.mubr.f32.gmra.mrb[0].mxu0 %v1261
      %v1455 = vpop.f32.mrb[0].mxu0
      %v1456 = vadd.f32 0.0, %v1455
      %v1457 = vpop.f32.mrb[0].mxu0
      %1458 = vmatprep.mubr.f32.mxu0 0.0
      %1459 = vmatmul.mubr.f32.gmra.mrb[0].mxu0 %v1264
      %v1460 = vpop.f32.mrb[0].mxu0
      %v1461 = vadd.f32 0.0, %v1460
      %v1462 = vpop.f32.mrb[0].mxu0
      %1463 = vmatprep.mubr.f32.mxu0 0.0
      %1464 = vmatmul.mubr.f32.gmra.mrb[0].mxu0 %v1267
      %v1465 = vpop.f32.mrb[0].mxu0
      %v1466 = vadd.f32 0.0, %v1465
      %v1467 = vpop.f32.mrb[0].mxu0
      %1468 = vmatprep.mubr.f32.mxu0 0.0
      %1469 = vmatmul.mubr.f32.gmra.mrb[0].mxu0 %v1270
      %v1470 = vpop.f32.mrb[0].mxu0
      %v1471 = vadd.f32 0.0, %v1470
      %v1472 = vpop.f32.mrb[0].mxu0
      %1473 = vmatprep.mubr.f32.mxu0 0.0
      %1474 = vmatmul.mubr.f32.gmra.mrb[0].mxu0 %v1273
      %v1475 = vpop.f32.mrb[0].mxu0
      %v1476 = vadd.f32 0.0, %v1475
      %v1477 = vpop.f32.mrb[0].mxu0
      %1478 = vmatprep.mubr.f32.mxu0 0.0
      %1479 = vmatmul.mubr.f32.gmra.mrb[0].mxu0 %v1276
      %v1480 = vpop.f32.mrb[0].mxu0
      %v1481 = vadd.f32 0.0, %v1480
      %v1482 = vpop.f32.mrb[0].mxu0
      %1483 = vmatprep.mubr.f32.mxu0 0.0
      %1484 = vmatmul.mubr.f32.gmra.mrb[0].mxu0 %v1279
      %v1485 = vpop.f32.mrb[0].mxu0
      %v1486 = vadd.f32 0.0, %v1485
      %v1487 = vpop.f32.mrb[0].mxu0
      %1488 = vmatprep.mubr.f32.mxu0 0.0
      %1489 = vmatmul.mubr.f32.gmra.mrb[0].mxu0 %v1282
      %v1490 = vpop.f32.mrb[0].mxu0
      %v1491 = vadd.f32 0.0, %v1490
      %v1492 = vpop.f32.mrb[0].mxu0
      %1493 = vmatprep.mubr.f32.mxu0 0.0
      %1494 = vmatmul.mubr.f32.gmra.mrb[0].mxu0 %v1285
      %v1495 = vpop.f32.mrb[0].mxu0
      %v1496 = vadd.f32 0.0, %v1495
      %v1497 = vpop.f32.mrb[0].mxu0
      %1498 = vmatprep.mubr.f32.mxu0 0.0
      %1499 = vmatmul.mubr.f32.gmra.mrb[0].mxu0 %v1288
      %v1500 = vpop.f32.mrb[0].mxu0
      %v1501 = vadd.f32 0.0, %v1500
      %v1502 = vpop.f32.mrb[0].mxu0
      %1503 = vmatprep.mubr.f32.mxu0 0.0
      %1504 = vmatmul.mubr.f32.gmra.mrb[0].mxu0 %v1291
      %v1505 = vpop.f32.mrb[0].mxu0
      %v1506 = vadd.f32 0.0, %v1505
      %v1507 = vpop.f32.mrb[0].mxu0
      %1508 = vmatprep.mubr.f32.mxu0 0.0
      %1509 = vmatmul.mubr.f32.gmra.mrb[0].mxu0 %v1294
      %v1510 = vpop.f32.mrb[0].mxu0
      %v1511 = vadd.f32 0.0, %v1510
      %v1512 = vpop.f32.mrb[0].mxu0
      %1513 = vmatprep.mubr.f32.mxu0 0.0
      %1514 = vmatmul.mubr.f32.gmra.mrb[0].mxu0 %v1297
      %v1515 = vpop.f32.mrb[0].mxu0
      %v1516 = vadd.f32 0.0, %v1515
      %v1517 = vpop.f32.mrb[0].mxu0
      %1518 = vmatprep.mubr.f32.mxu0 0.0
      %1519 = vmatmul.mubr.f32.gmra.mrb[0].mxu0 %v1300
      %v1520 = vpop.f32.mrb[0].mxu0
      %v1521 = vadd.f32 0.0, %v1520
      %v1522 = vpop.f32.mrb[0].mxu0
      %1523 = vmatprep.mubr.f32.mxu0 0.0
      %1524 = vmatmul.mubr.f32.gmra.mrb[0].mxu0 %v1303
      %v1525 = vpop.f32.mrb[0].mxu0
      %v1526 = vadd.f32 0.0, %v1525
      %v1527 = vpop.f32.mrb[0].mxu0
      %1528 = vmatprep.mubr.f32.mxu0 0.0
      %1529 = vmatmul.mubr.f32.gmra.mrb[0].mxu0 %v1306
      %v1530 = vpop.f32.mrb[0].mxu0
      %v1531 = vadd.f32 0.0, %v1530
      %v1532 = vpop.f32.mrb[0].mxu0
      %1533 = vmatprep.mubr.f32.mxu0 0.0
      %1534 = vmatmul.mubr.f32.gmra.mrb[0].mxu0 %v1309
      %v1535 = vpop.f32.mrb[0].mxu0
      %v1536 = vadd.f32 0.0, %v1535
      %v1537 = vpop.f32.mrb[0].mxu0
      %1538 = vdwg.mxu0
      %v1539 = vld [vmem:[#allocation4] sm:$0xff]
      %v1540 = vld [vmem:[#allocation4 + $0x8] sm:$0xff]
      %v1541 = vld [vmem:[#allocation4 + $0x10] sm:$0xff]
      %v1542 = vld [vmem:[#allocation4 + $0x18] sm:$0xff]
      %v1543 = vld [vmem:[#allocation4 + $0x20] sm:$0xff]
      %v1544 = vld [vmem:[#allocation4 + $0x28] sm:$0xff]
      %v1545 = vld [vmem:[#allocation4 + $0x30] sm:$0xff]
      %v1546 = vld [vmem:[#allocation4 + $0x38] sm:$0xff]
      %v1547 = vld [vmem:[#allocation4 + $0x40] sm:$0xff]
      %v1548 = vld [vmem:[#allocation4 + $0x48] sm:$0xff]
      %v1549 = vld [vmem:[#allocation4 + $0x50] sm:$0xff]
      %v1550 = vld [vmem:[#allocation4 + $0x58] sm:$0xff]
      %v1551 = vld [vmem:[#allocation4 + $0x60] sm:$0xff]
      %v1552 = vld [vmem:[#allocation4 + $0x68] sm:$0xff]
      %v1553 = vld [vmem:[#allocation4 + $0x70] sm:$0xff]
      %v1554 = vld [vmem:[#allocation4 + $0x78] sm:$0xff]
      %v1555 = vld [vmem:[#allocation4 + $0x80] sm:$0xff]
      %v1556 = vld [vmem:[#allocation4 + $0x88] sm:$0xff]
      %v1557 = vld [vmem:[#allocation4 + $0x90] sm:$0xff]
      %v1558 = vld [vmem:[#allocation4 + $0x98] sm:$0xff]
      %v1559 = vld [vmem:[#allocation4 + $0xa0] sm:$0xff]
      %v1560 = vld [vmem:[#allocation4 + $0xa8] sm:$0xff]
      %v1561 = vld [vmem:[#allocation4 + $0xb0] sm:$0xff]
      %v1562 = vld [vmem:[#allocation4 + $0xb8] sm:$0xff]
      %v1563 = vld [vmem:[#allocation4 + $0xc0] sm:$0xff]
      %v1564 = vld [vmem:[#allocation4 + $0xc8] sm:$0xff]
      %v1565 = vld [vmem:[#allocation4 + $0xd0] sm:$0xff]
      %v1566 = vld [vmem:[#allocation4 + $0xd8] sm:$0xff]
      %v1567 = vld [vmem:[#allocation4 + $0xe0] sm:$0xff]
      %v1568 = vld [vmem:[#allocation4 + $0xe8] sm:$0xff]
      %v1569 = vld [vmem:[#allocation4 + $0xf0] sm:$0xff]
      %v1570 = vld [vmem:[#allocation4 + $0xf8] sm:$0xff]
      %v1571 = vadd.f32 %v1539, %v1381
      %v1572 = vadd.f32 %v1540, %v1386
      %v1573 = vadd.f32 %v1541, %v1391
      %v1574 = vadd.f32 %v1542, %v1396
      %v1575 = vadd.f32 %v1543, %v1401
      %v1576 = vadd.f32 %v1544, %v1406
      %v1577 = vadd.f32 %v1545, %v1411
      %v1578 = vadd.f32 %v1546, %v1416
      %v1579 = vadd.f32 %v1547, %v1421
      %v1580 = vadd.f32 %v1548, %v1426
      %v1581 = vadd.f32 %v1549, %v1431
      %v1582 = vadd.f32 %v1550, %v1436
      %v1583 = vadd.f32 %v1551, %v1441
      %v1584 = vadd.f32 %v1552, %v1446
      %v1585 = vadd.f32 %v1553, %v1451
      %v1586 = vadd.f32 %v1554, %v1456
      %v1587 = vadd.f32 %v1555, %v1461
      %v1588 = vadd.f32 %v1556, %v1466
      %v1589 = vadd.f32 %v1557, %v1471
      %v1590 = vadd.f32 %v1558, %v1476
      %v1591 = vadd.f32 %v1559, %v1481
      %v1592 = vadd.f32 %v1560, %v1486
      %v1593 = vadd.f32 %v1561, %v1491
      %v1594 = vadd.f32 %v1562, %v1496
      %v1595 = vadd.f32 %v1563, %v1501
      %v1596 = vadd.f32 %v1564, %v1506
      %v1597 = vadd.f32 %v1565, %v1511
      %v1598 = vadd.f32 %v1566, %v1516
      %v1599 = vadd.f32 %v1567, %v1521
      %v1600 = vadd.f32 %v1568, %v1526
      %v1601 = vadd.f32 %v1569, %v1531
      %v1602 = vadd.f32 %v1570, %v1536
      %1603 = vst.msk [vmem:[#allocation4] sm:$0xff] %vm171, %v1571
      %1604 = vst.msk [vmem:[#allocation4 + $0x8] sm:$0xff] %vm171, %v1572
      %1605 = vst.msk [vmem:[#allocation4 + $0x10] sm:$0xff] %vm171, %v1573
      %1606 = vst.msk [vmem:[#allocation4 + $0x18] sm:$0xff] %vm171, %v1574
      %1607 = vst.msk [vmem:[#allocation4 + $0x20] sm:$0xff] %vm171, %v1575
      %1608 = vst.msk [vmem:[#allocation4 + $0x28] sm:$0xff] %vm171, %v1576
      %1609 = vst.msk [vmem:[#allocation4 + $0x30] sm:$0xff] %vm171, %v1577
      %1610 = vst.msk [vmem:[#allocation4 + $0x38] sm:$0xff] %vm171, %v1578
      %1611 = vst.msk [vmem:[#allocation4 + $0x40] sm:$0xff] %vm171, %v1579
      %1612 = vst.msk [vmem:[#allocation4 + $0x48] sm:$0xff] %vm171, %v1580
      %1613 = vst.msk [vmem:[#allocation4 + $0x50] sm:$0xff] %vm171, %v1581
      %1614 = vst.msk [vmem:[#allocation4 + $0x58] sm:$0xff] %vm171, %v1582
      %1615 = vst.msk [vmem:[#allocation4 + $0x60] sm:$0xff] %vm171, %v1583
      %1616 = vst.msk [vmem:[#allocation4 + $0x68] sm:$0xff] %vm171, %v1584
      %1617 = vst.msk [vmem:[#allocation4 + $0x70] sm:$0xff] %vm171, %v1585
      %1618 = vst.msk [vmem:[#allocation4 + $0x78] sm:$0xff] %vm171, %v1586
      %1619 = vst.msk [vmem:[#allocation4 + $0x80] sm:$0xff] %vm171, %v1587
      %1620 = vst.msk [vmem:[#allocation4 + $0x88] sm:$0xff] %vm171, %v1588
      %1621 = vst.msk [vmem:[#allocation4 + $0x90] sm:$0xff] %vm171, %v1589
      %1622 = vst.msk [vmem:[#allocation4 + $0x98] sm:$0xff] %vm171, %v1590
      %1623 = vst.msk [vmem:[#allocation4 + $0xa0] sm:$0xff] %vm171, %v1591
      %1624 = vst.msk [vmem:[#allocation4 + $0xa8] sm:$0xff] %vm171, %v1592
      %1625 = vst.msk [vmem:[#allocation4 + $0xb0] sm:$0xff] %vm171, %v1593
      %1626 = vst.msk [vmem:[#allocation4 + $0xb8] sm:$0xff] %vm171, %v1594
      %1627 = vst.msk [vmem:[#allocation4 + $0xc0] sm:$0xff] %vm171, %v1595
      %1628 = vst.msk [vmem:[#allocation4 + $0xc8] sm:$0xff] %vm171, %v1596
      %1629 = vst.msk [vmem:[#allocation4 + $0xd0] sm:$0xff] %vm171, %v1597
      %1630 = vst.msk [vmem:[#allocation4 + $0xd8] sm:$0xff] %vm171, %v1598
      %1631 = vst.msk [vmem:[#allocation4 + $0xe0] sm:$0xff] %vm171, %v1599
      %1632 = vst.msk [vmem:[#allocation4 + $0xe8] sm:$0xff] %vm171, %v1600
      %1633 = vst.msk [vmem:[#allocation4 + $0xf0] sm:$0xff] %vm171, %v1601
      %1634 = vst.msk [vmem:[#allocation4 + $0xf8] sm:$0xff] %vm171, %v1602
      %s1635 = scalar_lea.vmem [#allocation3], 32
      %v1636 = vld [vmem:[%s1635] sm:$0xff]
      %v1637 = vld [vmem:[%s1635 + $0x8] sm:$0xff]
      %v1638 = vld [vmem:[%s1635 + $0x10] sm:$0xff]
      %v1639 = vld [vmem:[%s1635 + $0x18] sm:$0xff]
      %v1640 = vld [vmem:[%s1635 + $0x20] sm:$0xff]
      %v1641 = vld [vmem:[%s1635 + $0x28] sm:$0xff]
      %v1642 = vld [vmem:[%s1635 + $0x30] sm:$0xff]
      %v1643 = vld [vmem:[%s1635 + $0x38] sm:$0xff]
      %v1644 = vld [vmem:[%s1635 + $0x40] sm:$0xff]
      %v1645 = vld [vmem:[%s1635 + $0x48] sm:$0xff]
      %v1646 = vld [vmem:[%s1635 + $0x50] sm:$0xff]
      %v1647 = vld [vmem:[%s1635 + $0x58] sm:$0xff]
      %v1648 = vld [vmem:[%s1635 + $0x60] sm:$0xff]
      %v1649 = vld [vmem:[%s1635 + $0x68] sm:$0xff]
      %v1650 = vld [vmem:[%s1635 + $0x70] sm:$0xff]
      %v1651 = vld [vmem:[%s1635 + $0x78] sm:$0xff]
      %v1652 = vld [vmem:[%s1635 + $0x80] sm:$0xff]
      %v1653 = vld [vmem:[%s1635 + $0x88] sm:$0xff]
      %v1654 = vld [vmem:[%s1635 + $0x90] sm:$0xff]
      %v1655 = vld [vmem:[%s1635 + $0x98] sm:$0xff]
      %v1656 = vld [vmem:[%s1635 + $0xa0] sm:$0xff]
      %v1657 = vld [vmem:[%s1635 + $0xa8] sm:$0xff]
      %v1658 = vld [vmem:[%s1635 + $0xb0] sm:$0xff]
      %v1659 = vld [vmem:[%s1635 + $0xb8] sm:$0xff]
      %v1660 = vld [vmem:[%s1635 + $0xc0] sm:$0xff]
      %v1661 = vld [vmem:[%s1635 + $0xc8] sm:$0xff]
      %v1662 = vld [vmem:[%s1635 + $0xd0] sm:$0xff]
      %v1663 = vld [vmem:[%s1635 + $0xd8] sm:$0xff]
      %v1664 = vld [vmem:[%s1635 + $0xe0] sm:$0xff]
      %v1665 = vld [vmem:[%s1635 + $0xe8] sm:$0xff]
      %v1666 = vld [vmem:[%s1635 + $0xf0] sm:$0xff]
      %v1667 = vld [vmem:[%s1635 + $0xf8] sm:$0xff]
      %s1668 = scalar_lea.vmem %s1, 32
      %v1669 = vld [vmem:[%s1668] sm:$0xff]
      %v1670 = vld [vmem:[%s1668 + $0x8] sm:$0xf]
      %v1672 = vsel %vm751, %v1636, 0
      %v1675 = vsel %vm751, %v1637, 0
      %v1678 = vsel %vm751, %v1638, 0
      %v1681 = vsel %vm751, %v1639, 0
      %v1684 = vsel %vm751, %v1640, 0
      %v1687 = vsel %vm751, %v1641, 0
      %v1690 = vsel %vm751, %v1642, 0
      %v1693 = vsel %vm751, %v1643, 0
      %v1696 = vsel %vm751, %v1644, 0
      %v1699 = vsel %vm751, %v1645, 0
      %v1702 = vsel %vm751, %v1646, 0
      %v1705 = vsel %vm751, %v1647, 0
      %v1708 = vsel %vm751, %v1648, 0
      %v1711 = vsel %vm751, %v1649, 0
      %v1714 = vsel %vm751, %v1650, 0
      %v1717 = vsel %vm751, %v1651, 0
      %v1720 = vsel %vm751, %v1652, 0
      %v1723 = vsel %vm751, %v1653, 0
      %v1726 = vsel %vm751, %v1654, 0
      %v1729 = vsel %vm751, %v1655, 0
      %v1732 = vsel %vm751, %v1656, 0
      %v1735 = vsel %vm751, %v1657, 0
      %v1738 = vsel %vm751, %v1658, 0
      %v1741 = vsel %vm751, %v1659, 0
      %v1744 = vsel %vm751, %v1660, 0
      %v1747 = vsel %vm751, %v1661, 0
      %v1750 = vsel %vm751, %v1662, 0
      %v1753 = vsel %vm751, %v1663, 0
      %v1756 = vsel %vm751, %v1664, 0
      %v1759 = vsel %vm751, %v1665, 0
      %v1762 = vsel %vm751, %v1666, 0
      %v1765 = vsel %vm751, %v1667, 0
      %v1768 = vsel %vm918, %v1670, 0
      %1770 = vmatprep.subr.mxu0 0.0
      %1771 = vmatpush1.msra.mxu0 %v1669
      %1772 = vmatprep.subr.mxu0 0.0
      %1773 = vmatpush1.msra.mxu0 %v1768
      %1774 = vmatprep.subr.mxu0 0.0
      %1775 = vmatpush1.msra.mxu0 0.0
      %1776 = vmatprep.subr.mxu0 0.0
      %1777 = vmatpush1.msra.mxu0 0.0
      %1778 = vmatprep.subr.mxu0 0.0
      %1779 = vmatpush1.msra.mxu0 0.0
      %1780 = vmatprep.subr.mxu0 0.0
      %1781 = vmatpush1.msra.mxu0 0.0
      %1782 = vmatprep.subr.mxu0 0.0
      %1783 = vmatpush1.msra.mxu0 0.0
      %1784 = vmatprep.subr.mxu0 0.0
      %1785 = vmatpush1.msra.mxu0 0.0
      %1786 = vmatprep.subr.mxu0 0.0
      %1787 = vmatpush1.msra.mxu0 0.0
      %1788 = vmatprep.subr.mxu0 0.0
      %1789 = vmatpush1.msra.mxu0 0.0
      %1790 = vmatprep.subr.mxu0 0.0
      %1791 = vmatpush1.msra.mxu0 0.0
      %1792 = vmatprep.subr.mxu0 0.0
      %1793 = vmatpush1.msra.mxu0 0.0
      %1794 = vmatprep.subr.mxu0 0.0
      %1795 = vmatpush1.msra.mxu0 0.0
      %1796 = vmatprep.subr.mxu0 0.0
      %1797 = vmatpush1.msra.mxu0 0.0
      %1798 = vmatprep.subr.mxu0 0.0
      %1799 = vmatpush1.msra.mxu0 0.0
      %1800 = vmatprep.subr.mxu0 0.0
      %1801 = vmatpush1.msra.mxu0 0.0
      %1802 = vmatprep.subr.mxu0 0.0
      %1803 = vmatpush1.msra.mxu0 0.0
      %1804 = vmatprep.subr.mxu0 0.0
      %1805 = vmatpush1.msra.mxu0 0.0
      %1806 = vmatprep.subr.mxu0 0.0
      %1807 = vmatpush1.msra.mxu0 0.0
      %1808 = vmatprep.subr.mxu0 0.0
      %1809 = vmatpush1.msra.mxu0 0.0
      %1810 = vmatprep.subr.mxu0 0.0
      %1811 = vmatpush1.msra.mxu0 0.0
      %1812 = vmatprep.subr.mxu0 0.0
      %1813 = vmatpush1.msra.mxu0 0.0
      %1814 = vmatprep.subr.mxu0 0.0
      %1815 = vmatpush1.msra.mxu0 0.0
      %1816 = vmatprep.subr.mxu0 0.0
      %1817 = vmatpush1.msra.mxu0 0.0
      %1818 = vmatprep.subr.mxu0 0.0
      %1819 = vmatpush1.msra.mxu0 0.0
      %1820 = vmatprep.subr.mxu0 0.0
      %1821 = vmatpush1.msra.mxu0 0.0
      %1822 = vmatprep.subr.mxu0 0.0
      %1823 = vmatpush1.msra.mxu0 0.0
      %1824 = vmatprep.subr.mxu0 0.0
      %1825 = vmatpush1.msra.mxu0 0.0
      %1826 = vmatprep.subr.mxu0 0.0
      %1827 = vmatpush1.msra.mxu0 0.0
      %1828 = vmatprep.subr.mxu0 0.0
      %1829 = vmatpush1.msra.mxu0 0.0
      %1830 = vmatprep.subr.mxu0 0.0
      %1831 = vmatpush1.msra.mxu0 0.0
      %1832 = vmatprep.subr.mxu0 0.0
      %1833 = vmatpush1.msra.mxu0 0.0
      %1834 = vmatprep.mubr.f32.mxu0 0.0
      %1835 = vmatmul.mubr.f32.gmra.mrb[0].mxu0 %v1672
      %v1836 = vpop.f32.mrb[0].mxu0
      %v1837 = vadd.f32 0.0, %v1836
      %v1838 = vpop.f32.mrb[0].mxu0
      %1839 = vmatprep.mubr.f32.mxu0 0.0
      %1840 = vmatmul.mubr.f32.gmra.mrb[0].mxu0 %v1675
      %v1841 = vpop.f32.mrb[0].mxu0
      %v1842 = vadd.f32 0.0, %v1841
      %v1843 = vpop.f32.mrb[0].mxu0
      %1844 = vmatprep.mubr.f32.mxu0 0.0
      %1845 = vmatmul.mubr.f32.gmra.mrb[0].mxu0 %v1678
      %v1846 = vpop.f32.mrb[0].mxu0
      %v1847 = vadd.f32 0.0, %v1846
      %v1848 = vpop.f32.mrb[0].mxu0
      %1849 = vmatprep.mubr.f32.mxu0 0.0
      %1850 = vmatmul.mubr.f32.gmra.mrb[0].mxu0 %v1681
      %v1851 = vpop.f32.mrb[0].mxu0
      %v1852 = vadd.f32 0.0, %v1851
      %v1853 = vpop.f32.mrb[0].mxu0
      %1854 = vmatprep.mubr.f32.mxu0 0.0
      %1855 = vmatmul.mubr.f32.gmra.mrb[0].mxu0 %v1684
      %v1856 = vpop.f32.mrb[0].mxu0
      %v1857 = vadd.f32 0.0, %v1856
      %v1858 = vpop.f32.mrb[0].mxu0
      %1859 = vmatprep.mubr.f32.mxu0 0.0
      %1860 = vmatmul.mubr.f32.gmra.mrb[0].mxu0 %v1687
      %v1861 = vpop.f32.mrb[0].mxu0
      %v1862 = vadd.f32 0.0, %v1861
      %v1863 = vpop.f32.mrb[0].mxu0
      %1864 = vmatprep.mubr.f32.mxu0 0.0
      %1865 = vmatmul.mubr.f32.gmra.mrb[0].mxu0 %v1690
      %v1866 = vpop.f32.mrb[0].mxu0
      %v1867 = vadd.f32 0.0, %v1866
      %v1868 = vpop.f32.mrb[0].mxu0
      %1869 = vmatprep.mubr.f32.mxu0 0.0
      %1870 = vmatmul.mubr.f32.gmra.mrb[0].mxu0 %v1693
      %v1871 = vpop.f32.mrb[0].mxu0
      %v1872 = vadd.f32 0.0, %v1871
      %v1873 = vpop.f32.mrb[0].mxu0
      %1874 = vmatprep.mubr.f32.mxu0 0.0
      %1875 = vmatmul.mubr.f32.gmra.mrb[0].mxu0 %v1696
      %v1876 = vpop.f32.mrb[0].mxu0
      %v1877 = vadd.f32 0.0, %v1876
      %v1878 = vpop.f32.mrb[0].mxu0
      %1879 = vmatprep.mubr.f32.mxu0 0.0
      %1880 = vmatmul.mubr.f32.gmra.mrb[0].mxu0 %v1699
      %v1881 = vpop.f32.mrb[0].mxu0
      %v1882 = vadd.f32 0.0, %v1881
      %v1883 = vpop.f32.mrb[0].mxu0
      %1884 = vmatprep.mubr.f32.mxu0 0.0
      %1885 = vmatmul.mubr.f32.gmra.mrb[0].mxu0 %v1702
      %v1886 = vpop.f32.mrb[0].mxu0
      %v1887 = vadd.f32 0.0, %v1886
      %v1888 = vpop.f32.mrb[0].mxu0
      %1889 = vmatprep.mubr.f32.mxu0 0.0
      %1890 = vmatmul.mubr.f32.gmra.mrb[0].mxu0 %v1705
      %v1891 = vpop.f32.mrb[0].mxu0
      %v1892 = vadd.f32 0.0, %v1891
      %v1893 = vpop.f32.mrb[0].mxu0
      %1894 = vmatprep.mubr.f32.mxu0 0.0
      %1895 = vmatmul.mubr.f32.gmra.mrb[0].mxu0 %v1708
      %v1896 = vpop.f32.mrb[0].mxu0
      %v1897 = vadd.f32 0.0, %v1896
      %v1898 = vpop.f32.mrb[0].mxu0
      %1899 = vmatprep.mubr.f32.mxu0 0.0
      %1900 = vmatmul.mubr.f32.gmra.mrb[0].mxu0 %v1711
      %v1901 = vpop.f32.mrb[0].mxu0
      %v1902 = vadd.f32 0.0, %v1901
      %v1903 = vpop.f32.mrb[0].mxu0
      %1904 = vmatprep.mubr.f32.mxu0 0.0
      %1905 = vmatmul.mubr.f32.gmra.mrb[0].mxu0 %v1714
      %v1906 = vpop.f32.mrb[0].mxu0
      %v1907 = vadd.f32 0.0, %v1906
      %v1908 = vpop.f32.mrb[0].mxu0
      %1909 = vmatprep.mubr.f32.mxu0 0.0
      %1910 = vmatmul.mubr.f32.gmra.mrb[0].mxu0 %v1717
      %v1911 = vpop.f32.mrb[0].mxu0
      %v1912 = vadd.f32 0.0, %v1911
      %v1913 = vpop.f32.mrb[0].mxu0
      %1914 = vmatprep.mubr.f32.mxu0 0.0
      %1915 = vmatmul.mubr.f32.gmra.mrb[0].mxu0 %v1720
      %v1916 = vpop.f32.mrb[0].mxu0
      %v1917 = vadd.f32 0.0, %v1916
      %v1918 = vpop.f32.mrb[0].mxu0
      %1919 = vmatprep.mubr.f32.mxu0 0.0
      %1920 = vmatmul.mubr.f32.gmra.mrb[0].mxu0 %v1723
      %v1921 = vpop.f32.mrb[0].mxu0
      %v1922 = vadd.f32 0.0, %v1921
      %v1923 = vpop.f32.mrb[0].mxu0
      %1924 = vmatprep.mubr.f32.mxu0 0.0
      %1925 = vmatmul.mubr.f32.gmra.mrb[0].mxu0 %v1726
      %v1926 = vpop.f32.mrb[0].mxu0
      %v1927 = vadd.f32 0.0, %v1926
      %v1928 = vpop.f32.mrb[0].mxu0
      %1929 = vmatprep.mubr.f32.mxu0 0.0
      %1930 = vmatmul.mubr.f32.gmra.mrb[0].mxu0 %v1729
      %v1931 = vpop.f32.mrb[0].mxu0
      %v1932 = vadd.f32 0.0, %v1931
      %v1933 = vpop.f32.mrb[0].mxu0
      %1934 = vmatprep.mubr.f32.mxu0 0.0
      %1935 = vmatmul.mubr.f32.gmra.mrb[0].mxu0 %v1732
      %v1936 = vpop.f32.mrb[0].mxu0
      %v1937 = vadd.f32 0.0, %v1936
      %v1938 = vpop.f32.mrb[0].mxu0
      %1939 = vmatprep.mubr.f32.mxu0 0.0
      %1940 = vmatmul.mubr.f32.gmra.mrb[0].mxu0 %v1735
      %v1941 = vpop.f32.mrb[0].mxu0
      %v1942 = vadd.f32 0.0, %v1941
      %v1943 = vpop.f32.mrb[0].mxu0
      %1944 = vmatprep.mubr.f32.mxu0 0.0
      %1945 = vmatmul.mubr.f32.gmra.mrb[0].mxu0 %v1738
      %v1946 = vpop.f32.mrb[0].mxu0
      %v1947 = vadd.f32 0.0, %v1946
      %v1948 = vpop.f32.mrb[0].mxu0
      %1949 = vmatprep.mubr.f32.mxu0 0.0
      %1950 = vmatmul.mubr.f32.gmra.mrb[0].mxu0 %v1741
      %v1951 = vpop.f32.mrb[0].mxu0
      %v1952 = vadd.f32 0.0, %v1951
      %v1953 = vpop.f32.mrb[0].mxu0
      %1954 = vmatprep.mubr.f32.mxu0 0.0
      %1955 = vmatmul.mubr.f32.gmra.mrb[0].mxu0 %v1744
      %v1956 = vpop.f32.mrb[0].mxu0
      %v1957 = vadd.f32 0.0, %v1956
      %v1958 = vpop.f32.mrb[0].mxu0
      %1959 = vmatprep.mubr.f32.mxu0 0.0
      %1960 = vmatmul.mubr.f32.gmra.mrb[0].mxu0 %v1747
      %v1961 = vpop.f32.mrb[0].mxu0
      %v1962 = vadd.f32 0.0, %v1961
      %v1963 = vpop.f32.mrb[0].mxu0
      %1964 = vmatprep.mubr.f32.mxu0 0.0
      %1965 = vmatmul.mubr.f32.gmra.mrb[0].mxu0 %v1750
      %v1966 = vpop.f32.mrb[0].mxu0
      %v1967 = vadd.f32 0.0, %v1966
      %v1968 = vpop.f32.mrb[0].mxu0
      %1969 = vmatprep.mubr.f32.mxu0 0.0
      %1970 = vmatmul.mubr.f32.gmra.mrb[0].mxu0 %v1753
      %v1971 = vpop.f32.mrb[0].mxu0
      %v1972 = vadd.f32 0.0, %v1971
      %v1973 = vpop.f32.mrb[0].mxu0
      %1974 = vmatprep.mubr.f32.mxu0 0.0
      %1975 = vmatmul.mubr.f32.gmra.mrb[0].mxu0 %v1756
      %v1976 = vpop.f32.mrb[0].mxu0
      %v1977 = vadd.f32 0.0, %v1976
      %v1978 = vpop.f32.mrb[0].mxu0
      %1979 = vmatprep.mubr.f32.mxu0 0.0
      %1980 = vmatmul.mubr.f32.gmra.mrb[0].mxu0 %v1759
      %v1981 = vpop.f32.mrb[0].mxu0
      %v1982 = vadd.f32 0.0, %v1981
      %v1983 = vpop.f32.mrb[0].mxu0
      %1984 = vmatprep.mubr.f32.mxu0 0.0
      %1985 = vmatmul.mubr.f32.gmra.mrb[0].mxu0 %v1762
      %v1986 = vpop.f32.mrb[0].mxu0
      %v1987 = vadd.f32 0.0, %v1986
      %v1988 = vpop.f32.mrb[0].mxu0
      %1989 = vmatprep.mubr.f32.mxu0 0.0
      %1990 = vmatmul.mubr.f32.gmra.mrb[0].mxu0 %v1765
      %v1991 = vpop.f32.mrb[0].mxu0
      %v1992 = vadd.f32 0.0, %v1991
      %v1993 = vpop.f32.mrb[0].mxu0
      %1994 = vdwg.mxu0
      %v1995 = vld [vmem:[#allocation4] sm:$0xff]
      %v1996 = vld [vmem:[#allocation4 + $0x8] sm:$0xff]
      %v1997 = vld [vmem:[#allocation4 + $0x10] sm:$0xff]
      %v1998 = vld [vmem:[#allocation4 + $0x18] sm:$0xff]
      %v1999 = vld [vmem:[#allocation4 + $0x20] sm:$0xff]
      %v2000 = vld [vmem:[#allocation4 + $0x28] sm:$0xff]
      %v2001 = vld [vmem:[#allocation4 + $0x30] sm:$0xff]
      %v2002 = vld [vmem:[#allocation4 + $0x38] sm:$0xff]
      %v2003 = vld [vmem:[#allocation4 + $0x40] sm:$0xff]
      %v2004 = vld [vmem:[#allocation4 + $0x48] sm:$0xff]
      %v2005 = vld [vmem:[#allocation4 + $0x50] sm:$0xff]
      %v2006 = vld [vmem:[#allocation4 + $0x58] sm:$0xff]
      %v2007 = vld [vmem:[#allocation4 + $0x60] sm:$0xff]
      %v2008 = vld [vmem:[#allocation4 + $0x68] sm:$0xff]
      %v2009 = vld [vmem:[#allocation4 + $0x70] sm:$0xff]
      %v2010 = vld [vmem:[#allocation4 + $0x78] sm:$0xff]
      %v2011 = vld [vmem:[#allocation4 + $0x80] sm:$0xff]
      %v2012 = vld [vmem:[#allocation4 + $0x88] sm:$0xff]
      %v2013 = vld [vmem:[#allocation4 + $0x90] sm:$0xff]
      %v2014 = vld [vmem:[#allocation4 + $0x98] sm:$0xff]
      %v2015 = vld [vmem:[#allocation4 + $0xa0] sm:$0xff]
      %v2016 = vld [vmem:[#allocation4 + $0xa8] sm:$0xff]
      %v2017 = vld [vmem:[#allocation4 + $0xb0] sm:$0xff]
      %v2018 = vld [vmem:[#allocation4 + $0xb8] sm:$0xff]
      %v2019 = vld [vmem:[#allocation4 + $0xc0] sm:$0xff]
      %v2020 = vld [vmem:[#allocation4 + $0xc8] sm:$0xff]
      %v2021 = vld [vmem:[#allocation4 + $0xd0] sm:$0xff]
      %v2022 = vld [vmem:[#allocation4 + $0xd8] sm:$0xff]
      %v2023 = vld [vmem:[#allocation4 + $0xe0] sm:$0xff]
      %v2024 = vld [vmem:[#allocation4 + $0xe8] sm:$0xff]
      %v2025 = vld [vmem:[#allocation4 + $0xf0] sm:$0xff]
      %v2026 = vld [vmem:[#allocation4 + $0xf8] sm:$0xff]
      %v2027 = vadd.f32 %v1995, %v1837
      %v2028 = vadd.f32 %v1996, %v1842
      %v2029 = vadd.f32 %v1997, %v1847
      %v2030 = vadd.f32 %v1998, %v1852
      %v2031 = vadd.f32 %v1999, %v1857
      %v2032 = vadd.f32 %v2000, %v1862
      %v2033 = vadd.f32 %v2001, %v1867
      %v2034 = vadd.f32 %v2002, %v1872
      %v2035 = vadd.f32 %v2003, %v1877
      %v2036 = vadd.f32 %v2004, %v1882
      %v2037 = vadd.f32 %v2005, %v1887
      %v2038 = vadd.f32 %v2006, %v1892
      %v2039 = vadd.f32 %v2007, %v1897
      %v2040 = vadd.f32 %v2008, %v1902
      %v2041 = vadd.f32 %v2009, %v1907
      %v2042 = vadd.f32 %v2010, %v1912
      %v2043 = vadd.f32 %v2011, %v1917
      %v2044 = vadd.f32 %v2012, %v1922
      %v2045 = vadd.f32 %v2013, %v1927
      %v2046 = vadd.f32 %v2014, %v1932
      %v2047 = vadd.f32 %v2015, %v1937
      %v2048 = vadd.f32 %v2016, %v1942
      %v2049 = vadd.f32 %v2017, %v1947
      %v2050 = vadd.f32 %v2018, %v1952
      %v2051 = vadd.f32 %v2019, %v1957
      %v2052 = vadd.f32 %v2020, %v1962
      %v2053 = vadd.f32 %v2021, %v1967
      %v2054 = vadd.f32 %v2022, %v1972
      %v2055 = vadd.f32 %v2023, %v1977
      %v2056 = vadd.f32 %v2024, %v1982
      %v2057 = vadd.f32 %v2025, %v1987
      %v2058 = vadd.f32 %v2026, %v1992
      %2059 = vst.msk [vmem:[#allocation4] sm:$0xff] %vm171, %v2027
      %2060 = vst.msk [vmem:[#allocation4 + $0x8] sm:$0xff] %vm171, %v2028
      %2061 = vst.msk [vmem:[#allocation4 + $0x10] sm:$0xff] %vm171, %v2029
      %2062 = vst.msk [vmem:[#allocation4 + $0x18] sm:$0xff] %vm171, %v2030
      %2063 = vst.msk [vmem:[#allocation4 + $0x20] sm:$0xff] %vm171, %v2031
      %2064 = vst.msk [vmem:[#allocation4 + $0x28] sm:$0xff] %vm171, %v2032
      %2065 = vst.msk [vmem:[#allocation4 + $0x30] sm:$0xff] %vm171, %v2033
      %2066 = vst.msk [vmem:[#allocation4 + $0x38] sm:$0xff] %vm171, %v2034
      %2067 = vst.msk [vmem:[#allocation4 + $0x40] sm:$0xff] %vm171, %v2035
      %2068 = vst.msk [vmem:[#allocation4 + $0x48] sm:$0xff] %vm171, %v2036
      %2069 = vst.msk [vmem:[#allocation4 + $0x50] sm:$0xff] %vm171, %v2037
      %2070 = vst.msk [vmem:[#allocation4 + $0x58] sm:$0xff] %vm171, %v2038
      %2071 = vst.msk [vmem:[#allocation4 + $0x60] sm:$0xff] %vm171, %v2039
      %2072 = vst.msk [vmem:[#allocation4 + $0x68] sm:$0xff] %vm171, %v2040
      %2073 = vst.msk [vmem:[#allocation4 + $0x70] sm:$0xff] %vm171, %v2041
      %2074 = vst.msk [vmem:[#allocation4 + $0x78] sm:$0xff] %vm171, %v2042
      %2075 = vst.msk [vmem:[#allocation4 + $0x80] sm:$0xff] %vm171, %v2043
      %2076 = vst.msk [vmem:[#allocation4 + $0x88] sm:$0xff] %vm171, %v2044
      %2077 = vst.msk [vmem:[#allocation4 + $0x90] sm:$0xff] %vm171, %v2045
      %2078 = vst.msk [vmem:[#allocation4 + $0x98] sm:$0xff] %vm171, %v2046
      %2079 = vst.msk [vmem:[#allocation4 + $0xa0] sm:$0xff] %vm171, %v2047
      %2080 = vst.msk [vmem:[#allocation4 + $0xa8] sm:$0xff] %vm171, %v2048
      %2081 = vst.msk [vmem:[#allocation4 + $0xb0] sm:$0xff] %vm171, %v2049
      %2082 = vst.msk [vmem:[#allocation4 + $0xb8] sm:$0xff] %vm171, %v2050
      %2083 = vst.msk [vmem:[#allocation4 + $0xc0] sm:$0xff] %vm171, %v2051
      %2084 = vst.msk [vmem:[#allocation4 + $0xc8] sm:$0xff] %vm171, %v2052
      %2085 = vst.msk [vmem:[#allocation4 + $0xd0] sm:$0xff] %vm171, %v2053
      %2086 = vst.msk [vmem:[#allocation4 + $0xd8] sm:$0xff] %vm171, %v2054
      %2087 = vst.msk [vmem:[#allocation4 + $0xe0] sm:$0xff] %vm171, %v2055
      %2088 = vst.msk [vmem:[#allocation4 + $0xe8] sm:$0xff] %vm171, %v2056
      %2089 = vst.msk [vmem:[#allocation4 + $0xf0] sm:$0xff] %vm171, %v2057
      %2090 = vst.msk [vmem:[#allocation4 + $0xf8] sm:$0xff] %vm171, %v2058
      %v2091 = vld [vmem:[#allocation4] sm:$0xff]
      %v2092 = vld [vmem:[#allocation4 + $0x8] sm:$0xff]
      %v2093 = vld [vmem:[#allocation4 + $0x10] sm:$0xff]
      %v2094 = vld [vmem:[#allocation4 + $0x18] sm:$0xff]
      %v2095 = vld [vmem:[#allocation4 + $0x20] sm:$0xff]
      %v2096 = vld [vmem:[#allocation4 + $0x28] sm:$0xff]
      %v2097 = vld [vmem:[#allocation4 + $0x30] sm:$0xff]
      %v2098 = vld [vmem:[#allocation4 + $0x38] sm:$0xff]
      %v2099 = vld [vmem:[#allocation4 + $0x40] sm:$0xff]
      %v2100 = vld [vmem:[#allocation4 + $0x48] sm:$0xff]
      %v2101 = vld [vmem:[#allocation4 + $0x50] sm:$0xff]
      %v2102 = vld [vmem:[#allocation4 + $0x58] sm:$0xff]
      %v2103 = vld [vmem:[#allocation4 + $0x60] sm:$0xff]
      %v2104 = vld [vmem:[#allocation4 + $0x68] sm:$0xff]
      %v2105 = vld [vmem:[#allocation4 + $0x70] sm:$0xff]
      %v2106 = vld [vmem:[#allocation4 + $0x78] sm:$0xff]
      %v2107 = vld [vmem:[#allocation4 + $0x80] sm:$0xff]
      %v2108 = vld [vmem:[#allocation4 + $0x88] sm:$0xff]
      %v2109 = vld [vmem:[#allocation4 + $0x90] sm:$0xff]
      %v2110 = vld [vmem:[#allocation4 + $0x98] sm:$0xff]
      %v2111 = vld [vmem:[#allocation4 + $0xa0] sm:$0xff]
      %v2112 = vld [vmem:[#allocation4 + $0xa8] sm:$0xff]
      %v2113 = vld [vmem:[#allocation4 + $0xb0] sm:$0xff]
      %v2114 = vld [vmem:[#allocation4 + $0xb8] sm:$0xff]
      %v2115 = vld [vmem:[#allocation4 + $0xc0] sm:$0xff]
      %v2116 = vld [vmem:[#allocation4 + $0xc8] sm:$0xff]
      %v2117 = vld [vmem:[#allocation4 + $0xd0] sm:$0xff]
      %v2118 = vld [vmem:[#allocation4 + $0xd8] sm:$0xff]
      %v2119 = vld [vmem:[#allocation4 + $0xe0] sm:$0xff]
      %v2120 = vld [vmem:[#allocation4 + $0xe8] sm:$0xff]
      %v2121 = vld [vmem:[#allocation4 + $0xf0] sm:$0xff]
      %v2122 = vld [vmem:[#allocation4 + $0xf8] sm:$0xff]
      %v2123 = vsel %vm171, %v2091, 0.0
      %v2124 = vsel %vm171, %v2092, 0.0
      %v2125 = vadd.f32 %v2123, %v2124
      %v2126 = vsel %vm171, %v2093, 0.0
      %v2127 = vadd.f32 %v2125, %v2126
      %v2128 = vsel %vm171, %v2094, 0.0
      %v2129 = vadd.f32 %v2127, %v2128
      %v2130 = vsel %vm171, %v2095, 0.0
      %v2131 = vadd.f32 %v2129, %v2130
      %v2132 = vsel %vm171, %v2096, 0.0
      %v2133 = vadd.f32 %v2131, %v2132
      %v2134 = vsel %vm171, %v2097, 0.0
      %v2135 = vadd.f32 %v2133, %v2134
      %v2136 = vsel %vm171, %v2098, 0.0
      %v2137 = vadd.f32 %v2135, %v2136
      %v2138 = vsel %vm171, %v2099, 0.0
      %v2139 = vadd.f32 %v2137, %v2138
      %v2140 = vsel %vm171, %v2100, 0.0
      %v2141 = vadd.f32 %v2139, %v2140
      %v2142 = vsel %vm171, %v2101, 0.0
      %v2143 = vadd.f32 %v2141, %v2142
      %v2144 = vsel %vm171, %v2102, 0.0
      %v2145 = vadd.f32 %v2143, %v2144
      %v2146 = vsel %vm171, %v2103, 0.0
      %v2147 = vadd.f32 %v2145, %v2146
      %v2148 = vsel %vm171, %v2104, 0.0
      %v2149 = vadd.f32 %v2147, %v2148
      %v2150 = vsel %vm171, %v2105, 0.0
      %v2151 = vadd.f32 %v2149, %v2150
      %v2152 = vsel %vm171, %v2106, 0.0
      %v2153 = vadd.f32 %v2151, %v2152
      %v2154 = vsel %vm171, %v2107, 0.0
      %v2155 = vadd.f32 %v2153, %v2154
      %v2156 = vsel %vm171, %v2108, 0.0
      %v2157 = vadd.f32 %v2155, %v2156
      %v2158 = vsel %vm171, %v2109, 0.0
      %v2159 = vadd.f32 %v2157, %v2158
      %v2160 = vsel %vm171, %v2110, 0.0
      %v2161 = vadd.f32 %v2159, %v2160
      %v2162 = vsel %vm171, %v2111, 0.0
      %v2163 = vadd.f32 %v2161, %v2162
      %v2164 = vsel %vm171, %v2112, 0.0
      %v2165 = vadd.f32 %v2163, %v2164
      %v2166 = vsel %vm171, %v2113, 0.0
      %v2167 = vadd.f32 %v2165, %v2166
      %v2168 = vsel %vm171, %v2114, 0.0
      %v2169 = vadd.f32 %v2167, %v2168
      %v2170 = vsel %vm171, %v2115, 0.0
      %v2171 = vadd.f32 %v2169, %v2170
      %v2172 = vsel %vm171, %v2116, 0.0
      %v2173 = vadd.f32 %v2171, %v2172
      %v2174 = vsel %vm171, %v2117, 0.0
      %v2175 = vadd.f32 %v2173, %v2174
      %v2176 = vsel %vm171, %v2118, 0.0
      %v2177 = vadd.f32 %v2175, %v2176
      %v2178 = vsel %vm171, %v2119, 0.0
      %v2179 = vadd.f32 %v2177, %v2178
      %v2180 = vsel %vm171, %v2120, 0.0
      %v2181 = vadd.f32 %v2179, %v2180
      %v2182 = vsel %vm171, %v2121, 0.0
      %v2183 = vadd.f32 %v2181, %v2182
      %v2184 = vsel %vm171, %v2122, 0.0
      %v2185 = vadd.f32 %v2183, %v2184
      %v2186 = vrot.slane %v2185, 4
      %v2187 = vadd.f32 %v2185, %v2186
      %v2188 = vrot.slane %v2187, 2
      %v2189 = vadd.f32 %v2187, %v2188
      %v2190 = vrot.slane %v2189, 1
      %v2191 = vadd.f32 %v2189, %v2190
      %v2192 = vmul.f32 %v2091, %v2091
      %v2193 = vmul.f32 %v2092, %v2092
      %v2194 = vmul.f32 %v2093, %v2093
      %v2195 = vmul.f32 %v2094, %v2094
      %v2196 = vmul.f32 %v2095, %v2095
      %v2197 = vmul.f32 %v2096, %v2096
      %v2198 = vmul.f32 %v2097, %v2097
      %v2199 = vmul.f32 %v2098, %v2098
      %v2200 = vmul.f32 %v2099, %v2099
      %v2201 = vmul.f32 %v2100, %v2100
      %v2202 = vmul.f32 %v2101, %v2101
      %v2203 = vmul.f32 %v2102, %v2102
      %v2204 = vmul.f32 %v2103, %v2103
      %v2205 = vmul.f32 %v2104, %v2104
      %v2206 = vmul.f32 %v2105, %v2105
      %v2207 = vmul.f32 %v2106, %v2106
      %v2208 = vmul.f32 %v2107, %v2107
      %v2209 = vmul.f32 %v2108, %v2108
      %v2210 = vmul.f32 %v2109, %v2109
      %v2211 = vmul.f32 %v2110, %v2110
      %v2212 = vmul.f32 %v2111, %v2111
      %v2213 = vmul.f32 %v2112, %v2112
      %v2214 = vmul.f32 %v2113, %v2113
      %v2215 = vmul.f32 %v2114, %v2114
      %v2216 = vmul.f32 %v2115, %v2115
      %v2217 = vmul.f32 %v2116, %v2116
      %v2218 = vmul.f32 %v2117, %v2117
      %v2219 = vmul.f32 %v2118, %v2118
      %v2220 = vmul.f32 %v2119, %v2119
      %v2221 = vmul.f32 %v2120, %v2120
      %v2222 = vmul.f32 %v2121, %v2121
      %v2223 = vmul.f32 %v2122, %v2122
      %v2224 = vsel %vm171, %v2192, 0.0
      %v2225 = vsel %vm171, %v2193, 0.0
      %v2226 = vadd.f32 %v2224, %v2225
      %v2227 = vsel %vm171, %v2194, 0.0
      %v2228 = vadd.f32 %v2226, %v2227
      %v2229 = vsel %vm171, %v2195, 0.0
      %v2230 = vadd.f32 %v2228, %v2229
      %v2231 = vsel %vm171, %v2196, 0.0
      %v2232 = vadd.f32 %v2230, %v2231
      %v2233 = vsel %vm171, %v2197, 0.0
      %v2234 = vadd.f32 %v2232, %v2233
      %v2235 = vsel %vm171, %v2198, 0.0
      %v2236 = vadd.f32 %v2234, %v2235
      %v2237 = vsel %vm171, %v2199, 0.0
      %v2238 = vadd.f32 %v2236, %v2237
      %v2239 = vsel %vm171, %v2200, 0.0
      %v2240 = vadd.f32 %v2238, %v2239
      %v2241 = vsel %vm171, %v2201, 0.0
      %v2242 = vadd.f32 %v2240, %v2241
      %v2243 = vsel %vm171, %v2202, 0.0
      %v2244 = vadd.f32 %v2242, %v2243
      %v2245 = vsel %vm171, %v2203, 0.0
      %v2246 = vadd.f32 %v2244, %v2245
      %v2247 = vsel %vm171, %v2204, 0.0
      %v2248 = vadd.f32 %v2246, %v2247
      %v2249 = vsel %vm171, %v2205, 0.0
      %v2250 = vadd.f32 %v2248, %v2249
      %v2251 = vsel %vm171, %v2206, 0.0
      %v2252 = vadd.f32 %v2250, %v2251
      %v2253 = vsel %vm171, %v2207, 0.0
      %v2254 = vadd.f32 %v2252, %v2253
      %v2255 = vsel %vm171, %v2208, 0.0
      %v2256 = vadd.f32 %v2254, %v2255
      %v2257 = vsel %vm171, %v2209, 0.0
      %v2258 = vadd.f32 %v2256, %v2257
      %v2259 = vsel %vm171, %v2210, 0.0
      %v2260 = vadd.f32 %v2258, %v2259
      %v2261 = vsel %vm171, %v2211, 0.0
      %v2262 = vadd.f32 %v2260, %v2261
      %v2263 = vsel %vm171, %v2212, 0.0
      %v2264 = vadd.f32 %v2262, %v2263
      %v2265 = vsel %vm171, %v2213, 0.0
      %v2266 = vadd.f32 %v2264, %v2265
      %v2267 = vsel %vm171, %v2214, 0.0
      %v2268 = vadd.f32 %v2266, %v2267
      %v2269 = vsel %vm171, %v2215, 0.0
      %v2270 = vadd.f32 %v2268, %v2269
      %v2271 = vsel %vm171, %v2216, 0.0
      %v2272 = vadd.f32 %v2270, %v2271
      %v2273 = vsel %vm171, %v2217, 0.0
      %v2274 = vadd.f32 %v2272, %v2273
      %v2275 = vsel %vm171, %v2218, 0.0
      %v2276 = vadd.f32 %v2274, %v2275
      %v2277 = vsel %vm171, %v2219, 0.0
      %v2278 = vadd.f32 %v2276, %v2277
      %v2279 = vsel %vm171, %v2220, 0.0
      %v2280 = vadd.f32 %v2278, %v2279
      %v2281 = vsel %vm171, %v2221, 0.0
      %v2282 = vadd.f32 %v2280, %v2281
      %v2283 = vsel %vm171, %v2222, 0.0
      %v2284 = vadd.f32 %v2282, %v2283
      %v2285 = vsel %vm171, %v2223, 0.0
      %v2286 = vadd.f32 %v2284, %v2285
      %v2287 = vrot.slane %v2286, 4
      %v2288 = vadd.f32 %v2286, %v2287
      %v2289 = vrot.slane %v2288, 2
      %v2290 = vadd.f32 %v2288, %v2289
      %v2291 = vrot.slane %v2290, 1
      %v2292 = vadd.f32 %v2290, %v2291
      %v2293 = vmul.f32 %v2191, 0.00390625
      %v2294 = vmul.f32 %v2292, 0.00390625
      %v2295 = vmul.f32 %v2293, %v2293
      %v2296 = vsub.f32 %v2294, %v2295
      %v2297 = vsub.f32 %v2091, %v2293
      %v2298 = vsub.f32 %v2092, %v2293
      %v2299 = vsub.f32 %v2093, %v2293
      %v2300 = vsub.f32 %v2094, %v2293
      %v2301 = vsub.f32 %v2095, %v2293
      %v2302 = vsub.f32 %v2096, %v2293
      %v2303 = vsub.f32 %v2097, %v2293
      %v2304 = vsub.f32 %v2098, %v2293
      %v2305 = vsub.f32 %v2099, %v2293
      %v2306 = vsub.f32 %v2100, %v2293
      %v2307 = vsub.f32 %v2101, %v2293
      %v2308 = vsub.f32 %v2102, %v2293
      %v2309 = vsub.f32 %v2103, %v2293
      %v2310 = vsub.f32 %v2104, %v2293
      %v2311 = vsub.f32 %v2105, %v2293
      %v2312 = vsub.f32 %v2106, %v2293
      %v2313 = vsub.f32 %v2107, %v2293
      %v2314 = vsub.f32 %v2108, %v2293
      %v2315 = vsub.f32 %v2109, %v2293
      %v2316 = vsub.f32 %v2110, %v2293
      %v2317 = vsub.f32 %v2111, %v2293
      %v2318 = vsub.f32 %v2112, %v2293
      %v2319 = vsub.f32 %v2113, %v2293
      %v2320 = vsub.f32 %v2114, %v2293
      %v2321 = vsub.f32 %v2115, %v2293
      %v2322 = vsub.f32 %v2116, %v2293
      %v2323 = vsub.f32 %v2117, %v2293
      %v2324 = vsub.f32 %v2118, %v2293
      %v2325 = vsub.f32 %v2119, %v2293
      %v2326 = vsub.f32 %v2120, %v2293
      %v2327 = vsub.f32 %v2121, %v2293
      %v2328 = vsub.f32 %v2122, %v2293
      %v2329 = vadd.f32 %v2296, 1e-05
      %v2330 = vrsqrt.pop %v2329
      %v2331 = vmul.f32 %v2297, %v2330
      %v2332 = vmul.f32 %v2298, %v2330
      %v2333 = vmul.f32 %v2299, %v2330
      %v2334 = vmul.f32 %v2300, %v2330
      %v2335 = vmul.f32 %v2301, %v2330
      %v2336 = vmul.f32 %v2302, %v2330
      %v2337 = vmul.f32 %v2303, %v2330
      %v2338 = vmul.f32 %v2304, %v2330
      %v2339 = vmul.f32 %v2305, %v2330
      %v2340 = vmul.f32 %v2306, %v2330
      %v2341 = vmul.f32 %v2307, %v2330
      %v2342 = vmul.f32 %v2308, %v2330
      %v2343 = vmul.f32 %v2309, %v2330
      %v2344 = vmul.f32 %v2310, %v2330
      %v2345 = vmul.f32 %v2311, %v2330
      %v2346 = vmul.f32 %v2312, %v2330
      %v2347 = vmul.f32 %v2313, %v2330
      %v2348 = vmul.f32 %v2314, %v2330
      %v2349 = vmul.f32 %v2315, %v2330
      %v2350 = vmul.f32 %v2316, %v2330
      %v2351 = vmul.f32 %v2317, %v2330
      %v2352 = vmul.f32 %v2318, %v2330
      %v2353 = vmul.f32 %v2319, %v2330
      %v2354 = vmul.f32 %v2320, %v2330
      %v2355 = vmul.f32 %v2321, %v2330
      %v2356 = vmul.f32 %v2322, %v2330
      %v2357 = vmul.f32 %v2323, %v2330
      %v2358 = vmul.f32 %v2324, %v2330
      %v2359 = vmul.f32 %v2325, %v2330
      %v2360 = vmul.f32 %v2326, %v2330
      %v2361 = vmul.f32 %v2327, %v2330
      %v2362 = vmul.f32 %v2328, %v2330
      %v2363 = vmax.f32 %v2331, 0.0
      %v2364 = vmax.f32 %v2332, 0.0
      %v2365 = vmax.f32 %v2333, 0.0
      %v2366 = vmax.f32 %v2334, 0.0
      %v2367 = vmax.f32 %v2335, 0.0
      %v2368 = vmax.f32 %v2336, 0.0
      %v2369 = vmax.f32 %v2337, 0.0
      %v2370 = vmax.f32 %v2338, 0.0
      %v2371 = vmax.f32 %v2339, 0.0
      %v2372 = vmax.f32 %v2340, 0.0
      %v2373 = vmax.f32 %v2341, 0.0
      %v2374 = vmax.f32 %v2342, 0.0
      %v2375 = vmax.f32 %v2343, 0.0
      %v2376 = vmax.f32 %v2344, 0.0
      %v2377 = vmax.f32 %v2345, 0.0
      %v2378 = vmax.f32 %v2346, 0.0
      %v2379 = vmax.f32 %v2347, 0.0
      %v2380 = vmax.f32 %v2348, 0.0
      %v2381 = vmax.f32 %v2349, 0.0
      %v2382 = vmax.f32 %v2350, 0.0
      %v2383 = vmax.f32 %v2351, 0.0
      %v2384 = vmax.f32 %v2352, 0.0
      %v2385 = vmax.f32 %v2353, 0.0
      %v2386 = vmax.f32 %v2354, 0.0
      %v2387 = vmax.f32 %v2355, 0.0
      %v2388 = vmax.f32 %v2356, 0.0
      %v2389 = vmax.f32 %v2357, 0.0
      %v2390 = vmax.f32 %v2358, 0.0
      %v2391 = vmax.f32 %v2359, 0.0
      %v2392 = vmax.f32 %v2360, 0.0
      %v2393 = vmax.f32 %v2361, 0.0
      %v2394 = vmax.f32 %v2362, 0.0
      %2395 = vst.msk [vmem:[%s249 + $0x8] sm:$0xff] %vm171, %v2363
      %2396 = vst.msk [vmem:[%s249 + $0x10] sm:$0xff] %vm171, %v2364
      %2397 = vst.msk [vmem:[%s249 + $0x28] sm:$0xff] %vm171, %v2365
      %2398 = vst.msk [vmem:[%s249 + $0x30] sm:$0xff] %vm171, %v2366
      %2399 = vst.msk [vmem:[%s249 + $0x48] sm:$0xff] %vm171, %v2367
      %2400 = vst.msk [vmem:[%s249 + $0x50] sm:$0xff] %vm171, %v2368
      %2401 = vst.msk [vmem:[%s249 + $0x68] sm:$0xff] %vm171, %v2369
      %2402 = vst.msk [vmem:[%s249 + $0x70] sm:$0xff] %vm171, %v2370
      %2403 = vst.msk [vmem:[%s249 + $0x88] sm:$0xff] %vm171, %v2371
      %2404 = vst.msk [vmem:[%s249 + $0x90] sm:$0xff] %vm171, %v2372
      %2405 = vst.msk [vmem:[%s249 + $0xa8] sm:$0xff] %vm171, %v2373
      %2406 = vst.msk [vmem:[%s249 + $0xb0] sm:$0xff] %vm171, %v2374
      %2407 = vst.msk [vmem:[%s249 + $0xc8] sm:$0xff] %vm171, %v2375
      %2408 = vst.msk [vmem:[%s249 + $0xd0] sm:$0xff] %vm171, %v2376
      %2409 = vst.msk [vmem:[%s249 + $0xe8] sm:$0xff] %vm171, %v2377
      %2410 = vst.msk [vmem:[%s249 + $0xf0] sm:$0xff] %vm171, %v2378
      %2411 = vst.msk [vmem:[%s249 + $0x108] sm:$0xff] %vm171, %v2379
      %2412 = vst.msk [vmem:[%s249 + $0x110] sm:$0xff] %vm171, %v2380
      %2413 = vst.msk [vmem:[%s249 + $0x128] sm:$0xff] %vm171, %v2381
      %2414 = vst.msk [vmem:[%s249 + $0x130] sm:$0xff] %vm171, %v2382
      %2415 = vst.msk [vmem:[%s249 + $0x148] sm:$0xff] %vm171, %v2383
      %2416 = vst.msk [vmem:[%s249 + $0x150] sm:$0xff] %vm171, %v2384
      %2417 = vst.msk [vmem:[%s249 + $0x168] sm:$0xff] %vm171, %v2385
      %2418 = vst.msk [vmem:[%s249 + $0x170] sm:$0xff] %vm171, %v2386
      %2419 = vst.msk [vmem:[%s249 + $0x188] sm:$0xff] %vm171, %v2387
      %2420 = vst.msk [vmem:[%s249 + $0x190] sm:$0xff] %vm171, %v2388
      %2421 = vst.msk [vmem:[%s249 + $0x1a8] sm:$0xff] %vm171, %v2389
      %2422 = vst.msk [vmem:[%s249 + $0x1b0] sm:$0xff] %vm171, %v2390
      %2423 = vst.msk [vmem:[%s249 + $0x1c8] sm:$0xff] %vm171, %v2391
      %2424 = vst.msk [vmem:[%s249 + $0x1d0] sm:$0xff] %vm171, %v2392
      %2425 = vst.msk [vmem:[%s249 + $0x1e8] sm:$0xff] %vm171, %v2393
      %2426 = vst.msk [vmem:[%s249 + $0x1f0] sm:$0xff] %vm171, %v2394
      %v2427 = vld [vmem:[#allocation2 + $0x7] sm:$0xff]
      %v2428 = vld [vmem:[#allocation2 + $0xf] sm:$0xff]
      %v2429 = vld [vmem:[#allocation2 + $0x27] sm:$0xff]
      %v2430 = vld [vmem:[#allocation2 + $0x2f] sm:$0xff]
      %v2431 = vld [vmem:[#allocation2 + $0x47] sm:$0xff]
      %v2432 = vld [vmem:[#allocation2 + $0x4f] sm:$0xff]
      %v2433 = vld [vmem:[#allocation2 + $0x67] sm:$0xff]
      %v2434 = vld [vmem:[#allocation2 + $0x6f] sm:$0xff]
      %v2435 = vld [vmem:[#allocation2 + $0x87] sm:$0xff]
      %v2436 = vld [vmem:[#allocation2 + $0x8f] sm:$0xff]
      %v2437 = vld [vmem:[#allocation2 + $0xa7] sm:$0xff]
      %v2438 = vld [vmem:[#allocation2 + $0xaf] sm:$0xff]
      %v2439 = vld [vmem:[#allocation2 + $0xc7] sm:$0xff]
      %v2440 = vld [vmem:[#allocation2 + $0xcf] sm:$0xff]
      %v2441 = vld [vmem:[#allocation2 + $0xe7] sm:$0xff]
      %v2442 = vld [vmem:[#allocation2 + $0xef] sm:$0xff]
      %v2443 = vld [vmem:[#allocation2 + $0x107] sm:$0xff]
      %v2444 = vld [vmem:[#allocation2 + $0x10f] sm:$0xff]
      %v2445 = vld [vmem:[#allocation2 + $0x127] sm:$0xff]
      %v2446 = vld [vmem:[#allocation2 + $0x12f] sm:$0xff]
      %v2447 = vld [vmem:[#allocation2 + $0x147] sm:$0xff]
      %v2448 = vld [vmem:[#allocation2 + $0x14f] sm:$0xff]
      %v2449 = vld [vmem:[#allocation2 + $0x167] sm:$0xff]
      %v2450 = vld [vmem:[#allocation2 + $0x16f] sm:$0xff]
      %v2451 = vld [vmem:[#allocation2 + $0x187] sm:$0xff]
      %v2452 = vld [vmem:[#allocation2 + $0x18f] sm:$0xff]
      %v2453 = vld [vmem:[#allocation2 + $0x1a7] sm:$0xff]
      %v2454 = vld [vmem:[#allocation2 + $0x1af] sm:$0xff]
      %v2455 = vld [vmem:[#allocation2 + $0x1c7] sm:$0xff]
      %v2456 = vld [vmem:[#allocation2 + $0x1cf] sm:$0xff]
      %v2457 = vld [vmem:[#allocation2 + $0x1e7] sm:$0xff]
      %v2458 = vld [vmem:[#allocation2 + $0x1ef] sm:$0xff]
      %v2459 = vld [vmem:[#allocation2 + $0x207] sm:$0xff]
      %v2460 = vld [vmem:[#allocation2 + $0x20f] sm:$0xff]
      %v2461 = vld [vmem:[#allocation2 + $0x227] sm:$0xff]
      %v2462 = vld [vmem:[#allocation2 + $0x22f] sm:$0xff]
      %v2463 = vld [vmem:[#allocation2 + $0x8] sm:$0xff]
      %v2464 = vld [vmem:[#allocation2 + $0x10] sm:$0xff]
      %v2465 = vld [vmem:[#allocation2 + $0x28] sm:$0xff]
      %v2466 = vld [vmem:[#allocation2 + $0x30] sm:$0xff]
      %v2467 = vld [vmem:[#allocation2 + $0x48] sm:$0xff]
      %v2468 = vld [vmem:[#allocation2 + $0x50] sm:$0xff]
      %v2469 = vld [vmem:[#allocation2 + $0x68] sm:$0xff]
      %v2470 = vld [vmem:[#allocation2 + $0x70] sm:$0xff]
      %v2471 = vld [vmem:[#allocation2 + $0x88] sm:$0xff]
      %v2472 = vld [vmem:[#allocation2 + $0x90] sm:$0xff]
      %v2473 = vld [vmem:[#allocation2 + $0xa8] sm:$0xff]
      %v2474 = vld [vmem:[#allocation2 + $0xb0] sm:$0xff]
      %v2475 = vld [vmem:[#allocation2 + $0xc8] sm:$0xff]
      %v2476 = vld [vmem:[#allocation2 + $0xd0] sm:$0xff]
      %v2477 = vld [vmem:[#allocation2 + $0xe8] sm:$0xff]
      %v2478 = vld [vmem:[#allocation2 + $0xf0] sm:$0xff]
      %v2479 = vld [vmem:[#allocation2 + $0x108] sm:$0xff]
      %v2480 = vld [vmem:[#allocation2 + $0x110] sm:$0xff]
      %v2481 = vld [vmem:[#allocation2 + $0x128] sm:$0xff]
      %v2482 = vld [vmem:[#allocation2 + $0x130] sm:$0xff]
      %v2483 = vld [vmem:[#allocation2 + $0x148] sm:$0xff]
      %v2484 = vld [vmem:[#allocation2 + $0x150] sm:$0xff]
      %v2485 = vld [vmem:[#allocation2 + $0x168] sm:$0xff]
      %v2486 = vld [vmem:[#allocation2 + $0x170] sm:$0xff]
      %v2487 = vld [vmem:[#allocation2 + $0x188] sm:$0xff]
      %v2488 = vld [vmem:[#allocation2 + $0x190] sm:$0xff]
      %v2489 = vld [vmem:[#allocation2 + $0x1a8] sm:$0xff]
      %v2490 = vld [vmem:[#allocation2 + $0x1b0] sm:$0xff]
      %v2491 = vld [vmem:[#allocation2 + $0x1c8] sm:$0xff]
      %v2492 = vld [vmem:[#allocation2 + $0x1d0] sm:$0xff]
      %v2493 = vld [vmem:[#allocation2 + $0x1e8] sm:$0xff]
      %v2494 = vld [vmem:[#allocation2 + $0x1f0] sm:$0xff]
      %v2495 = vld [vmem:[#allocation2 + $0x208] sm:$0xff]
      %v2496 = vld [vmem:[#allocation2 + $0x210] sm:$0xff]
      %v2497 = vld [vmem:[#allocation2 + $0x228] sm:$0xff]
      %v2498 = vld [vmem:[#allocation2 + $0x230] sm:$0xff]
      %v2499 = vld [vmem:[#allocation2 + $0x9] sm:$0xff]
      %v2500 = vld [vmem:[#allocation2 + $0x11] sm:$0xff]
      %v2501 = vld [vmem:[#allocation2 + $0x29] sm:$0xff]
      %v2502 = vld [vmem:[#allocation2 + $0x31] sm:$0xff]
      %v2503 = vld [vmem:[#allocation2 + $0x49] sm:$0xff]
      %v2504 = vld [vmem:[#allocation2 + $0x51] sm:$0xff]
      %v2505 = vld [vmem:[#allocation2 + $0x69] sm:$0xff]
      %v2506 = vld [vmem:[#allocation2 + $0x71] sm:$0xff]
      %v2507 = vld [vmem:[#allocation2 + $0x89] sm:$0xff]
      %v2508 = vld [vmem:[#allocation2 + $0x91] sm:$0xff]
      %v2509 = vld [vmem:[#allocation2 + $0xa9] sm:$0xff]
      %v2510 = vld [vmem:[#allocation2 + $0xb1] sm:$0xff]
      %v2511 = vld [vmem:[#allocation2 + $0xc9] sm:$0xff]
      %v2512 = vld [vmem:[#allocation2 + $0xd1] sm:$0xff]
      %v2513 = vld [vmem:[#allocation2 + $0xe9] sm:$0xff]
      %v2514 = vld [vmem:[#allocation2 + $0xf1] sm:$0xff]
      %v2515 = vld [vmem:[#allocation2 + $0x109] sm:$0xff]
      %v2516 = vld [vmem:[#allocation2 + $0x111] sm:$0xff]
      %v2517 = vld [vmem:[#allocation2 + $0x129] sm:$0xff]
      %v2518 = vld [vmem:[#allocation2 + $0x131] sm:$0xff]
      %v2519 = vld [vmem:[#allocation2 + $0x149] sm:$0xff]
      %v2520 = vld [vmem:[#allocation2 + $0x151] sm:$0xff]
      %v2521 = vld [vmem:[#allocation2 + $0x169] sm:$0xff]
      %v2522 = vld [vmem:[#allocation2 + $0x171] sm:$0xff]
      %v2523 = vld [vmem:[#allocation2 + $0x189] sm:$0xff]
      %v2524 = vld [vmem:[#allocation2 + $0x191] sm:$0xff]
      %v2525 = vld [vmem:[#allocation2 + $0x1a9] sm:$0xff]
      %v2526 = vld [vmem:[#allocation2 + $0x1b1] sm:$0xff]
      %v2527 = vld [vmem:[#allocation2 + $0x1c9] sm:$0xff]
      %v2528 = vld [vmem:[#allocation2 + $0x1d1] sm:$0xff]
      %v2529 = vld [vmem:[#allocation2 + $0x1e9] sm:$0xff]
      %v2530 = vld [vmem:[#allocation2 + $0x1f1] sm:$0xff]
      %v2531 = vld [vmem:[#allocation2 + $0x209] sm:$0xff]
      %v2532 = vld [vmem:[#allocation2 + $0x211] sm:$0xff]
      %v2533 = vld [vmem:[#allocation2 + $0x229] sm:$0xff]
      %v2534 = vld [vmem:[#allocation2 + $0x231] sm:$0xff]
      %2571 = vrot.lane.b32.xlu0 %v2463, 4
      %v2572 = vpop.permute.xlu0 %2571
      %2573 = vrot.lane.b32.xlu0 %v2464, 4
      %v2574 = vpop.permute.xlu0 %2573
      %2575 = vrot.lane.b32.xlu0 %v2465, 4
      %v2576 = vpop.permute.xlu0 %2575
      %2577 = vrot.lane.b32.xlu0 %v2466, 4
      %v2578 = vpop.permute.xlu0 %2577
      %2579 = vrot.lane.b32.xlu0 %v2467, 4
      %v2580 = vpop.permute.xlu0 %2579
      %2581 = vrot.lane.b32.xlu0 %v2468, 4
      %v2582 = vpop.permute.xlu0 %2581
      %2583 = vrot.lane.b32.xlu0 %v2469, 4
      %v2584 = vpop.permute.xlu0 %2583
      %2585 = vrot.lane.b32.xlu0 %v2470, 4
      %v2586 = vpop.permute.xlu0 %2585
      %2587 = vrot.lane.b32.xlu0 %v2471, 4
      %v2588 = vpop.permute.xlu0 %2587
      %2589 = vrot.lane.b32.xlu0 %v2472, 4
      %v2590 = vpop.permute.xlu0 %2589
      %2591 = vrot.lane.b32.xlu0 %v2473, 4
      %v2592 = vpop.permute.xlu0 %2591
      %2593 = vrot.lane.b32.xlu0 %v2474, 4
      %v2594 = vpop.permute.xlu0 %2593
      %2595 = vrot.lane.b32.xlu0 %v2475, 4
      %v2596 = vpop.permute.xlu0 %2595
      %2597 = vrot.lane.b32.xlu0 %v2476, 4
      %v2598 = vpop.permute.xlu0 %2597
      %2599 = vrot.lane.b32.xlu0 %v2477, 4
      %v2600 = vpop.permute.xlu0 %2599
      %2601 = vrot.lane.b32.xlu0 %v2478, 4
      %v2602 = vpop.permute.xlu0 %2601
      %2603 = vrot.lane.b32.xlu0 %v2479, 4
      %v2604 = vpop.permute.xlu0 %2603
      %2605 = vrot.lane.b32.xlu0 %v2480, 4
      %v2606 = vpop.permute.xlu0 %2605
      %2607 = vrot.lane.b32.xlu0 %v2481, 4
      %v2608 = vpop.permute.xlu0 %2607
      %2609 = vrot.lane.b32.xlu0 %v2482, 4
      %v2610 = vpop.permute.xlu0 %2609
      %2611 = vrot.lane.b32.xlu0 %v2483, 4
      %v2612 = vpop.permute.xlu0 %2611
      %2613 = vrot.lane.b32.xlu0 %v2484, 4
      %v2614 = vpop.permute.xlu0 %2613
      %2615 = vrot.lane.b32.xlu0 %v2485, 4
      %v2616 = vpop.permute.xlu0 %2615
      %2617 = vrot.lane.b32.xlu0 %v2486, 4
      %v2618 = vpop.permute.xlu0 %2617
      %2619 = vrot.lane.b32.xlu0 %v2487, 4
      %v2620 = vpop.permute.xlu0 %2619
      %2621 = vrot.lane.b32.xlu0 %v2488, 4
      %v2622 = vpop.permute.xlu0 %2621
      %2623 = vrot.lane.b32.xlu0 %v2489, 4
      %v2624 = vpop.permute.xlu0 %2623
      %2625 = vrot.lane.b32.xlu0 %v2490, 4
      %v2626 = vpop.permute.xlu0 %2625
      %2627 = vrot.lane.b32.xlu0 %v2491, 4
      %v2628 = vpop.permute.xlu0 %2627
      %2629 = vrot.lane.b32.xlu0 %v2492, 4
      %v2630 = vpop.permute.xlu0 %2629
      %2631 = vrot.lane.b32.xlu0 %v2493, 4
      %v2632 = vpop.permute.xlu0 %2631
      %2633 = vrot.lane.b32.xlu0 %v2494, 4
      %v2634 = vpop.permute.xlu0 %2633
      %2635 = vrot.lane.b32.xlu0 %v2495, 4
      %v2636 = vpop.permute.xlu0 %2635
      %2637 = vrot.lane.b32.xlu0 %v2496, 4
      %v2638 = vpop.permute.xlu0 %2637
      %2639 = vrot.lane.b32.xlu0 %v2497, 4
      %v2640 = vpop.permute.xlu0 %2639
      %2641 = vrot.lane.b32.xlu0 %v2498, 4
      %v2642 = vpop.permute.xlu0 %2641
      %2715 = vrot.lane.b32.xlu0 %v2499, 8
      %v2716 = vpop.permute.xlu0 %2715
      %2717 = vrot.lane.b32.xlu0 %v2500, 8
      %v2718 = vpop.permute.xlu0 %2717
      %2719 = vrot.lane.b32.xlu0 %v2501, 8
      %v2720 = vpop.permute.xlu0 %2719
      %2721 = vrot.lane.b32.xlu0 %v2502, 8
      %v2722 = vpop.permute.xlu0 %2721
      %2723 = vrot.lane.b32.xlu0 %v2503, 8
      %v2724 = vpop.permute.xlu0 %2723
      %2725 = vrot.lane.b32.xlu0 %v2504, 8
      %v2726 = vpop.permute.xlu0 %2725
      %2727 = vrot.lane.b32.xlu0 %v2505, 8
      %v2728 = vpop.permute.xlu0 %2727
      %2729 = vrot.lane.b32.xlu0 %v2506, 8
      %v2730 = vpop.permute.xlu0 %2729
      %2731 = vrot.lane.b32.xlu0 %v2507, 8
      %v2732 = vpop.permute.xlu0 %2731
      %2733 = vrot.lane.b32.xlu0 %v2508, 8
      %v2734 = vpop.permute.xlu0 %2733
      %2735 = vrot.lane.b32.xlu0 %v2509, 8
      %v2736 = vpop.permute.xlu0 %2735
      %2737 = vrot.lane.b32.xlu0 %v2510, 8
      %v2738 = vpop.permute.xlu0 %2737
      %2739 = vrot.lane.b32.xlu0 %v2511, 8
      %v2740 = vpop.permute.xlu0 %2739
      %2741 = vrot.lane.b32.xlu0 %v2512, 8
      %v2742 = vpop.permute.xlu0 %2741
      %2743 = vrot.lane.b32.xlu0 %v2513, 8
      %v2744 = vpop.permute.xlu0 %2743
      %2745 = vrot.lane.b32.xlu0 %v2514, 8
      %v2746 = vpop.permute.xlu0 %2745
      %2747 = vrot.lane.b32.xlu0 %v2515, 8
      %v2748 = vpop.permute.xlu0 %2747
      %2749 = vrot.lane.b32.xlu0 %v2516, 8
      %v2750 = vpop.permute.xlu0 %2749
      %2751 = vrot.lane.b32.xlu0 %v2517, 8
      %v2752 = vpop.permute.xlu0 %2751
      %2753 = vrot.lane.b32.xlu0 %v2518, 8
      %v2754 = vpop.permute.xlu0 %2753
      %2755 = vrot.lane.b32.xlu0 %v2519, 8
      %v2756 = vpop.permute.xlu0 %2755
      %2757 = vrot.lane.b32.xlu0 %v2520, 8
      %v2758 = vpop.permute.xlu0 %2757
      %2759 = vrot.lane.b32.xlu0 %v2521, 8
      %v2760 = vpop.permute.xlu0 %2759
      %2761 = vrot.lane.b32.xlu0 %v2522, 8
      %v2762 = vpop.permute.xlu0 %2761
      %2763 = vrot.lane.b32.xlu0 %v2523, 8
      %v2764 = vpop.permute.xlu0 %2763
      %2765 = vrot.lane.b32.xlu0 %v2524, 8
      %v2766 = vpop.permute.xlu0 %2765
      %2767 = vrot.lane.b32.xlu0 %v2525, 8
      %v2768 = vpop.permute.xlu0 %2767
      %2769 = vrot.lane.b32.xlu0 %v2526, 8
      %v2770 = vpop.permute.xlu0 %2769
      %2771 = vrot.lane.b32.xlu0 %v2527, 8
      %v2772 = vpop.permute.xlu0 %2771
      %2773 = vrot.lane.b32.xlu0 %v2528, 8
      %v2774 = vpop.permute.xlu0 %2773
      %2775 = vrot.lane.b32.xlu0 %v2529, 8
      %v2776 = vpop.permute.xlu0 %2775
      %2777 = vrot.lane.b32.xlu0 %v2530, 8
      %v2778 = vpop.permute.xlu0 %2777
      %2779 = vrot.lane.b32.xlu0 %v2531, 8
      %v2780 = vpop.permute.xlu0 %2779
      %2781 = vrot.lane.b32.xlu0 %v2532, 8
      %v2782 = vpop.permute.xlu0 %2781
      %2783 = vrot.lane.b32.xlu0 %v2533, 8
      %v2784 = vpop.permute.xlu0 %2783
      %2785 = vrot.lane.b32.xlu0 %v2534, 8
      %v2786 = vpop.permute.xlu0 %2785
      %v2823 = vsel %vm171, %v2427, %v2572
      %v2824 = vsel %vm171, %v2428, %v2574
      %v2825 = vsel %vm171, %v2429, %v2576
      %v2826 = vsel %vm171, %v2430, %v2578
      %v2827 = vsel %vm171, %v2431, %v2580
      %v2828 = vsel %vm171, %v2432, %v2582
      %v2829 = vsel %vm171, %v2433, %v2584
      %v2830 = vsel %vm171, %v2434, %v2586
      %v2831 = vsel %vm171, %v2435, %v2588
      %v2832 = vsel %vm171, %v2436, %v2590
      %v2833 = vsel %vm171, %v2437, %v2592
      %v2834 = vsel %vm171, %v2438, %v2594
      %v2835 = vsel %vm171, %v2439, %v2596
      %v2836 = vsel %vm171, %v2440, %v2598
      %v2837 = vsel %vm171, %v2441, %v2600
      %v2838 = vsel %vm171, %v2442, %v2602
      %v2839 = vsel %vm171, %v2443, %v2604
      %v2840 = vsel %vm171, %v2444, %v2606
      %v2841 = vsel %vm171, %v2445, %v2608
      %v2842 = vsel %vm171, %v2446, %v2610
      %v2843 = vsel %vm171, %v2447, %v2612
      %v2844 = vsel %vm171, %v2448, %v2614
      %v2845 = vsel %vm171, %v2449, %v2616
      %v2846 = vsel %vm171, %v2450, %v2618
      %v2847 = vsel %vm171, %v2451, %v2620
      %v2848 = vsel %vm171, %v2452, %v2622
      %v2849 = vsel %vm171, %v2453, %v2624
      %v2850 = vsel %vm171, %v2454, %v2626
      %v2851 = vsel %vm171, %v2455, %v2628
      %v2852 = vsel %vm171, %v2456, %v2630
      %v2853 = vsel %vm171, %v2457, %v2632
      %v2854 = vsel %vm171, %v2458, %v2634
      %v2855 = vsel %vm171, %v2459, %v2636
      %v2856 = vsel %vm171, %v2460, %v2638
      %v2857 = vsel %vm171, %v2461, %v2640
      %v2858 = vsel %vm171, %v2462, %v2642
      %v2859 = vsel %vm714, %v2823, %v2716
      %v2860 = vsel %vm714, %v2824, %v2718
      %v2861 = vsel %vm714, %v2825, %v2720
      %v2862 = vsel %vm714, %v2826, %v2722
      %v2863 = vsel %vm714, %v2827, %v2724
      %v2864 = vsel %vm714, %v2828, %v2726
      %v2865 = vsel %vm714, %v2829, %v2728
      %v2866 = vsel %vm714, %v2830, %v2730
      %v2867 = vsel %vm714, %v2831, %v2732
      %v2868 = vsel %vm714, %v2832, %v2734
      %v2869 = vsel %vm714, %v2833, %v2736
      %v2870 = vsel %vm714, %v2834, %v2738
      %v2871 = vsel %vm714, %v2835, %v2740
      %v2872 = vsel %vm714, %v2836, %v2742
      %v2873 = vsel %vm714, %v2837, %v2744
      %v2874 = vsel %vm714, %v2838, %v2746
      %v2875 = vsel %vm714, %v2839, %v2748
      %v2876 = vsel %vm714, %v2840, %v2750
      %v2877 = vsel %vm714, %v2841, %v2752
      %v2878 = vsel %vm714, %v2842, %v2754
      %v2879 = vsel %vm714, %v2843, %v2756
      %v2880 = vsel %vm714, %v2844, %v2758
      %v2881 = vsel %vm714, %v2845, %v2760
      %v2882 = vsel %vm714, %v2846, %v2762
      %v2883 = vsel %vm714, %v2847, %v2764
      %v2884 = vsel %vm714, %v2848, %v2766
      %v2885 = vsel %vm714, %v2849, %v2768
      %v2886 = vsel %vm714, %v2850, %v2770
      %v2887 = vsel %vm714, %v2851, %v2772
      %v2888 = vsel %vm714, %v2852, %v2774
      %v2889 = vsel %vm714, %v2853, %v2776
      %v2890 = vsel %vm714, %v2854, %v2778
      %v2891 = vsel %vm714, %v2855, %v2780
      %v2892 = vsel %vm714, %v2856, %v2782
      %v2893 = vsel %vm714, %v2857, %v2784
      %v2894 = vsel %vm714, %v2858, %v2786
      %2895 = vst.msk [vmem:[#allocation3] sm:$0xff] %vm751, %v2859
      %2896 = vst.msk [vmem:[#allocation3 + $0x8] sm:$0xff] %vm751, %v2860
      %2897 = vst.msk [vmem:[#allocation3 + $0x10] sm:$0xff] %vm751, %v2861
      %2898 = vst.msk [vmem:[#allocation3 + $0x18] sm:$0xff] %vm751, %v2862
      %2899 = vst.msk [vmem:[#allocation3 + $0x20] sm:$0xff] %vm751, %v2863
      %2900 = vst.msk [vmem:[#allocation3 + $0x28] sm:$0xff] %vm751, %v2864
      %2901 = vst.msk [vmem:[#allocation3 + $0x30] sm:$0xff] %vm751, %v2865
      %2902 = vst.msk [vmem:[#allocation3 + $0x38] sm:$0xff] %vm751, %v2866
      %2903 = vst.msk [vmem:[#allocation3 + $0x40] sm:$0xff] %vm751, %v2867
      %2904 = vst.msk [vmem:[#allocation3 + $0x48] sm:$0xff] %vm751, %v2868
      %2905 = vst.msk [vmem:[#allocation3 + $0x50] sm:$0xff] %vm751, %v2869
      %2906 = vst.msk [vmem:[#allocation3 + $0x58] sm:$0xff] %vm751, %v2870
      %2907 = vst.msk [vmem:[#allocation3 + $0x60] sm:$0xff] %vm751, %v2871
      %2908 = vst.msk [vmem:[#allocation3 + $0x68] sm:$0xff] %vm751, %v2872
      %2909 = vst.msk [vmem:[#allocation3 + $0x70] sm:$0xff] %vm751, %v2873
      %2910 = vst.msk [vmem:[#allocation3 + $0x78] sm:$0xff] %vm751, %v2874
      %2911 = vst.msk [vmem:[#allocation3 + $0x80] sm:$0xff] %vm751, %v2875
      %2912 = vst.msk [vmem:[#allocation3 + $0x88] sm:$0xff] %vm751, %v2876
      %2913 = vst.msk [vmem:[#allocation3 + $0x90] sm:$0xff] %vm751, %v2877
      %2914 = vst.msk [vmem:[#allocation3 + $0x98] sm:$0xff] %vm751, %v2878
      %2915 = vst.msk [vmem:[#allocation3 + $0xa0] sm:$0xff] %vm751, %v2879
      %2916 = vst.msk [vmem:[#allocation3 + $0xa8] sm:$0xff] %vm751, %v2880
      %2917 = vst.msk [vmem:[#allocation3 + $0xb0] sm:$0xff] %vm751, %v2881
      %2918 = vst.msk [vmem:[#allocation3 + $0xb8] sm:$0xff] %vm751, %v2882
      %2919 = vst.msk [vmem:[#allocation3 + $0xc0] sm:$0xff] %vm751, %v2883
      %2920 = vst.msk [vmem:[#allocation3 + $0xc8] sm:$0xff] %vm751, %v2884
      %2921 = vst.msk [vmem:[#allocation3 + $0xd0] sm:$0xff] %vm751, %v2885
      %2922 = vst.msk [vmem:[#allocation3 + $0xd8] sm:$0xff] %vm751, %v2886
      %2923 = vst.msk [vmem:[#allocation3 + $0xe0] sm:$0xff] %vm751, %v2887
      %2924 = vst.msk [vmem:[#allocation3 + $0xe8] sm:$0xff] %vm751, %v2888
      %2925 = vst.msk [vmem:[#allocation3 + $0xf0] sm:$0xff] %vm751, %v2889
      %2926 = vst.msk [vmem:[#allocation3 + $0xf8] sm:$0xff] %vm751, %v2890
      %2927 = vst.msk [vmem:[#allocation3 + $0x100] sm:$0xff] %vm751, %v2891
      %2928 = vst.msk [vmem:[#allocation3 + $0x108] sm:$0xff] %vm751, %v2892
      %2929 = vst.msk [vmem:[#allocation3 + $0x110] sm:$0xff] %vm751, %v2893
      %2930 = vst.msk [vmem:[#allocation3 + $0x118] sm:$0xff] %vm751, %v2894
      %v2931 = vld [vmem:[#allocation3] sm:$0xff]
      %v2932 = vld [vmem:[#allocation3 + $0x8] sm:$0xff]
      %v2933 = vld [vmem:[#allocation3 + $0x10] sm:$0xff]
      %v2934 = vld [vmem:[#allocation3 + $0x18] sm:$0xff]
      %v2935 = vld [vmem:[#allocation3 + $0x20] sm:$0xff]
      %v2936 = vld [vmem:[#allocation3 + $0x28] sm:$0xff]
      %v2937 = vld [vmem:[#allocation3 + $0x30] sm:$0xff]
      %v2938 = vld [vmem:[#allocation3 + $0x38] sm:$0xff]
      %v2939 = vld [vmem:[#allocation3 + $0x40] sm:$0xff]
      %v2940 = vld [vmem:[#allocation3 + $0x48] sm:$0xff]
      %v2941 = vld [vmem:[#allocation3 + $0x50] sm:$0xff]
      %v2942 = vld [vmem:[#allocation3 + $0x58] sm:$0xff]
      %v2943 = vld [vmem:[#allocation3 + $0x60] sm:$0xff]
      %v2944 = vld [vmem:[#allocation3 + $0x68] sm:$0xff]
      %v2945 = vld [vmem:[#allocation3 + $0x70] sm:$0xff]
      %v2946 = vld [vmem:[#allocation3 + $0x78] sm:$0xff]
      %v2947 = vld [vmem:[#allocation3 + $0x80] sm:$0xff]
      %v2948 = vld [vmem:[#allocation3 + $0x88] sm:$0xff]
      %v2949 = vld [vmem:[#allocation3 + $0x90] sm:$0xff]
      %v2950 = vld [vmem:[#allocation3 + $0x98] sm:$0xff]
      %v2951 = vld [vmem:[#allocation3 + $0xa0] sm:$0xff]
      %v2952 = vld [vmem:[#allocation3 + $0xa8] sm:$0xff]
      %v2953 = vld [vmem:[#allocation3 + $0xb0] sm:$0xff]
      %v2954 = vld [vmem:[#allocation3 + $0xb8] sm:$0xff]
      %v2955 = vld [vmem:[#allocation3 + $0xc0] sm:$0xff]
      %v2956 = vld [vmem:[#allocation3 + $0xc8] sm:$0xff]
      %v2957 = vld [vmem:[#allocation3 + $0xd0] sm:$0xff]
      %v2958 = vld [vmem:[#allocation3 + $0xd8] sm:$0xff]
      %v2959 = vld [vmem:[#allocation3 + $0xe0] sm:$0xff]
      %v2960 = vld [vmem:[#allocation3 + $0xe8] sm:$0xff]
      %v2961 = vld [vmem:[#allocation3 + $0xf0] sm:$0xff]
      %v2962 = vld [vmem:[#allocation3 + $0xf8] sm:$0xff]
      %v2963 = vld [vmem:[%s2] sm:$0xff]
      %v2964 = vld [vmem:[%s2 + $0x8] sm:$0xf]
      %v2966 = vsel %vm751, %v2931, 0
      %v2969 = vsel %vm751, %v2932, 0
      %v2972 = vsel %vm751, %v2933, 0
      %v2975 = vsel %vm751, %v2934, 0
      %v2978 = vsel %vm751, %v2935, 0
      %v2981 = vsel %vm751, %v2936, 0
      %v2984 = vsel %vm751, %v2937, 0
      %v2987 = vsel %vm751, %v2938, 0
      %v2990 = vsel %vm751, %v2939, 0
      %v2993 = vsel %vm751, %v2940, 0
      %v2996 = vsel %vm751, %v2941, 0
      %v2999 = vsel %vm751, %v2942, 0
      %v3002 = vsel %vm751, %v2943, 0
      %v3005 = vsel %vm751, %v2944, 0
      %v3008 = vsel %vm751, %v2945, 0
      %v3011 = vsel %vm751, %v2946, 0
      %v3014 = vsel %vm751, %v2947, 0
      %v3017 = vsel %vm751, %v2948, 0
      %v3020 = vsel %vm751, %v2949, 0
      %v3023 = vsel %vm751, %v2950, 0
      %v3026 = vsel %vm751, %v2951, 0
      %v3029 = vsel %vm751, %v2952, 0
      %v3032 = vsel %vm751, %v2953, 0
      %v3035 = vsel %vm751, %v2954, 0
      %v3038 = vsel %vm751, %v2955, 0
      %v3041 = vsel %vm751, %v2956, 0
      %v3044 = vsel %vm751, %v2957, 0
      %v3047 = vsel %vm751, %v2958, 0
      %v3050 = vsel %vm751, %v2959, 0
      %v3053 = vsel %vm751, %v2960, 0
      %v3056 = vsel %vm751, %v2961, 0
      %v3059 = vsel %vm751, %v2962, 0
      %v3062 = vsel %vm918, %v2964, 0
      %3064 = vmatprep.subr.mxu0 0.0
      %3065 = vmatpush1.msra.mxu0 %v2963
      %3066 = vmatprep.subr.mxu0 0.0
      %3067 = vmatpush1.msra.mxu0 %v3062
      %3068 = vmatprep.subr.mxu0 0.0
      %3069 = vmatpush1.msra.mxu0 0.0
      %3070 = vmatprep.subr.mxu0 0.0
      %3071 = vmatpush1.msra.mxu0 0.0
      %3072 = vmatprep.subr.mxu0 0.0
      %3073 = vmatpush1.msra.mxu0 0.0
      %3074 = vmatprep.subr.mxu0 0.0
      %3075 = vmatpush1.msra.mxu0 0.0
      %3076 = vmatprep.subr.mxu0 0.0
      %3077 = vmatpush1.msra.mxu0 0.0
      %3078 = vmatprep.subr.mxu0 0.0
      %3079 = vmatpush1.msra.mxu0 0.0
      %3080 = vmatprep.subr.mxu0 0.0
      %3081 = vmatpush1.msra.mxu0 0.0
      %3082 = vmatprep.subr.mxu0 0.0
      %3083 = vmatpush1.msra.mxu0 0.0
      %3084 = vmatprep.subr.mxu0 0.0
      %3085 = vmatpush1.msra.mxu0 0.0
      %3086 = vmatprep.subr.mxu0 0.0
      %3087 = vmatpush1.msra.mxu0 0.0
      %3088 = vmatprep.subr.mxu0 0.0
      %3089 = vmatpush1.msra.mxu0 0.0
      %3090 = vmatprep.subr.mxu0 0.0
      %3091 = vmatpush1.msra.mxu0 0.0
      %3092 = vmatprep.subr.mxu0 0.0
      %3093 = vmatpush1.msra.mxu0 0.0
      %3094 = vmatprep.subr.mxu0 0.0
      %3095 = vmatpush1.msra.mxu0 0.0
      %3096 = vmatprep.subr.mxu0 0.0
      %3097 = vmatpush1.msra.mxu0 0.0
      %3098 = vmatprep.subr.mxu0 0.0
      %3099 = vmatpush1.msra.mxu0 0.0
      %3100 = vmatprep.subr.mxu0 0.0
      %3101 = vmatpush1.msra.mxu0 0.0
      %3102 = vmatprep.subr.mxu0 0.0
      %3103 = vmatpush1.msra.mxu0 0.0
      %3104 = vmatprep.subr.mxu0 0.0
      %3105 = vmatpush1.msra.mxu0 0.0
      %3106 = vmatprep.subr.mxu0 0.0
      %3107 = vmatpush1.msra.mxu0 0.0
      %3108 = vmatprep.subr.mxu0 0.0
      %3109 = vmatpush1.msra.mxu0 0.0
      %3110 = vmatprep.subr.mxu0 0.0
      %3111 = vmatpush1.msra.mxu0 0.0
      %3112 = vmatprep.subr.mxu0 0.0
      %3113 = vmatpush1.msra.mxu0 0.0
      %3114 = vmatprep.subr.mxu0 0.0
      %3115 = vmatpush1.msra.mxu0 0.0
      %3116 = vmatprep.subr.mxu0 0.0
      %3117 = vmatpush1.msra.mxu0 0.0
      %3118 = vmatprep.subr.mxu0 0.0
      %3119 = vmatpush1.msra.mxu0 0.0
      %3120 = vmatprep.subr.mxu0 0.0
      %3121 = vmatpush1.msra.mxu0 0.0
      %3122 = vmatprep.subr.mxu0 0.0
      %3123 = vmatpush1.msra.mxu0 0.0
      %3124 = vmatprep.subr.mxu0 0.0
      %3125 = vmatpush1.msra.mxu0 0.0
      %3126 = vmatprep.subr.mxu0 0.0
      %3127 = vmatpush1.msra.mxu0 0.0
      %3128 = vmatprep.mubr.f32.mxu0 0.0
      %3129 = vmatmul.mubr.f32.gmra.mrb[0].mxu0 %v2966
      %v3130 = vpop.f32.mrb[0].mxu0
      %v3131 = vadd.f32 0.0, %v3130
      %v3132 = vpop.f32.mrb[0].mxu0
      %3133 = vmatprep.mubr.f32.mxu0 0.0
      %3134 = vmatmul.mubr.f32.gmra.mrb[0].mxu0 %v2969
      %v3135 = vpop.f32.mrb[0].mxu0
      %v3136 = vadd.f32 0.0, %v3135
      %v3137 = vpop.f32.mrb[0].mxu0
      %3138 = vmatprep.mubr.f32.mxu0 0.0
      %3139 = vmatmul.mubr.f32.gmra.mrb[0].mxu0 %v2972
      %v3140 = vpop.f32.mrb[0].mxu0
      %v3141 = vadd.f32 0.0, %v3140
      %v3142 = vpop.f32.mrb[0].mxu0
      %3143 = vmatprep.mubr.f32.mxu0 0.0
      %3144 = vmatmul.mubr.f32.gmra.mrb[0].mxu0 %v2975
      %v3145 = vpop.f32.mrb[0].mxu0
      %v3146 = vadd.f32 0.0, %v3145
      %v3147 = vpop.f32.mrb[0].mxu0
      %3148 = vmatprep.mubr.f32.mxu0 0.0
      %3149 = vmatmul.mubr.f32.gmra.mrb[0].mxu0 %v2978
      %v3150 = vpop.f32.mrb[0].mxu0
      %v3151 = vadd.f32 0.0, %v3150
      %v3152 = vpop.f32.mrb[0].mxu0
      %3153 = vmatprep.mubr.f32.mxu0 0.0
      %3154 = vmatmul.mubr.f32.gmra.mrb[0].mxu0 %v2981
      %v3155 = vpop.f32.mrb[0].mxu0
      %v3156 = vadd.f32 0.0, %v3155
      %v3157 = vpop.f32.mrb[0].mxu0
      %3158 = vmatprep.mubr.f32.mxu0 0.0
      %3159 = vmatmul.mubr.f32.gmra.mrb[0].mxu0 %v2984
      %v3160 = vpop.f32.mrb[0].mxu0
      %v3161 = vadd.f32 0.0, %v3160
      %v3162 = vpop.f32.mrb[0].mxu0
      %3163 = vmatprep.mubr.f32.mxu0 0.0
      %3164 = vmatmul.mubr.f32.gmra.mrb[0].mxu0 %v2987
      %v3165 = vpop.f32.mrb[0].mxu0
      %v3166 = vadd.f32 0.0, %v3165
      %v3167 = vpop.f32.mrb[0].mxu0
      %3168 = vmatprep.mubr.f32.mxu0 0.0
      %3169 = vmatmul.mubr.f32.gmra.mrb[0].mxu0 %v2990
      %v3170 = vpop.f32.mrb[0].mxu0
      %v3171 = vadd.f32 0.0, %v3170
      %v3172 = vpop.f32.mrb[0].mxu0
      %3173 = vmatprep.mubr.f32.mxu0 0.0
      %3174 = vmatmul.mubr.f32.gmra.mrb[0].mxu0 %v2993
      %v3175 = vpop.f32.mrb[0].mxu0
      %v3176 = vadd.f32 0.0, %v3175
      %v3177 = vpop.f32.mrb[0].mxu0
      %3178 = vmatprep.mubr.f32.mxu0 0.0
      %3179 = vmatmul.mubr.f32.gmra.mrb[0].mxu0 %v2996
      %v3180 = vpop.f32.mrb[0].mxu0
      %v3181 = vadd.f32 0.0, %v3180
      %v3182 = vpop.f32.mrb[0].mxu0
      %3183 = vmatprep.mubr.f32.mxu0 0.0
      %3184 = vmatmul.mubr.f32.gmra.mrb[0].mxu0 %v2999
      %v3185 = vpop.f32.mrb[0].mxu0
      %v3186 = vadd.f32 0.0, %v3185
      %v3187 = vpop.f32.mrb[0].mxu0
      %3188 = vmatprep.mubr.f32.mxu0 0.0
      %3189 = vmatmul.mubr.f32.gmra.mrb[0].mxu0 %v3002
      %v3190 = vpop.f32.mrb[0].mxu0
      %v3191 = vadd.f32 0.0, %v3190
      %v3192 = vpop.f32.mrb[0].mxu0
      %3193 = vmatprep.mubr.f32.mxu0 0.0
      %3194 = vmatmul.mubr.f32.gmra.mrb[0].mxu0 %v3005
      %v3195 = vpop.f32.mrb[0].mxu0
      %v3196 = vadd.f32 0.0, %v3195
      %v3197 = vpop.f32.mrb[0].mxu0
      %3198 = vmatprep.mubr.f32.mxu0 0.0
      %3199 = vmatmul.mubr.f32.gmra.mrb[0].mxu0 %v3008
      %v3200 = vpop.f32.mrb[0].mxu0
      %v3201 = vadd.f32 0.0, %v3200
      %v3202 = vpop.f32.mrb[0].mxu0
      %3203 = vmatprep.mubr.f32.mxu0 0.0
      %3204 = vmatmul.mubr.f32.gmra.mrb[0].mxu0 %v3011
      %v3205 = vpop.f32.mrb[0].mxu0
      %v3206 = vadd.f32 0.0, %v3205
      %v3207 = vpop.f32.mrb[0].mxu0
      %3208 = vmatprep.mubr.f32.mxu0 0.0
      %3209 = vmatmul.mubr.f32.gmra.mrb[0].mxu0 %v3014
      %v3210 = vpop.f32.mrb[0].mxu0
      %v3211 = vadd.f32 0.0, %v3210
      %v3212 = vpop.f32.mrb[0].mxu0
      %3213 = vmatprep.mubr.f32.mxu0 0.0
      %3214 = vmatmul.mubr.f32.gmra.mrb[0].mxu0 %v3017
      %v3215 = vpop.f32.mrb[0].mxu0
      %v3216 = vadd.f32 0.0, %v3215
      %v3217 = vpop.f32.mrb[0].mxu0
      %3218 = vmatprep.mubr.f32.mxu0 0.0
      %3219 = vmatmul.mubr.f32.gmra.mrb[0].mxu0 %v3020
      %v3220 = vpop.f32.mrb[0].mxu0
      %v3221 = vadd.f32 0.0, %v3220
      %v3222 = vpop.f32.mrb[0].mxu0
      %3223 = vmatprep.mubr.f32.mxu0 0.0
      %3224 = vmatmul.mubr.f32.gmra.mrb[0].mxu0 %v3023
      %v3225 = vpop.f32.mrb[0].mxu0
      %v3226 = vadd.f32 0.0, %v3225
      %v3227 = vpop.f32.mrb[0].mxu0
      %3228 = vmatprep.mubr.f32.mxu0 0.0
      %3229 = vmatmul.mubr.f32.gmra.mrb[0].mxu0 %v3026
      %v3230 = vpop.f32.mrb[0].mxu0
      %v3231 = vadd.f32 0.0, %v3230
      %v3232 = vpop.f32.mrb[0].mxu0
      %3233 = vmatprep.mubr.f32.mxu0 0.0
      %3234 = vmatmul.mubr.f32.gmra.mrb[0].mxu0 %v3029
      %v3235 = vpop.f32.mrb[0].mxu0
      %v3236 = vadd.f32 0.0, %v3235
      %v3237 = vpop.f32.mrb[0].mxu0
      %3238 = vmatprep.mubr.f32.mxu0 0.0
      %3239 = vmatmul.mubr.f32.gmra.mrb[0].mxu0 %v3032
      %v3240 = vpop.f32.mrb[0].mxu0
      %v3241 = vadd.f32 0.0, %v3240
      %v3242 = vpop.f32.mrb[0].mxu0
      %3243 = vmatprep.mubr.f32.mxu0 0.0
      %3244 = vmatmul.mubr.f32.gmra.mrb[0].mxu0 %v3035
      %v3245 = vpop.f32.mrb[0].mxu0
      %v3246 = vadd.f32 0.0, %v3245
      %v3247 = vpop.f32.mrb[0].mxu0
      %3248 = vmatprep.mubr.f32.mxu0 0.0
      %3249 = vmatmul.mubr.f32.gmra.mrb[0].mxu0 %v3038
      %v3250 = vpop.f32.mrb[0].mxu0
      %v3251 = vadd.f32 0.0, %v3250
      %v3252 = vpop.f32.mrb[0].mxu0
      %3253 = vmatprep.mubr.f32.mxu0 0.0
      %3254 = vmatmul.mubr.f32.gmra.mrb[0].mxu0 %v3041
      %v3255 = vpop.f32.mrb[0].mxu0
      %v3256 = vadd.f32 0.0, %v3255
      %v3257 = vpop.f32.mrb[0].mxu0
      %3258 = vmatprep.mubr.f32.mxu0 0.0
      %3259 = vmatmul.mubr.f32.gmra.mrb[0].mxu0 %v3044
      %v3260 = vpop.f32.mrb[0].mxu0
      %v3261 = vadd.f32 0.0, %v3260
      %v3262 = vpop.f32.mrb[0].mxu0
      %3263 = vmatprep.mubr.f32.mxu0 0.0
      %3264 = vmatmul.mubr.f32.gmra.mrb[0].mxu0 %v3047
      %v3265 = vpop.f32.mrb[0].mxu0
      %v3266 = vadd.f32 0.0, %v3265
      %v3267 = vpop.f32.mrb[0].mxu0
      %3268 = vmatprep.mubr.f32.mxu0 0.0
      %3269 = vmatmul.mubr.f32.gmra.mrb[0].mxu0 %v3050
      %v3270 = vpop.f32.mrb[0].mxu0
      %v3271 = vadd.f32 0.0, %v3270
      %v3272 = vpop.f32.mrb[0].mxu0
      %3273 = vmatprep.mubr.f32.mxu0 0.0
      %3274 = vmatmul.mubr.f32.gmra.mrb[0].mxu0 %v3053
      %v3275 = vpop.f32.mrb[0].mxu0
      %v3276 = vadd.f32 0.0, %v3275
      %v3277 = vpop.f32.mrb[0].mxu0
      %3278 = vmatprep.mubr.f32.mxu0 0.0
      %3279 = vmatmul.mubr.f32.gmra.mrb[0].mxu0 %v3056
      %v3280 = vpop.f32.mrb[0].mxu0
      %v3281 = vadd.f32 0.0, %v3280
      %v3282 = vpop.f32.mrb[0].mxu0
      %3283 = vmatprep.mubr.f32.mxu0 0.0
      %3284 = vmatmul.mubr.f32.gmra.mrb[0].mxu0 %v3059
      %v3285 = vpop.f32.mrb[0].mxu0
      %v3286 = vadd.f32 0.0, %v3285
      %v3287 = vpop.f32.mrb[0].mxu0
      %3288 = vdwg.mxu0
      %3289 = vst.msk [vmem:[#allocation4] sm:$0xff] %vm171, %v3131
      %3290 = vst.msk [vmem:[#allocation4 + $0x8] sm:$0xff] %vm171, %v3136
      %3291 = vst.msk [vmem:[#allocation4 + $0x10] sm:$0xff] %vm171, %v3141
      %3292 = vst.msk [vmem:[#allocation4 + $0x18] sm:$0xff] %vm171, %v3146
      %3293 = vst.msk [vmem:[#allocation4 + $0x20] sm:$0xff] %vm171, %v3151
      %3294 = vst.msk [vmem:[#allocation4 + $0x28] sm:$0xff] %vm171, %v3156
      %3295 = vst.msk [vmem:[#allocation4 + $0x30] sm:$0xff] %vm171, %v3161
      %3296 = vst.msk [vmem:[#allocation4 + $0x38] sm:$0xff] %vm171, %v3166
      %3297 = vst.msk [vmem:[#allocation4 + $0x40] sm:$0xff] %vm171, %v3171
      %3298 = vst.msk [vmem:[#allocation4 + $0x48] sm:$0xff] %vm171, %v3176
      %3299 = vst.msk [vmem:[#allocation4 + $0x50] sm:$0xff] %vm171, %v3181
      %3300 = vst.msk [vmem:[#allocation4 + $0x58] sm:$0xff] %vm171, %v3186
      %3301 = vst.msk [vmem:[#allocation4 + $0x60] sm:$0xff] %vm171, %v3191
      %3302 = vst.msk [vmem:[#allocation4 + $0x68] sm:$0xff] %vm171, %v3196
      %3303 = vst.msk [vmem:[#allocation4 + $0x70] sm:$0xff] %vm171, %v3201
      %3304 = vst.msk [vmem:[#allocation4 + $0x78] sm:$0xff] %vm171, %v3206
      %3305 = vst.msk [vmem:[#allocation4 + $0x80] sm:$0xff] %vm171, %v3211
      %3306 = vst.msk [vmem:[#allocation4 + $0x88] sm:$0xff] %vm171, %v3216
      %3307 = vst.msk [vmem:[#allocation4 + $0x90] sm:$0xff] %vm171, %v3221
      %3308 = vst.msk [vmem:[#allocation4 + $0x98] sm:$0xff] %vm171, %v3226
      %3309 = vst.msk [vmem:[#allocation4 + $0xa0] sm:$0xff] %vm171, %v3231
      %3310 = vst.msk [vmem:[#allocation4 + $0xa8] sm:$0xff] %vm171, %v3236
      %3311 = vst.msk [vmem:[#allocation4 + $0xb0] sm:$0xff] %vm171, %v3241
      %3312 = vst.msk [vmem:[#allocation4 + $0xb8] sm:$0xff] %vm171, %v3246
      %3313 = vst.msk [vmem:[#allocation4 + $0xc0] sm:$0xff] %vm171, %v3251
      %3314 = vst.msk [vmem:[#allocation4 + $0xc8] sm:$0xff] %vm171, %v3256
      %3315 = vst.msk [vmem:[#allocation4 + $0xd0] sm:$0xff] %vm171, %v3261
      %3316 = vst.msk [vmem:[#allocation4 + $0xd8] sm:$0xff] %vm171, %v3266
      %3317 = vst.msk [vmem:[#allocation4 + $0xe0] sm:$0xff] %vm171, %v3271
      %3318 = vst.msk [vmem:[#allocation4 + $0xe8] sm:$0xff] %vm171, %v3276
      %3319 = vst.msk [vmem:[#allocation4 + $0xf0] sm:$0xff] %vm171, %v3281
      %3320 = vst.msk [vmem:[#allocation4 + $0xf8] sm:$0xff] %vm171, %v3286
      %v3321 = vld [vmem:[%s1179] sm:$0xff]
      %v3322 = vld [vmem:[%s1179 + $0x8] sm:$0xff]
      %v3323 = vld [vmem:[%s1179 + $0x10] sm:$0xff]
      %v3324 = vld [vmem:[%s1179 + $0x18] sm:$0xff]
      %v3325 = vld [vmem:[%s1179 + $0x20] sm:$0xff]
      %v3326 = vld [vmem:[%s1179 + $0x28] sm:$0xff]
      %v3327 = vld [vmem:[%s1179 + $0x30] sm:$0xff]
      %v3328 = vld [vmem:[%s1179 + $0x38] sm:$0xff]
      %v3329 = vld [vmem:[%s1179 + $0x40] sm:$0xff]
      %v3330 = vld [vmem:[%s1179 + $0x48] sm:$0xff]
      %v3331 = vld [vmem:[%s1179 + $0x50] sm:$0xff]
      %v3332 = vld [vmem:[%s1179 + $0x58] sm:$0xff]
      %v3333 = vld [vmem:[%s1179 + $0x60] sm:$0xff]
      %v3334 = vld [vmem:[%s1179 + $0x68] sm:$0xff]
      %v3335 = vld [vmem:[%s1179 + $0x70] sm:$0xff]
      %v3336 = vld [vmem:[%s1179 + $0x78] sm:$0xff]
      %v3337 = vld [vmem:[%s1179 + $0x80] sm:$0xff]
      %v3338 = vld [vmem:[%s1179 + $0x88] sm:$0xff]
      %v3339 = vld [vmem:[%s1179 + $0x90] sm:$0xff]
      %v3340 = vld [vmem:[%s1179 + $0x98] sm:$0xff]
      %v3341 = vld [vmem:[%s1179 + $0xa0] sm:$0xff]
      %v3342 = vld [vmem:[%s1179 + $0xa8] sm:$0xff]
      %v3343 = vld [vmem:[%s1179 + $0xb0] sm:$0xff]
      %v3344 = vld [vmem:[%s1179 + $0xb8] sm:$0xff]
      %v3345 = vld [vmem:[%s1179 + $0xc0] sm:$0xff]
      %v3346 = vld [vmem:[%s1179 + $0xc8] sm:$0xff]
      %v3347 = vld [vmem:[%s1179 + $0xd0] sm:$0xff]
      %v3348 = vld [vmem:[%s1179 + $0xd8] sm:$0xff]
      %v3349 = vld [vmem:[%s1179 + $0xe0] sm:$0xff]
      %v3350 = vld [vmem:[%s1179 + $0xe8] sm:$0xff]
      %v3351 = vld [vmem:[%s1179 + $0xf0] sm:$0xff]
      %v3352 = vld [vmem:[%s1179 + $0xf8] sm:$0xff]
      %s3353 = scalar_lea.vmem %s2, 16
      %v3354 = vld [vmem:[%s3353] sm:$0xff]
      %v3355 = vld [vmem:[%s3353 + $0x8] sm:$0xf]
      %v3357 = vsel %vm751, %v3321, 0
      %v3360 = vsel %vm751, %v3322, 0
      %v3363 = vsel %vm751, %v3323, 0
      %v3366 = vsel %vm751, %v3324, 0
      %v3369 = vsel %vm751, %v3325, 0
      %v3372 = vsel %vm751, %v3326, 0
      %v3375 = vsel %vm751, %v3327, 0
      %v3378 = vsel %vm751, %v3328, 0
      %v3381 = vsel %vm751, %v3329, 0
      %v3384 = vsel %vm751, %v3330, 0
      %v3387 = vsel %vm751, %v3331, 0
      %v3390 = vsel %vm751, %v3332, 0
      %v3393 = vsel %vm751, %v3333, 0
      %v3396 = vsel %vm751, %v3334, 0
      %v3399 = vsel %vm751, %v3335, 0
      %v3402 = vsel %vm751, %v3336, 0
      %v3405 = vsel %vm751, %v3337, 0
      %v3408 = vsel %vm751, %v3338, 0
      %v3411 = vsel %vm751, %v3339, 0
      %v3414 = vsel %vm751, %v3340, 0
      %v3417 = vsel %vm751, %v3341, 0
      %v3420 = vsel %vm751, %v3342, 0
      %v3423 = vsel %vm751, %v3343, 0
      %v3426 = vsel %vm751, %v3344, 0
      %v3429 = vsel %vm751, %v3345, 0
      %v3432 = vsel %vm751, %v3346, 0
      %v3435 = vsel %vm751, %v3347, 0
      %v3438 = vsel %vm751, %v3348, 0
      %v3441 = vsel %vm751, %v3349, 0
      %v3444 = vsel %vm751, %v3350, 0
      %v3447 = vsel %vm751, %v3351, 0
      %v3450 = vsel %vm751, %v3352, 0
      %v3453 = vsel %vm918, %v3355, 0
      %3455 = vmatprep.subr.mxu0 0.0
      %3456 = vmatpush1.msra.mxu0 %v3354
      %3457 = vmatprep.subr.mxu0 0.0
      %3458 = vmatpush1.msra.mxu0 %v3453
      %3459 = vmatprep.subr.mxu0 0.0
      %3460 = vmatpush1.msra.mxu0 0.0
      %3461 = vmatprep.subr.mxu0 0.0
      %3462 = vmatpush1.msra.mxu0 0.0
      %3463 = vmatprep.subr.mxu0 0.0
      %3464 = vmatpush1.msra.mxu0 0.0
      %3465 = vmatprep.subr.mxu0 0.0
      %3466 = vmatpush1.msra.mxu0 0.0
      %3467 = vmatprep.subr.mxu0 0.0
      %3468 = vmatpush1.msra.mxu0 0.0
      %3469 = vmatprep.subr.mxu0 0.0
      %3470 = vmatpush1.msra.mxu0 0.0
      %3471 = vmatprep.subr.mxu0 0.0
      %3472 = vmatpush1.msra.mxu0 0.0
      %3473 = vmatprep.subr.mxu0 0.0
      %3474 = vmatpush1.msra.mxu0 0.0
      %3475 = vmatprep.subr.mxu0 0.0
      %3476 = vmatpush1.msra.mxu0 0.0
      %3477 = vmatprep.subr.mxu0 0.0
      %3478 = vmatpush1.msra.mxu0 0.0
      %3479 = vmatprep.subr.mxu0 0.0
      %3480 = vmatpush1.msra.mxu0 0.0
      %3481 = vmatprep.subr.mxu0 0.0
      %3482 = vmatpush1.msra.mxu0 0.0
      %3483 = vmatprep.subr.mxu0 0.0
      %3484 = vmatpush1.msra.mxu0 0.0
      %3485 = vmatprep.subr.mxu0 0.0
      %3486 = vmatpush1.msra.mxu0 0.0
      %3487 = vmatprep.subr.mxu0 0.0
      %3488 = vmatpush1.msra.mxu0 0.0
      %3489 = vmatprep.subr.mxu0 0.0
      %3490 = vmatpush1.msra.mxu0 0.0
      %3491 = vmatprep.subr.mxu0 0.0
      %3492 = vmatpush1.msra.mxu0 0.0
      %3493 = vmatprep.subr.mxu0 0.0
      %3494 = vmatpush1.msra.mxu0 0.0
      %3495 = vmatprep.subr.mxu0 0.0
      %3496 = vmatpush1.msra.mxu0 0.0
      %3497 = vmatprep.subr.mxu0 0.0
      %3498 = vmatpush1.msra.mxu0 0.0
      %3499 = vmatprep.subr.mxu0 0.0
      %3500 = vmatpush1.msra.mxu0 0.0
      %3501 = vmatprep.subr.mxu0 0.0
      %3502 = vmatpush1.msra.mxu0 0.0
      %3503 = vmatprep.subr.mxu0 0.0
      %3504 = vmatpush1.msra.mxu0 0.0
      %3505 = vmatprep.subr.mxu0 0.0
      %3506 = vmatpush1.msra.mxu0 0.0
      %3507 = vmatprep.subr.mxu0 0.0
      %3508 = vmatpush1.msra.mxu0 0.0
      %3509 = vmatprep.subr.mxu0 0.0
      %3510 = vmatpush1.msra.mxu0 0.0
      %3511 = vmatprep.subr.mxu0 0.0
      %3512 = vmatpush1.msra.mxu0 0.0
      %3513 = vmatprep.subr.mxu0 0.0
      %3514 = vmatpush1.msra.mxu0 0.0
      %3515 = vmatprep.subr.mxu0 0.0
      %3516 = vmatpush1.msra.mxu0 0.0
      %3517 = vmatprep.subr.mxu0 0.0
      %3518 = vmatpush1.msra.mxu0 0.0
      %3519 = vmatprep.mubr.f32.mxu0 0.0
      %3520 = vmatmul.mubr.f32.gmra.mrb[0].mxu0 %v3357
      %v3521 = vpop.f32.mrb[0].mxu0
      %v3522 = vadd.f32 0.0, %v3521
      %v3523 = vpop.f32.mrb[0].mxu0
      %3524 = vmatprep.mubr.f32.mxu0 0.0
      %3525 = vmatmul.mubr.f32.gmra.mrb[0].mxu0 %v3360
      %v3526 = vpop.f32.mrb[0].mxu0
      %v3527 = vadd.f32 0.0, %v3526
      %v3528 = vpop.f32.mrb[0].mxu0
      %3529 = vmatprep.mubr.f32.mxu0 0.0
      %3530 = vmatmul.mubr.f32.gmra.mrb[0].mxu0 %v3363
      %v3531 = vpop.f32.mrb[0].mxu0
      %v3532 = vadd.f32 0.0, %v3531
      %v3533 = vpop.f32.mrb[0].mxu0
      %3534 = vmatprep.mubr.f32.mxu0 0.0
      %3535 = vmatmul.mubr.f32.gmra.mrb[0].mxu0 %v3366
      %v3536 = vpop.f32.mrb[0].mxu0
      %v3537 = vadd.f32 0.0, %v3536
      %v3538 = vpop.f32.mrb[0].mxu0
      %3539 = vmatprep.mubr.f32.mxu0 0.0
      %3540 = vmatmul.mubr.f32.gmra.mrb[0].mxu0 %v3369
      %v3541 = vpop.f32.mrb[0].mxu0
      %v3542 = vadd.f32 0.0, %v3541
      %v3543 = vpop.f32.mrb[0].mxu0
      %3544 = vmatprep.mubr.f32.mxu0 0.0
      %3545 = vmatmul.mubr.f32.gmra.mrb[0].mxu0 %v3372
      %v3546 = vpop.f32.mrb[0].mxu0
      %v3547 = vadd.f32 0.0, %v3546
      %v3548 = vpop.f32.mrb[0].mxu0
      %3549 = vmatprep.mubr.f32.mxu0 0.0
      %3550 = vmatmul.mubr.f32.gmra.mrb[0].mxu0 %v3375
      %v3551 = vpop.f32.mrb[0].mxu0
      %v3552 = vadd.f32 0.0, %v3551
      %v3553 = vpop.f32.mrb[0].mxu0
      %3554 = vmatprep.mubr.f32.mxu0 0.0
      %3555 = vmatmul.mubr.f32.gmra.mrb[0].mxu0 %v3378
      %v3556 = vpop.f32.mrb[0].mxu0
      %v3557 = vadd.f32 0.0, %v3556
      %v3558 = vpop.f32.mrb[0].mxu0
      %3559 = vmatprep.mubr.f32.mxu0 0.0
      %3560 = vmatmul.mubr.f32.gmra.mrb[0].mxu0 %v3381
      %v3561 = vpop.f32.mrb[0].mxu0
      %v3562 = vadd.f32 0.0, %v3561
      %v3563 = vpop.f32.mrb[0].mxu0
      %3564 = vmatprep.mubr.f32.mxu0 0.0
      %3565 = vmatmul.mubr.f32.gmra.mrb[0].mxu0 %v3384
      %v3566 = vpop.f32.mrb[0].mxu0
      %v3567 = vadd.f32 0.0, %v3566
      %v3568 = vpop.f32.mrb[0].mxu0
      %3569 = vmatprep.mubr.f32.mxu0 0.0
      %3570 = vmatmul.mubr.f32.gmra.mrb[0].mxu0 %v3387
      %v3571 = vpop.f32.mrb[0].mxu0
      %v3572 = vadd.f32 0.0, %v3571
      %v3573 = vpop.f32.mrb[0].mxu0
      %3574 = vmatprep.mubr.f32.mxu0 0.0
      %3575 = vmatmul.mubr.f32.gmra.mrb[0].mxu0 %v3390
      %v3576 = vpop.f32.mrb[0].mxu0
      %v3577 = vadd.f32 0.0, %v3576
      %v3578 = vpop.f32.mrb[0].mxu0
      %3579 = vmatprep.mubr.f32.mxu0 0.0
      %3580 = vmatmul.mubr.f32.gmra.mrb[0].mxu0 %v3393
      %v3581 = vpop.f32.mrb[0].mxu0
      %v3582 = vadd.f32 0.0, %v3581
      %v3583 = vpop.f32.mrb[0].mxu0
      %3584 = vmatprep.mubr.f32.mxu0 0.0
      %3585 = vmatmul.mubr.f32.gmra.mrb[0].mxu0 %v3396
      %v3586 = vpop.f32.mrb[0].mxu0
      %v3587 = vadd.f32 0.0, %v3586
      %v3588 = vpop.f32.mrb[0].mxu0
      %3589 = vmatprep.mubr.f32.mxu0 0.0
      %3590 = vmatmul.mubr.f32.gmra.mrb[0].mxu0 %v3399
      %v3591 = vpop.f32.mrb[0].mxu0
      %v3592 = vadd.f32 0.0, %v3591
      %v3593 = vpop.f32.mrb[0].mxu0
      %3594 = vmatprep.mubr.f32.mxu0 0.0
      %3595 = vmatmul.mubr.f32.gmra.mrb[0].mxu0 %v3402
      %v3596 = vpop.f32.mrb[0].mxu0
      %v3597 = vadd.f32 0.0, %v3596
      %v3598 = vpop.f32.mrb[0].mxu0
      %3599 = vmatprep.mubr.f32.mxu0 0.0
      %3600 = vmatmul.mubr.f32.gmra.mrb[0].mxu0 %v3405
      %v3601 = vpop.f32.mrb[0].mxu0
      %v3602 = vadd.f32 0.0, %v3601
      %v3603 = vpop.f32.mrb[0].mxu0
      %3604 = vmatprep.mubr.f32.mxu0 0.0
      %3605 = vmatmul.mubr.f32.gmra.mrb[0].mxu0 %v3408
      %v3606 = vpop.f32.mrb[0].mxu0
      %v3607 = vadd.f32 0.0, %v3606
      %v3608 = vpop.f32.mrb[0].mxu0
      %3609 = vmatprep.mubr.f32.mxu0 0.0
      %3610 = vmatmul.mubr.f32.gmra.mrb[0].mxu0 %v3411
      %v3611 = vpop.f32.mrb[0].mxu0
      %v3612 = vadd.f32 0.0, %v3611
      %v3613 = vpop.f32.mrb[0].mxu0
      %3614 = vmatprep.mubr.f32.mxu0 0.0
      %3615 = vmatmul.mubr.f32.gmra.mrb[0].mxu0 %v3414
      %v3616 = vpop.f32.mrb[0].mxu0
      %v3617 = vadd.f32 0.0, %v3616
      %v3618 = vpop.f32.mrb[0].mxu0
      %3619 = vmatprep.mubr.f32.mxu0 0.0
      %3620 = vmatmul.mubr.f32.gmra.mrb[0].mxu0 %v3417
      %v3621 = vpop.f32.mrb[0].mxu0
      %v3622 = vadd.f32 0.0, %v3621
      %v3623 = vpop.f32.mrb[0].mxu0
      %3624 = vmatprep.mubr.f32.mxu0 0.0
      %3625 = vmatmul.mubr.f32.gmra.mrb[0].mxu0 %v3420
      %v3626 = vpop.f32.mrb[0].mxu0
      %v3627 = vadd.f32 0.0, %v3626
      %v3628 = vpop.f32.mrb[0].mxu0
      %3629 = vmatprep.mubr.f32.mxu0 0.0
      %3630 = vmatmul.mubr.f32.gmra.mrb[0].mxu0 %v3423
      %v3631 = vpop.f32.mrb[0].mxu0
      %v3632 = vadd.f32 0.0, %v3631
      %v3633 = vpop.f32.mrb[0].mxu0
      %3634 = vmatprep.mubr.f32.mxu0 0.0
      %3635 = vmatmul.mubr.f32.gmra.mrb[0].mxu0 %v3426
      %v3636 = vpop.f32.mrb[0].mxu0
      %v3637 = vadd.f32 0.0, %v3636
      %v3638 = vpop.f32.mrb[0].mxu0
      %3639 = vmatprep.mubr.f32.mxu0 0.0
      %3640 = vmatmul.mubr.f32.gmra.mrb[0].mxu0 %v3429
      %v3641 = vpop.f32.mrb[0].mxu0
      %v3642 = vadd.f32 0.0, %v3641
      %v3643 = vpop.f32.mrb[0].mxu0
      %3644 = vmatprep.mubr.f32.mxu0 0.0
      %3645 = vmatmul.mubr.f32.gmra.mrb[0].mxu0 %v3432
      %v3646 = vpop.f32.mrb[0].mxu0
      %v3647 = vadd.f32 0.0, %v3646
      %v3648 = vpop.f32.mrb[0].mxu0
      %3649 = vmatprep.mubr.f32.mxu0 0.0
      %3650 = vmatmul.mubr.f32.gmra.mrb[0].mxu0 %v3435
      %v3651 = vpop.f32.mrb[0].mxu0
      %v3652 = vadd.f32 0.0, %v3651
      %v3653 = vpop.f32.mrb[0].mxu0
      %3654 = vmatprep.mubr.f32.mxu0 0.0
      %3655 = vmatmul.mubr.f32.gmra.mrb[0].mxu0 %v3438
      %v3656 = vpop.f32.mrb[0].mxu0
      %v3657 = vadd.f32 0.0, %v3656
      %v3658 = vpop.f32.mrb[0].mxu0
      %3659 = vmatprep.mubr.f32.mxu0 0.0
      %3660 = vmatmul.mubr.f32.gmra.mrb[0].mxu0 %v3441
      %v3661 = vpop.f32.mrb[0].mxu0
      %v3662 = vadd.f32 0.0, %v3661
      %v3663 = vpop.f32.mrb[0].mxu0
      %3664 = vmatprep.mubr.f32.mxu0 0.0
      %3665 = vmatmul.mubr.f32.gmra.mrb[0].mxu0 %v3444
      %v3666 = vpop.f32.mrb[0].mxu0
      %v3667 = vadd.f32 0.0, %v3666
      %v3668 = vpop.f32.mrb[0].mxu0
      %3669 = vmatprep.mubr.f32.mxu0 0.0
      %3670 = vmatmul.mubr.f32.gmra.mrb[0].mxu0 %v3447
      %v3671 = vpop.f32.mrb[0].mxu0
      %v3672 = vadd.f32 0.0, %v3671
      %v3673 = vpop.f32.mrb[0].mxu0
      %3674 = vmatprep.mubr.f32.mxu0 0.0
      %3675 = vmatmul.mubr.f32.gmra.mrb[0].mxu0 %v3450
      %v3676 = vpop.f32.mrb[0].mxu0
      %v3677 = vadd.f32 0.0, %v3676
      %v3678 = vpop.f32.mrb[0].mxu0
      %3679 = vdwg.mxu0
      %v3680 = vld [vmem:[#allocation4] sm:$0xff]
      %v3681 = vld [vmem:[#allocation4 + $0x8] sm:$0xff]
      %v3682 = vld [vmem:[#allocation4 + $0x10] sm:$0xff]
      %v3683 = vld [vmem:[#allocation4 + $0x18] sm:$0xff]
      %v3684 = vld [vmem:[#allocation4 + $0x20] sm:$0xff]
      %v3685 = vld [vmem:[#allocation4 + $0x28] sm:$0xff]
      %v3686 = vld [vmem:[#allocation4 + $0x30] sm:$0xff]
      %v3687 = vld [vmem:[#allocation4 + $0x38] sm:$0xff]
      %v3688 = vld [vmem:[#allocation4 + $0x40] sm:$0xff]
      %v3689 = vld [vmem:[#allocation4 + $0x48] sm:$0xff]
      %v3690 = vld [vmem:[#allocation4 + $0x50] sm:$0xff]
      %v3691 = vld [vmem:[#allocation4 + $0x58] sm:$0xff]
      %v3692 = vld [vmem:[#allocation4 + $0x60] sm:$0xff]
      %v3693 = vld [vmem:[#allocation4 + $0x68] sm:$0xff]
      %v3694 = vld [vmem:[#allocation4 + $0x70] sm:$0xff]
      %v3695 = vld [vmem:[#allocation4 + $0x78] sm:$0xff]
      %v3696 = vld [vmem:[#allocation4 + $0x80] sm:$0xff]
      %v3697 = vld [vmem:[#allocation4 + $0x88] sm:$0xff]
      %v3698 = vld [vmem:[#allocation4 + $0x90] sm:$0xff]
      %v3699 = vld [vmem:[#allocation4 + $0x98] sm:$0xff]
      %v3700 = vld [vmem:[#allocation4 + $0xa0] sm:$0xff]
      %v3701 = vld [vmem:[#allocation4 + $0xa8] sm:$0xff]
      %v3702 = vld [vmem:[#allocation4 + $0xb0] sm:$0xff]
      %v3703 = vld [vmem:[#allocation4 + $0xb8] sm:$0xff]
      %v3704 = vld [vmem:[#allocation4 + $0xc0] sm:$0xff]
      %v3705 = vld [vmem:[#allocation4 + $0xc8] sm:$0xff]
      %v3706 = vld [vmem:[#allocation4 + $0xd0] sm:$0xff]
      %v3707 = vld [vmem:[#allocation4 + $0xd8] sm:$0xff]
      %v3708 = vld [vmem:[#allocation4 + $0xe0] sm:$0xff]
      %v3709 = vld [vmem:[#allocation4 + $0xe8] sm:$0xff]
      %v3710 = vld [vmem:[#allocation4 + $0xf0] sm:$0xff]
      %v3711 = vld [vmem:[#allocation4 + $0xf8] sm:$0xff]
      %v3712 = vadd.f32 %v3680, %v3522
      %v3713 = vadd.f32 %v3681, %v3527
      %v3714 = vadd.f32 %v3682, %v3532
      %v3715 = vadd.f32 %v3683, %v3537
      %v3716 = vadd.f32 %v3684, %v3542
      %v3717 = vadd.f32 %v3685, %v3547
      %v3718 = vadd.f32 %v3686, %v3552
      %v3719 = vadd.f32 %v3687, %v3557
      %v3720 = vadd.f32 %v3688, %v3562
      %v3721 = vadd.f32 %v3689, %v3567
      %v3722 = vadd.f32 %v3690, %v3572
      %v3723 = vadd.f32 %v3691, %v3577
      %v3724 = vadd.f32 %v3692, %v3582
      %v3725 = vadd.f32 %v3693, %v3587
      %v3726 = vadd.f32 %v3694, %v3592
      %v3727 = vadd.f32 %v3695, %v3597
      %v3728 = vadd.f32 %v3696, %v3602
      %v3729 = vadd.f32 %v3697, %v3607
      %v3730 = vadd.f32 %v3698, %v3612
      %v3731 = vadd.f32 %v3699, %v3617
      %v3732 = vadd.f32 %v3700, %v3622
      %v3733 = vadd.f32 %v3701, %v3627
      %v3734 = vadd.f32 %v3702, %v3632
      %v3735 = vadd.f32 %v3703, %v3637
      %v3736 = vadd.f32 %v3704, %v3642
      %v3737 = vadd.f32 %v3705, %v3647
      %v3738 = vadd.f32 %v3706, %v3652
      %v3739 = vadd.f32 %v3707, %v3657
      %v3740 = vadd.f32 %v3708, %v3662
      %v3741 = vadd.f32 %v3709, %v3667
      %v3742 = vadd.f32 %v3710, %v3672
      %v3743 = vadd.f32 %v3711, %v3677
      %3744 = vst.msk [vmem:[#allocation4] sm:$0xff] %vm171, %v3712
      %3745 = vst.msk [vmem:[#allocation4 + $0x8] sm:$0xff] %vm171, %v3713
      %3746 = vst.msk [vmem:[#allocation4 + $0x10] sm:$0xff] %vm171, %v3714
      %3747 = vst.msk [vmem:[#allocation4 + $0x18] sm:$0xff] %vm171, %v3715
      %3748 = vst.msk [vmem:[#allocation4 + $0x20] sm:$0xff] %vm171, %v3716
      %3749 = vst.msk [vmem:[#allocation4 + $0x28] sm:$0xff] %vm171, %v3717
      %3750 = vst.msk [vmem:[#allocation4 + $0x30] sm:$0xff] %vm171, %v3718
      %3751 = vst.msk [vmem:[#allocation4 + $0x38] sm:$0xff] %vm171, %v3719
      %3752 = vst.msk [vmem:[#allocation4 + $0x40] sm:$0xff] %vm171, %v3720
      %3753 = vst.msk [vmem:[#allocation4 + $0x48] sm:$0xff] %vm171, %v3721
      %3754 = vst.msk [vmem:[#allocation4 + $0x50] sm:$0xff] %vm171, %v3722
      %3755 = vst.msk [vmem:[#allocation4 + $0x58] sm:$0xff] %vm171, %v3723
      %3756 = vst.msk [vmem:[#allocation4 + $0x60] sm:$0xff] %vm171, %v3724
      %3757 = vst.msk [vmem:[#allocation4 + $0x68] sm:$0xff] %vm171, %v3725
      %3758 = vst.msk [vmem:[#allocation4 + $0x70] sm:$0xff] %vm171, %v3726
      %3759 = vst.msk [vmem:[#allocation4 + $0x78] sm:$0xff] %vm171, %v3727
      %3760 = vst.msk [vmem:[#allocation4 + $0x80] sm:$0xff] %vm171, %v3728
      %3761 = vst.msk [vmem:[#allocation4 + $0x88] sm:$0xff] %vm171, %v3729
      %3762 = vst.msk [vmem:[#allocation4 + $0x90] sm:$0xff] %vm171, %v3730
      %3763 = vst.msk [vmem:[#allocation4 + $0x98] sm:$0xff] %vm171, %v3731
      %3764 = vst.msk [vmem:[#allocation4 + $0xa0] sm:$0xff] %vm171, %v3732
      %3765 = vst.msk [vmem:[#allocation4 + $0xa8] sm:$0xff] %vm171, %v3733
      %3766 = vst.msk [vmem:[#allocation4 + $0xb0] sm:$0xff] %vm171, %v3734
      %3767 = vst.msk [vmem:[#allocation4 + $0xb8] sm:$0xff] %vm171, %v3735
      %3768 = vst.msk [vmem:[#allocation4 + $0xc0] sm:$0xff] %vm171, %v3736
      %3769 = vst.msk [vmem:[#allocation4 + $0xc8] sm:$0xff] %vm171, %v3737
      %3770 = vst.msk [vmem:[#allocation4 + $0xd0] sm:$0xff] %vm171, %v3738
      %3771 = vst.msk [vmem:[#allocation4 + $0xd8] sm:$0xff] %vm171, %v3739
      %3772 = vst.msk [vmem:[#allocation4 + $0xe0] sm:$0xff] %vm171, %v3740
      %3773 = vst.msk [vmem:[#allocation4 + $0xe8] sm:$0xff] %vm171, %v3741
      %3774 = vst.msk [vmem:[#allocation4 + $0xf0] sm:$0xff] %vm171, %v3742
      %3775 = vst.msk [vmem:[#allocation4 + $0xf8] sm:$0xff] %vm171, %v3743
      %v3776 = vld [vmem:[%s1635] sm:$0xff]
      %v3777 = vld [vmem:[%s1635 + $0x8] sm:$0xff]
      %v3778 = vld [vmem:[%s1635 + $0x10] sm:$0xff]
      %v3779 = vld [vmem:[%s1635 + $0x18] sm:$0xff]
      %v3780 = vld [vmem:[%s1635 + $0x20] sm:$0xff]
      %v3781 = vld [vmem:[%s1635 + $0x28] sm:$0xff]
      %v3782 = vld [vmem:[%s1635 + $0x30] sm:$0xff]
      %v3783 = vld [vmem:[%s1635 + $0x38] sm:$0xff]
      %v3784 = vld [vmem:[%s1635 + $0x40] sm:$0xff]
      %v3785 = vld [vmem:[%s1635 + $0x48] sm:$0xff]
      %v3786 = vld [vmem:[%s1635 + $0x50] sm:$0xff]
      %v3787 = vld [vmem:[%s1635 + $0x58] sm:$0xff]
      %v3788 = vld [vmem:[%s1635 + $0x60] sm:$0xff]
      %v3789 = vld [vmem:[%s1635 + $0x68] sm:$0xff]
      %v3790 = vld [vmem:[%s1635 + $0x70] sm:$0xff]
      %v3791 = vld [vmem:[%s1635 + $0x78] sm:$0xff]
      %v3792 = vld [vmem:[%s1635 + $0x80] sm:$0xff]
      %v3793 = vld [vmem:[%s1635 + $0x88] sm:$0xff]
      %v3794 = vld [vmem:[%s1635 + $0x90] sm:$0xff]
      %v3795 = vld [vmem:[%s1635 + $0x98] sm:$0xff]
      %v3796 = vld [vmem:[%s1635 + $0xa0] sm:$0xff]
      %v3797 = vld [vmem:[%s1635 + $0xa8] sm:$0xff]
      %v3798 = vld [vmem:[%s1635 + $0xb0] sm:$0xff]
      %v3799 = vld [vmem:[%s1635 + $0xb8] sm:$0xff]
      %v3800 = vld [vmem:[%s1635 + $0xc0] sm:$0xff]
      %v3801 = vld [vmem:[%s1635 + $0xc8] sm:$0xff]
      %v3802 = vld [vmem:[%s1635 + $0xd0] sm:$0xff]
      %v3803 = vld [vmem:[%s1635 + $0xd8] sm:$0xff]
      %v3804 = vld [vmem:[%s1635 + $0xe0] sm:$0xff]
      %v3805 = vld [vmem:[%s1635 + $0xe8] sm:$0xff]
      %v3806 = vld [vmem:[%s1635 + $0xf0] sm:$0xff]
      %v3807 = vld [vmem:[%s1635 + $0xf8] sm:$0xff]
      %s3808 = scalar_lea.vmem %s2, 32
      %v3809 = vld [vmem:[%s3808] sm:$0xff]
      %v3810 = vld [vmem:[%s3808 + $0x8] sm:$0xf]
      %v3812 = vsel %vm751, %v3776, 0
      %v3815 = vsel %vm751, %v3777, 0
      %v3818 = vsel %vm751, %v3778, 0
      %v3821 = vsel %vm751, %v3779, 0
      %v3824 = vsel %vm751, %v3780, 0
      %v3827 = vsel %vm751, %v3781, 0
      %v3830 = vsel %vm751, %v3782, 0
      %v3833 = vsel %vm751, %v3783, 0
      %v3836 = vsel %vm751, %v3784, 0
      %v3839 = vsel %vm751, %v3785, 0
      %v3842 = vsel %vm751, %v3786, 0
      %v3845 = vsel %vm751, %v3787, 0
      %v3848 = vsel %vm751, %v3788, 0
      %v3851 = vsel %vm751, %v3789, 0
      %v3854 = vsel %vm751, %v3790, 0
      %v3857 = vsel %vm751, %v3791, 0
      %v3860 = vsel %vm751, %v3792, 0
      %v3863 = vsel %vm751, %v3793, 0
      %v3866 = vsel %vm751, %v3794, 0
      %v3869 = vsel %vm751, %v3795, 0
      %v3872 = vsel %vm751, %v3796, 0
      %v3875 = vsel %vm751, %v3797, 0
      %v3878 = vsel %vm751, %v3798, 0
      %v3881 = vsel %vm751, %v3799, 0
      %v3884 = vsel %vm751, %v3800, 0
      %v3887 = vsel %vm751, %v3801, 0
      %v3890 = vsel %vm751, %v3802, 0
      %v3893 = vsel %vm751, %v3803, 0
      %v3896 = vsel %vm751, %v3804, 0
      %v3899 = vsel %vm751, %v3805, 0
      %v3902 = vsel %vm751, %v3806, 0
      %v3905 = vsel %vm751, %v3807, 0
      %v3908 = vsel %vm918, %v3810, 0
      %3910 = vmatprep.subr.mxu0 0.0
      %3911 = vmatpush1.msra.mxu0 %v3809
      %3912 = vmatprep.subr.mxu0 0.0
      %3913 = vmatpush1.msra.mxu0 %v3908
      %3914 = vmatprep.subr.mxu0 0.0
      %3915 = vmatpush1.msra.mxu0 0.0
      %3916 = vmatprep.subr.mxu0 0.0
      %3917 = vmatpush1.msra.mxu0 0.0
      %3918 = vmatprep.subr.mxu0 0.0
      %3919 = vmatpush1.msra.mxu0 0.0
      %3920 = vmatprep.subr.mxu0 0.0
      %3921 = vmatpush1.msra.mxu0 0.0
      %3922 = vmatprep.subr.mxu0 0.0
      %3923 = vmatpush1.msra.mxu0 0.0
      %3924 = vmatprep.subr.mxu0 0.0
      %3925 = vmatpush1.msra.mxu0 0.0
      %3926 = vmatprep.subr.mxu0 0.0
      %3927 = vmatpush1.msra.mxu0 0.0
      %3928 = vmatprep.subr.mxu0 0.0
      %3929 = vmatpush1.msra.mxu0 0.0
      %3930 = vmatprep.subr.mxu0 0.0
      %3931 = vmatpush1.msra.mxu0 0.0
      %3932 = vmatprep.subr.mxu0 0.0
      %3933 = vmatpush1.msra.mxu0 0.0
      %3934 = vmatprep.subr.mxu0 0.0
      %3935 = vmatpush1.msra.mxu0 0.0
      %3936 = vmatprep.subr.mxu0 0.0
      %3937 = vmatpush1.msra.mxu0 0.0
      %3938 = vmatprep.subr.mxu0 0.0
      %3939 = vmatpush1.msra.mxu0 0.0
      %3940 = vmatprep.subr.mxu0 0.0
      %3941 = vmatpush1.msra.mxu0 0.0
      %3942 = vmatprep.subr.mxu0 0.0
      %3943 = vmatpush1.msra.mxu0 0.0
      %3944 = vmatprep.subr.mxu0 0.0
      %3945 = vmatpush1.msra.mxu0 0.0
      %3946 = vmatprep.subr.mxu0 0.0
      %3947 = vmatpush1.msra.mxu0 0.0
      %3948 = vmatprep.subr.mxu0 0.0
      %3949 = vmatpush1.msra.mxu0 0.0
      %3950 = vmatprep.subr.mxu0 0.0
      %3951 = vmatpush1.msra.mxu0 0.0
      %3952 = vmatprep.subr.mxu0 0.0
      %3953 = vmatpush1.msra.mxu0 0.0
      %3954 = vmatprep.subr.mxu0 0.0
      %3955 = vmatpush1.msra.mxu0 0.0
      %3956 = vmatprep.subr.mxu0 0.0
      %3957 = vmatpush1.msra.mxu0 0.0
      %3958 = vmatprep.subr.mxu0 0.0
      %3959 = vmatpush1.msra.mxu0 0.0
      %3960 = vmatprep.subr.mxu0 0.0
      %3961 = vmatpush1.msra.mxu0 0.0
      %3962 = vmatprep.subr.mxu0 0.0
      %3963 = vmatpush1.msra.mxu0 0.0
      %3964 = vmatprep.subr.mxu0 0.0
      %3965 = vmatpush1.msra.mxu0 0.0
      %3966 = vmatprep.subr.mxu0 0.0
      %3967 = vmatpush1.msra.mxu0 0.0
      %3968 = vmatprep.subr.mxu0 0.0
      %3969 = vmatpush1.msra.mxu0 0.0
      %3970 = vmatprep.subr.mxu0 0.0
      %3971 = vmatpush1.msra.mxu0 0.0
      %3972 = vmatprep.subr.mxu0 0.0
      %3973 = vmatpush1.msra.mxu0 0.0
      %3974 = vmatprep.mubr.f32.mxu0 0.0
      %3975 = vmatmul.mubr.f32.gmra.mrb[0].mxu0 %v3812
      %v3976 = vpop.f32.mrb[0].mxu0
      %v3977 = vadd.f32 0.0, %v3976
      %v3978 = vpop.f32.mrb[0].mxu0
      %3979 = vmatprep.mubr.f32.mxu0 0.0
      %3980 = vmatmul.mubr.f32.gmra.mrb[0].mxu0 %v3815
      %v3981 = vpop.f32.mrb[0].mxu0
      %v3982 = vadd.f32 0.0, %v3981
      %v3983 = vpop.f32.mrb[0].mxu0
      %3984 = vmatprep.mubr.f32.mxu0 0.0
      %3985 = vmatmul.mubr.f32.gmra.mrb[0].mxu0 %v3818
      %v3986 = vpop.f32.mrb[0].mxu0
      %v3987 = vadd.f32 0.0, %v3986
      %v3988 = vpop.f32.mrb[0].mxu0
      %3989 = vmatprep.mubr.f32.mxu0 0.0
      %3990 = vmatmul.mubr.f32.gmra.mrb[0].mxu0 %v3821
      %v3991 = vpop.f32.mrb[0].mxu0
      %v3992 = vadd.f32 0.0, %v3991
      %v3993 = vpop.f32.mrb[0].mxu0
      %3994 = vmatprep.mubr.f32.mxu0 0.0
      %3995 = vmatmul.mubr.f32.gmra.mrb[0].mxu0 %v3824
      %v3996 = vpop.f32.mrb[0].mxu0
      %v3997 = vadd.f32 0.0, %v3996
      %v3998 = vpop.f32.mrb[0].mxu0
      %3999 = vmatprep.mubr.f32.mxu0 0.0
      %4000 = vmatmul.mubr.f32.gmra.mrb[0].mxu0 %v3827
      %v4001 = vpop.f32.mrb[0].mxu0
      %v4002 = vadd.f32 0.0, %v4001
      %v4003 = vpop.f32.mrb[0].mxu0
      %4004 = vmatprep.mubr.f32.mxu0 0.0
      %4005 = vmatmul.mubr.f32.gmra.mrb[0].mxu0 %v3830
      %v4006 = vpop.f32.mrb[0].mxu0
      %v4007 = vadd.f32 0.0, %v4006
      %v4008 = vpop.f32.mrb[0].mxu0
      %4009 = vmatprep.mubr.f32.mxu0 0.0
      %4010 = vmatmul.mubr.f32.gmra.mrb[0].mxu0 %v3833
      %v4011 = vpop.f32.mrb[0].mxu0
      %v4012 = vadd.f32 0.0, %v4011
      %v4013 = vpop.f32.mrb[0].mxu0
      %4014 = vmatprep.mubr.f32.mxu0 0.0
      %4015 = vmatmul.mubr.f32.gmra.mrb[0].mxu0 %v3836
      %v4016 = vpop.f32.mrb[0].mxu0
      %v4017 = vadd.f32 0.0, %v4016
      %v4018 = vpop.f32.mrb[0].mxu0
      %4019 = vmatprep.mubr.f32.mxu0 0.0
      %4020 = vmatmul.mubr.f32.gmra.mrb[0].mxu0 %v3839
      %v4021 = vpop.f32.mrb[0].mxu0
      %v4022 = vadd.f32 0.0, %v4021
      %v4023 = vpop.f32.mrb[0].mxu0
      %4024 = vmatprep.mubr.f32.mxu0 0.0
      %4025 = vmatmul.mubr.f32.gmra.mrb[0].mxu0 %v3842
      %v4026 = vpop.f32.mrb[0].mxu0
      %v4027 = vadd.f32 0.0, %v4026
      %v4028 = vpop.f32.mrb[0].mxu0
      %4029 = vmatprep.mubr.f32.mxu0 0.0
      %4030 = vmatmul.mubr.f32.gmra.mrb[0].mxu0 %v3845
      %v4031 = vpop.f32.mrb[0].mxu0
      %v4032 = vadd.f32 0.0, %v4031
      %v4033 = vpop.f32.mrb[0].mxu0
      %4034 = vmatprep.mubr.f32.mxu0 0.0
      %4035 = vmatmul.mubr.f32.gmra.mrb[0].mxu0 %v3848
      %v4036 = vpop.f32.mrb[0].mxu0
      %v4037 = vadd.f32 0.0, %v4036
      %v4038 = vpop.f32.mrb[0].mxu0
      %4039 = vmatprep.mubr.f32.mxu0 0.0
      %4040 = vmatmul.mubr.f32.gmra.mrb[0].mxu0 %v3851
      %v4041 = vpop.f32.mrb[0].mxu0
      %v4042 = vadd.f32 0.0, %v4041
      %v4043 = vpop.f32.mrb[0].mxu0
      %4044 = vmatprep.mubr.f32.mxu0 0.0
      %4045 = vmatmul.mubr.f32.gmra.mrb[0].mxu0 %v3854
      %v4046 = vpop.f32.mrb[0].mxu0
      %v4047 = vadd.f32 0.0, %v4046
      %v4048 = vpop.f32.mrb[0].mxu0
      %4049 = vmatprep.mubr.f32.mxu0 0.0
      %4050 = vmatmul.mubr.f32.gmra.mrb[0].mxu0 %v3857
      %v4051 = vpop.f32.mrb[0].mxu0
      %v4052 = vadd.f32 0.0, %v4051
      %v4053 = vpop.f32.mrb[0].mxu0
      %4054 = vmatprep.mubr.f32.mxu0 0.0
      %4055 = vmatmul.mubr.f32.gmra.mrb[0].mxu0 %v3860
      %v4056 = vpop.f32.mrb[0].mxu0
      %v4057 = vadd.f32 0.0, %v4056
      %v4058 = vpop.f32.mrb[0].mxu0
      %4059 = vmatprep.mubr.f32.mxu0 0.0
      %4060 = vmatmul.mubr.f32.gmra.mrb[0].mxu0 %v3863
      %v4061 = vpop.f32.mrb[0].mxu0
      %v4062 = vadd.f32 0.0, %v4061
      %v4063 = vpop.f32.mrb[0].mxu0
      %4064 = vmatprep.mubr.f32.mxu0 0.0
      %4065 = vmatmul.mubr.f32.gmra.mrb[0].mxu0 %v3866
      %v4066 = vpop.f32.mrb[0].mxu0
      %v4067 = vadd.f32 0.0, %v4066
      %v4068 = vpop.f32.mrb[0].mxu0
      %4069 = vmatprep.mubr.f32.mxu0 0.0
      %4070 = vmatmul.mubr.f32.gmra.mrb[0].mxu0 %v3869
      %v4071 = vpop.f32.mrb[0].mxu0
      %v4072 = vadd.f32 0.0, %v4071
      %v4073 = vpop.f32.mrb[0].mxu0
      %4074 = vmatprep.mubr.f32.mxu0 0.0
      %4075 = vmatmul.mubr.f32.gmra.mrb[0].mxu0 %v3872
      %v4076 = vpop.f32.mrb[0].mxu0
      %v4077 = vadd.f32 0.0, %v4076
      %v4078 = vpop.f32.mrb[0].mxu0
      %4079 = vmatprep.mubr.f32.mxu0 0.0
      %4080 = vmatmul.mubr.f32.gmra.mrb[0].mxu0 %v3875
      %v4081 = vpop.f32.mrb[0].mxu0
      %v4082 = vadd.f32 0.0, %v4081
      %v4083 = vpop.f32.mrb[0].mxu0
      %4084 = vmatprep.mubr.f32.mxu0 0.0
      %4085 = vmatmul.mubr.f32.gmra.mrb[0].mxu0 %v3878
      %v4086 = vpop.f32.mrb[0].mxu0
      %v4087 = vadd.f32 0.0, %v4086
      %v4088 = vpop.f32.mrb[0].mxu0
      %4089 = vmatprep.mubr.f32.mxu0 0.0
      %4090 = vmatmul.mubr.f32.gmra.mrb[0].mxu0 %v3881
      %v4091 = vpop.f32.mrb[0].mxu0
      %v4092 = vadd.f32 0.0, %v4091
      %v4093 = vpop.f32.mrb[0].mxu0
      %4094 = vmatprep.mubr.f32.mxu0 0.0
      %4095 = vmatmul.mubr.f32.gmra.mrb[0].mxu0 %v3884
      %v4096 = vpop.f32.mrb[0].mxu0
      %v4097 = vadd.f32 0.0, %v4096
      %v4098 = vpop.f32.mrb[0].mxu0
      %4099 = vmatprep.mubr.f32.mxu0 0.0
      %4100 = vmatmul.mubr.f32.gmra.mrb[0].mxu0 %v3887
      %v4101 = vpop.f32.mrb[0].mxu0
      %v4102 = vadd.f32 0.0, %v4101
      %v4103 = vpop.f32.mrb[0].mxu0
      %4104 = vmatprep.mubr.f32.mxu0 0.0
      %4105 = vmatmul.mubr.f32.gmra.mrb[0].mxu0 %v3890
      %v4106 = vpop.f32.mrb[0].mxu0
      %v4107 = vadd.f32 0.0, %v4106
      %v4108 = vpop.f32.mrb[0].mxu0
      %4109 = vmatprep.mubr.f32.mxu0 0.0
      %4110 = vmatmul.mubr.f32.gmra.mrb[0].mxu0 %v3893
      %v4111 = vpop.f32.mrb[0].mxu0
      %v4112 = vadd.f32 0.0, %v4111
      %v4113 = vpop.f32.mrb[0].mxu0
      %4114 = vmatprep.mubr.f32.mxu0 0.0
      %4115 = vmatmul.mubr.f32.gmra.mrb[0].mxu0 %v3896
      %v4116 = vpop.f32.mrb[0].mxu0
      %v4117 = vadd.f32 0.0, %v4116
      %v4118 = vpop.f32.mrb[0].mxu0
      %4119 = vmatprep.mubr.f32.mxu0 0.0
      %4120 = vmatmul.mubr.f32.gmra.mrb[0].mxu0 %v3899
      %v4121 = vpop.f32.mrb[0].mxu0
      %v4122 = vadd.f32 0.0, %v4121
      %v4123 = vpop.f32.mrb[0].mxu0
      %4124 = vmatprep.mubr.f32.mxu0 0.0
      %4125 = vmatmul.mubr.f32.gmra.mrb[0].mxu0 %v3902
      %v4126 = vpop.f32.mrb[0].mxu0
      %v4127 = vadd.f32 0.0, %v4126
      %v4128 = vpop.f32.mrb[0].mxu0
      %4129 = vmatprep.mubr.f32.mxu0 0.0
      %4130 = vmatmul.mubr.f32.gmra.mrb[0].mxu0 %v3905
      %v4131 = vpop.f32.mrb[0].mxu0
      %v4132 = vadd.f32 0.0, %v4131
      %v4133 = vpop.f32.mrb[0].mxu0
      %4134 = vdwg.mxu0
      %v4135 = vld [vmem:[#allocation4] sm:$0xff]
      %v4136 = vld [vmem:[#allocation4 + $0x8] sm:$0xff]
      %v4137 = vld [vmem:[#allocation4 + $0x10] sm:$0xff]
      %v4138 = vld [vmem:[#allocation4 + $0x18] sm:$0xff]
      %v4139 = vld [vmem:[#allocation4 + $0x20] sm:$0xff]
      %v4140 = vld [vmem:[#allocation4 + $0x28] sm:$0xff]
      %v4141 = vld [vmem:[#allocation4 + $0x30] sm:$0xff]
      %v4142 = vld [vmem:[#allocation4 + $0x38] sm:$0xff]
      %v4143 = vld [vmem:[#allocation4 + $0x40] sm:$0xff]
      %v4144 = vld [vmem:[#allocation4 + $0x48] sm:$0xff]
      %v4145 = vld [vmem:[#allocation4 + $0x50] sm:$0xff]
      %v4146 = vld [vmem:[#allocation4 + $0x58] sm:$0xff]
      %v4147 = vld [vmem:[#allocation4 + $0x60] sm:$0xff]
      %v4148 = vld [vmem:[#allocation4 + $0x68] sm:$0xff]
      %v4149 = vld [vmem:[#allocation4 + $0x70] sm:$0xff]
      %v4150 = vld [vmem:[#allocation4 + $0x78] sm:$0xff]
      %v4151 = vld [vmem:[#allocation4 + $0x80] sm:$0xff]
      %v4152 = vld [vmem:[#allocation4 + $0x88] sm:$0xff]
      %v4153 = vld [vmem:[#allocation4 + $0x90] sm:$0xff]
      %v4154 = vld [vmem:[#allocation4 + $0x98] sm:$0xff]
      %v4155 = vld [vmem:[#allocation4 + $0xa0] sm:$0xff]
      %v4156 = vld [vmem:[#allocation4 + $0xa8] sm:$0xff]
      %v4157 = vld [vmem:[#allocation4 + $0xb0] sm:$0xff]
      %v4158 = vld [vmem:[#allocation4 + $0xb8] sm:$0xff]
      %v4159 = vld [vmem:[#allocation4 + $0xc0] sm:$0xff]
      %v4160 = vld [vmem:[#allocation4 + $0xc8] sm:$0xff]
      %v4161 = vld [vmem:[#allocation4 + $0xd0] sm:$0xff]
      %v4162 = vld [vmem:[#allocation4 + $0xd8] sm:$0xff]
      %v4163 = vld [vmem:[#allocation4 + $0xe0] sm:$0xff]
      %v4164 = vld [vmem:[#allocation4 + $0xe8] sm:$0xff]
      %v4165 = vld [vmem:[#allocation4 + $0xf0] sm:$0xff]
      %v4166 = vld [vmem:[#allocation4 + $0xf8] sm:$0xff]
      %v4167 = vadd.f32 %v4135, %v3977
      %v4168 = vadd.f32 %v4136, %v3982
      %v4169 = vadd.f32 %v4137, %v3987
      %v4170 = vadd.f32 %v4138, %v3992
      %v4171 = vadd.f32 %v4139, %v3997
      %v4172 = vadd.f32 %v4140, %v4002
      %v4173 = vadd.f32 %v4141, %v4007
      %v4174 = vadd.f32 %v4142, %v4012
      %v4175 = vadd.f32 %v4143, %v4017
      %v4176 = vadd.f32 %v4144, %v4022
      %v4177 = vadd.f32 %v4145, %v4027
      %v4178 = vadd.f32 %v4146, %v4032
      %v4179 = vadd.f32 %v4147, %v4037
      %v4180 = vadd.f32 %v4148, %v4042
      %v4181 = vadd.f32 %v4149, %v4047
      %v4182 = vadd.f32 %v4150, %v4052
      %v4183 = vadd.f32 %v4151, %v4057
      %v4184 = vadd.f32 %v4152, %v4062
      %v4185 = vadd.f32 %v4153, %v4067
      %v4186 = vadd.f32 %v4154, %v4072
      %v4187 = vadd.f32 %v4155, %v4077
      %v4188 = vadd.f32 %v4156, %v4082
      %v4189 = vadd.f32 %v4157, %v4087
      %v4190 = vadd.f32 %v4158, %v4092
      %v4191 = vadd.f32 %v4159, %v4097
      %v4192 = vadd.f32 %v4160, %v4102
      %v4193 = vadd.f32 %v4161, %v4107
      %v4194 = vadd.f32 %v4162, %v4112
      %v4195 = vadd.f32 %v4163, %v4117
      %v4196 = vadd.f32 %v4164, %v4122
      %v4197 = vadd.f32 %v4165, %v4127
      %v4198 = vadd.f32 %v4166, %v4132
      %4199 = vst.msk [vmem:[#allocation4] sm:$0xff] %vm171, %v4167
      %4200 = vst.msk [vmem:[#allocation4 + $0x8] sm:$0xff] %vm171, %v4168
      %4201 = vst.msk [vmem:[#allocation4 + $0x10] sm:$0xff] %vm171, %v4169
      %4202 = vst.msk [vmem:[#allocation4 + $0x18] sm:$0xff] %vm171, %v4170
      %4203 = vst.msk [vmem:[#allocation4 + $0x20] sm:$0xff] %vm171, %v4171
      %4204 = vst.msk [vmem:[#allocation4 + $0x28] sm:$0xff] %vm171, %v4172
      %4205 = vst.msk [vmem:[#allocation4 + $0x30] sm:$0xff] %vm171, %v4173
      %4206 = vst.msk [vmem:[#allocation4 + $0x38] sm:$0xff] %vm171, %v4174
      %4207 = vst.msk [vmem:[#allocation4 + $0x40] sm:$0xff] %vm171, %v4175
      %4208 = vst.msk [vmem:[#allocation4 + $0x48] sm:$0xff] %vm171, %v4176
      %4209 = vst.msk [vmem:[#allocation4 + $0x50] sm:$0xff] %vm171, %v4177
      %4210 = vst.msk [vmem:[#allocation4 + $0x58] sm:$0xff] %vm171, %v4178
      %4211 = vst.msk [vmem:[#allocation4 + $0x60] sm:$0xff] %vm171, %v4179
      %4212 = vst.msk [vmem:[#allocation4 + $0x68] sm:$0xff] %vm171, %v4180
      %4213 = vst.msk [vmem:[#allocation4 + $0x70] sm:$0xff] %vm171, %v4181
      %4214 = vst.msk [vmem:[#allocation4 + $0x78] sm:$0xff] %vm171, %v4182
      %4215 = vst.msk [vmem:[#allocation4 + $0x80] sm:$0xff] %vm171, %v4183
      %4216 = vst.msk [vmem:[#allocation4 + $0x88] sm:$0xff] %vm171, %v4184
      %4217 = vst.msk [vmem:[#allocation4 + $0x90] sm:$0xff] %vm171, %v4185
      %4218 = vst.msk [vmem:[#allocation4 + $0x98] sm:$0xff] %vm171, %v4186
      %4219 = vst.msk [vmem:[#allocation4 + $0xa0] sm:$0xff] %vm171, %v4187
      %4220 = vst.msk [vmem:[#allocation4 + $0xa8] sm:$0xff] %vm171, %v4188
      %4221 = vst.msk [vmem:[#allocation4 + $0xb0] sm:$0xff] %vm171, %v4189
      %4222 = vst.msk [vmem:[#allocation4 + $0xb8] sm:$0xff] %vm171, %v4190
      %4223 = vst.msk [vmem:[#allocation4 + $0xc0] sm:$0xff] %vm171, %v4191
      %4224 = vst.msk [vmem:[#allocation4 + $0xc8] sm:$0xff] %vm171, %v4192
      %4225 = vst.msk [vmem:[#allocation4 + $0xd0] sm:$0xff] %vm171, %v4193
      %4226 = vst.msk [vmem:[#allocation4 + $0xd8] sm:$0xff] %vm171, %v4194
      %4227 = vst.msk [vmem:[#allocation4 + $0xe0] sm:$0xff] %vm171, %v4195
      %4228 = vst.msk [vmem:[#allocation4 + $0xe8] sm:$0xff] %vm171, %v4196
      %4229 = vst.msk [vmem:[#allocation4 + $0xf0] sm:$0xff] %vm171, %v4197
      %4230 = vst.msk [vmem:[#allocation4 + $0xf8] sm:$0xff] %vm171, %v4198
      %v4231 = vld [vmem:[#allocation4] sm:$0xff]
      %v4232 = vld [vmem:[#allocation4 + $0x8] sm:$0xff]
      %v4233 = vld [vmem:[#allocation4 + $0x10] sm:$0xff]
      %v4234 = vld [vmem:[#allocation4 + $0x18] sm:$0xff]
      %v4235 = vld [vmem:[#allocation4 + $0x20] sm:$0xff]
      %v4236 = vld [vmem:[#allocation4 + $0x28] sm:$0xff]
      %v4237 = vld [vmem:[#allocation4 + $0x30] sm:$0xff]
      %v4238 = vld [vmem:[#allocation4 + $0x38] sm:$0xff]
      %v4239 = vld [vmem:[#allocation4 + $0x40] sm:$0xff]
      %v4240 = vld [vmem:[#allocation4 + $0x48] sm:$0xff]
      %v4241 = vld [vmem:[#allocation4 + $0x50] sm:$0xff]
      %v4242 = vld [vmem:[#allocation4 + $0x58] sm:$0xff]
      %v4243 = vld [vmem:[#allocation4 + $0x60] sm:$0xff]
      %v4244 = vld [vmem:[#allocation4 + $0x68] sm:$0xff]
      %v4245 = vld [vmem:[#allocation4 + $0x70] sm:$0xff]
      %v4246 = vld [vmem:[#allocation4 + $0x78] sm:$0xff]
      %v4247 = vld [vmem:[#allocation4 + $0x80] sm:$0xff]
      %v4248 = vld [vmem:[#allocation4 + $0x88] sm:$0xff]
      %v4249 = vld [vmem:[#allocation4 + $0x90] sm:$0xff]
      %v4250 = vld [vmem:[#allocation4 + $0x98] sm:$0xff]
      %v4251 = vld [vmem:[#allocation4 + $0xa0] sm:$0xff]
      %v4252 = vld [vmem:[#allocation4 + $0xa8] sm:$0xff]
      %v4253 = vld [vmem:[#allocation4 + $0xb0] sm:$0xff]
      %v4254 = vld [vmem:[#allocation4 + $0xb8] sm:$0xff]
      %v4255 = vld [vmem:[#allocation4 + $0xc0] sm:$0xff]
      %v4256 = vld [vmem:[#allocation4 + $0xc8] sm:$0xff]
      %v4257 = vld [vmem:[#allocation4 + $0xd0] sm:$0xff]
      %v4258 = vld [vmem:[#allocation4 + $0xd8] sm:$0xff]
      %v4259 = vld [vmem:[#allocation4 + $0xe0] sm:$0xff]
      %v4260 = vld [vmem:[#allocation4 + $0xe8] sm:$0xff]
      %v4261 = vld [vmem:[#allocation4 + $0xf0] sm:$0xff]
      %v4262 = vld [vmem:[#allocation4 + $0xf8] sm:$0xff]
      %v4263 = vsel %vm171, %v4231, 0.0
      %v4264 = vsel %vm171, %v4232, 0.0
      %v4265 = vadd.f32 %v4263, %v4264
      %v4266 = vsel %vm171, %v4233, 0.0
      %v4267 = vadd.f32 %v4265, %v4266
      %v4268 = vsel %vm171, %v4234, 0.0
      %v4269 = vadd.f32 %v4267, %v4268
      %v4270 = vsel %vm171, %v4235, 0.0
      %v4271 = vadd.f32 %v4269, %v4270
      %v4272 = vsel %vm171, %v4236, 0.0
      %v4273 = vadd.f32 %v4271, %v4272
      %v4274 = vsel %vm171, %v4237, 0.0
      %v4275 = vadd.f32 %v4273, %v4274
      %v4276 = vsel %vm171, %v4238, 0.0
      %v4277 = vadd.f32 %v4275, %v4276
      %v4278 = vsel %vm171, %v4239, 0.0
      %v4279 = vadd.f32 %v4277, %v4278
      %v4280 = vsel %vm171, %v4240, 0.0
      %v4281 = vadd.f32 %v4279, %v4280
      %v4282 = vsel %vm171, %v4241, 0.0
      %v4283 = vadd.f32 %v4281, %v4282
      %v4284 = vsel %vm171, %v4242, 0.0
      %v4285 = vadd.f32 %v4283, %v4284
      %v4286 = vsel %vm171, %v4243, 0.0
      %v4287 = vadd.f32 %v4285, %v4286
      %v4288 = vsel %vm171, %v4244, 0.0
      %v4289 = vadd.f32 %v4287, %v4288
      %v4290 = vsel %vm171, %v4245, 0.0
      %v4291 = vadd.f32 %v4289, %v4290
      %v4292 = vsel %vm171, %v4246, 0.0
      %v4293 = vadd.f32 %v4291, %v4292
      %v4294 = vsel %vm171, %v4247, 0.0
      %v4295 = vadd.f32 %v4293, %v4294
      %v4296 = vsel %vm171, %v4248, 0.0
      %v4297 = vadd.f32 %v4295, %v4296
      %v4298 = vsel %vm171, %v4249, 0.0
      %v4299 = vadd.f32 %v4297, %v4298
      %v4300 = vsel %vm171, %v4250, 0.0
      %v4301 = vadd.f32 %v4299, %v4300
      %v4302 = vsel %vm171, %v4251, 0.0
      %v4303 = vadd.f32 %v4301, %v4302
      %v4304 = vsel %vm171, %v4252, 0.0
      %v4305 = vadd.f32 %v4303, %v4304
      %v4306 = vsel %vm171, %v4253, 0.0
      %v4307 = vadd.f32 %v4305, %v4306
      %v4308 = vsel %vm171, %v4254, 0.0
      %v4309 = vadd.f32 %v4307, %v4308
      %v4310 = vsel %vm171, %v4255, 0.0
      %v4311 = vadd.f32 %v4309, %v4310
      %v4312 = vsel %vm171, %v4256, 0.0
      %v4313 = vadd.f32 %v4311, %v4312
      %v4314 = vsel %vm171, %v4257, 0.0
      %v4315 = vadd.f32 %v4313, %v4314
      %v4316 = vsel %vm171, %v4258, 0.0
      %v4317 = vadd.f32 %v4315, %v4316
      %v4318 = vsel %vm171, %v4259, 0.0
      %v4319 = vadd.f32 %v4317, %v4318
      %v4320 = vsel %vm171, %v4260, 0.0
      %v4321 = vadd.f32 %v4319, %v4320
      %v4322 = vsel %vm171, %v4261, 0.0
      %v4323 = vadd.f32 %v4321, %v4322
      %v4324 = vsel %vm171, %v4262, 0.0
      %v4325 = vadd.f32 %v4323, %v4324
      %v4326 = vrot.slane %v4325, 4
      %v4327 = vadd.f32 %v4325, %v4326
      %v4328 = vrot.slane %v4327, 2
      %v4329 = vadd.f32 %v4327, %v4328
      %v4330 = vrot.slane %v4329, 1
      %v4331 = vadd.f32 %v4329, %v4330
      %v4332 = vmul.f32 %v4231, %v4231
      %v4333 = vmul.f32 %v4232, %v4232
      %v4334 = vmul.f32 %v4233, %v4233
      %v4335 = vmul.f32 %v4234, %v4234
      %v4336 = vmul.f32 %v4235, %v4235
      %v4337 = vmul.f32 %v4236, %v4236
      %v4338 = vmul.f32 %v4237, %v4237
      %v4339 = vmul.f32 %v4238, %v4238
      %v4340 = vmul.f32 %v4239, %v4239
      %v4341 = vmul.f32 %v4240, %v4240
      %v4342 = vmul.f32 %v4241, %v4241
      %v4343 = vmul.f32 %v4242, %v4242
      %v4344 = vmul.f32 %v4243, %v4243
      %v4345 = vmul.f32 %v4244, %v4244
      %v4346 = vmul.f32 %v4245, %v4245
      %v4347 = vmul.f32 %v4246, %v4246
      %v4348 = vmul.f32 %v4247, %v4247
      %v4349 = vmul.f32 %v4248, %v4248
      %v4350 = vmul.f32 %v4249, %v4249
      %v4351 = vmul.f32 %v4250, %v4250
      %v4352 = vmul.f32 %v4251, %v4251
      %v4353 = vmul.f32 %v4252, %v4252
      %v4354 = vmul.f32 %v4253, %v4253
      %v4355 = vmul.f32 %v4254, %v4254
      %v4356 = vmul.f32 %v4255, %v4255
      %v4357 = vmul.f32 %v4256, %v4256
      %v4358 = vmul.f32 %v4257, %v4257
      %v4359 = vmul.f32 %v4258, %v4258
      %v4360 = vmul.f32 %v4259, %v4259
      %v4361 = vmul.f32 %v4260, %v4260
      %v4362 = vmul.f32 %v4261, %v4261
      %v4363 = vmul.f32 %v4262, %v4262
      %v4364 = vsel %vm171, %v4332, 0.0
      %v4365 = vsel %vm171, %v4333, 0.0
      %v4366 = vadd.f32 %v4364, %v4365
      %v4367 = vsel %vm171, %v4334, 0.0
      %v4368 = vadd.f32 %v4366, %v4367
      %v4369 = vsel %vm171, %v4335, 0.0
      %v4370 = vadd.f32 %v4368, %v4369
      %v4371 = vsel %vm171, %v4336, 0.0
      %v4372 = vadd.f32 %v4370, %v4371
      %v4373 = vsel %vm171, %v4337, 0.0
      %v4374 = vadd.f32 %v4372, %v4373
      %v4375 = vsel %vm171, %v4338, 0.0
      %v4376 = vadd.f32 %v4374, %v4375
      %v4377 = vsel %vm171, %v4339, 0.0
      %v4378 = vadd.f32 %v4376, %v4377
      %v4379 = vsel %vm171, %v4340, 0.0
      %v4380 = vadd.f32 %v4378, %v4379
      %v4381 = vsel %vm171, %v4341, 0.0
      %v4382 = vadd.f32 %v4380, %v4381
      %v4383 = vsel %vm171, %v4342, 0.0
      %v4384 = vadd.f32 %v4382, %v4383
      %v4385 = vsel %vm171, %v4343, 0.0
      %v4386 = vadd.f32 %v4384, %v4385
      %v4387 = vsel %vm171, %v4344, 0.0
      %v4388 = vadd.f32 %v4386, %v4387
      %v4389 = vsel %vm171, %v4345, 0.0
      %v4390 = vadd.f32 %v4388, %v4389
      %v4391 = vsel %vm171, %v4346, 0.0
      %v4392 = vadd.f32 %v4390, %v4391
      %v4393 = vsel %vm171, %v4347, 0.0
      %v4394 = vadd.f32 %v4392, %v4393
      %v4395 = vsel %vm171, %v4348, 0.0
      %v4396 = vadd.f32 %v4394, %v4395
      %v4397 = vsel %vm171, %v4349, 0.0
      %v4398 = vadd.f32 %v4396, %v4397
      %v4399 = vsel %vm171, %v4350, 0.0
      %v4400 = vadd.f32 %v4398, %v4399
      %v4401 = vsel %vm171, %v4351, 0.0
      %v4402 = vadd.f32 %v4400, %v4401
      %v4403 = vsel %vm171, %v4352, 0.0
      %v4404 = vadd.f32 %v4402, %v4403
      %v4405 = vsel %vm171, %v4353, 0.0
      %v4406 = vadd.f32 %v4404, %v4405
      %v4407 = vsel %vm171, %v4354, 0.0
      %v4408 = vadd.f32 %v4406, %v4407
      %v4409 = vsel %vm171, %v4355, 0.0
      %v4410 = vadd.f32 %v4408, %v4409
      %v4411 = vsel %vm171, %v4356, 0.0
      %v4412 = vadd.f32 %v4410, %v4411
      %v4413 = vsel %vm171, %v4357, 0.0
      %v4414 = vadd.f32 %v4412, %v4413
      %v4415 = vsel %vm171, %v4358, 0.0
      %v4416 = vadd.f32 %v4414, %v4415
      %v4417 = vsel %vm171, %v4359, 0.0
      %v4418 = vadd.f32 %v4416, %v4417
      %v4419 = vsel %vm171, %v4360, 0.0
      %v4420 = vadd.f32 %v4418, %v4419
      %v4421 = vsel %vm171, %v4361, 0.0
      %v4422 = vadd.f32 %v4420, %v4421
      %v4423 = vsel %vm171, %v4362, 0.0
      %v4424 = vadd.f32 %v4422, %v4423
      %v4425 = vsel %vm171, %v4363, 0.0
      %v4426 = vadd.f32 %v4424, %v4425
      %v4427 = vrot.slane %v4426, 4
      %v4428 = vadd.f32 %v4426, %v4427
      %v4429 = vrot.slane %v4428, 2
      %v4430 = vadd.f32 %v4428, %v4429
      %v4431 = vrot.slane %v4430, 1
      %v4432 = vadd.f32 %v4430, %v4431
      %v4433 = vmul.f32 %v4331, 0.00390625
      %v4434 = vmul.f32 %v4432, 0.00390625
      %v4435 = vmul.f32 %v4433, %v4433
      %v4436 = vsub.f32 %v4434, %v4435
      %v4437 = vsub.f32 %v4231, %v4433
      %v4438 = vsub.f32 %v4232, %v4433
      %v4439 = vsub.f32 %v4233, %v4433
      %v4440 = vsub.f32 %v4234, %v4433
      %v4441 = vsub.f32 %v4235, %v4433
      %v4442 = vsub.f32 %v4236, %v4433
      %v4443 = vsub.f32 %v4237, %v4433
      %v4444 = vsub.f32 %v4238, %v4433
      %v4445 = vsub.f32 %v4239, %v4433
      %v4446 = vsub.f32 %v4240, %v4433
      %v4447 = vsub.f32 %v4241, %v4433
      %v4448 = vsub.f32 %v4242, %v4433
      %v4449 = vsub.f32 %v4243, %v4433
      %v4450 = vsub.f32 %v4244, %v4433
      %v4451 = vsub.f32 %v4245, %v4433
      %v4452 = vsub.f32 %v4246, %v4433
      %v4453 = vsub.f32 %v4247, %v4433
      %v4454 = vsub.f32 %v4248, %v4433
      %v4455 = vsub.f32 %v4249, %v4433
      %v4456 = vsub.f32 %v4250, %v4433
      %v4457 = vsub.f32 %v4251, %v4433
      %v4458 = vsub.f32 %v4252, %v4433
      %v4459 = vsub.f32 %v4253, %v4433
      %v4460 = vsub.f32 %v4254, %v4433
      %v4461 = vsub.f32 %v4255, %v4433
      %v4462 = vsub.f32 %v4256, %v4433
      %v4463 = vsub.f32 %v4257, %v4433
      %v4464 = vsub.f32 %v4258, %v4433
      %v4465 = vsub.f32 %v4259, %v4433
      %v4466 = vsub.f32 %v4260, %v4433
      %v4467 = vsub.f32 %v4261, %v4433
      %v4468 = vsub.f32 %v4262, %v4433
      %v4469 = vadd.f32 %v4436, 1e-05
      %v4470 = vrsqrt.pop %v4469
      %v4471 = vmul.f32 %v4437, %v4470
      %v4472 = vmul.f32 %v4438, %v4470
      %v4473 = vmul.f32 %v4439, %v4470
      %v4474 = vmul.f32 %v4440, %v4470
      %v4475 = vmul.f32 %v4441, %v4470
      %v4476 = vmul.f32 %v4442, %v4470
      %v4477 = vmul.f32 %v4443, %v4470
      %v4478 = vmul.f32 %v4444, %v4470
      %v4479 = vmul.f32 %v4445, %v4470
      %v4480 = vmul.f32 %v4446, %v4470
      %v4481 = vmul.f32 %v4447, %v4470
      %v4482 = vmul.f32 %v4448, %v4470
      %v4483 = vmul.f32 %v4449, %v4470
      %v4484 = vmul.f32 %v4450, %v4470
      %v4485 = vmul.f32 %v4451, %v4470
      %v4486 = vmul.f32 %v4452, %v4470
      %v4487 = vmul.f32 %v4453, %v4470
      %v4488 = vmul.f32 %v4454, %v4470
      %v4489 = vmul.f32 %v4455, %v4470
      %v4490 = vmul.f32 %v4456, %v4470
      %v4491 = vmul.f32 %v4457, %v4470
      %v4492 = vmul.f32 %v4458, %v4470
      %v4493 = vmul.f32 %v4459, %v4470
      %v4494 = vmul.f32 %v4460, %v4470
      %v4495 = vmul.f32 %v4461, %v4470
      %v4496 = vmul.f32 %v4462, %v4470
      %v4497 = vmul.f32 %v4463, %v4470
      %v4498 = vmul.f32 %v4464, %v4470
      %v4499 = vmul.f32 %v4465, %v4470
      %v4500 = vmul.f32 %v4466, %v4470
      %v4501 = vmul.f32 %v4467, %v4470
      %v4502 = vmul.f32 %v4468, %v4470
      %v4503 = vld [vmem:[%s165] sm:$0xff]
      %v4504 = vld [vmem:[%s165 + $0x8] sm:$0xff]
      %v4505 = vld [vmem:[%s165 + $0x10] sm:$0xff]
      %v4506 = vld [vmem:[%s165 + $0x18] sm:$0xff]
      %v4507 = vld [vmem:[%s165 + $0x20] sm:$0xff]
      %v4508 = vld [vmem:[%s165 + $0x28] sm:$0xff]
      %v4509 = vld [vmem:[%s165 + $0x30] sm:$0xff]
      %v4510 = vld [vmem:[%s165 + $0x38] sm:$0xff]
      %v4511 = vld [vmem:[%s165 + $0x40] sm:$0xff]
      %v4512 = vld [vmem:[%s165 + $0x48] sm:$0xff]
      %v4513 = vld [vmem:[%s165 + $0x50] sm:$0xff]
      %v4514 = vld [vmem:[%s165 + $0x58] sm:$0xff]
      %v4515 = vld [vmem:[%s165 + $0x60] sm:$0xff]
      %v4516 = vld [vmem:[%s165 + $0x68] sm:$0xff]
      %v4517 = vld [vmem:[%s165 + $0x70] sm:$0xff]
      %v4518 = vld [vmem:[%s165 + $0x78] sm:$0xff]
      %v4519 = vld [vmem:[%s165 + $0x80] sm:$0xff]
      %v4520 = vld [vmem:[%s165 + $0x88] sm:$0xff]
      %v4521 = vld [vmem:[%s165 + $0x90] sm:$0xff]
      %v4522 = vld [vmem:[%s165 + $0x98] sm:$0xff]
      %v4523 = vld [vmem:[%s165 + $0xa0] sm:$0xff]
      %v4524 = vld [vmem:[%s165 + $0xa8] sm:$0xff]
      %v4525 = vld [vmem:[%s165 + $0xb0] sm:$0xff]
      %v4526 = vld [vmem:[%s165 + $0xb8] sm:$0xff]
      %v4527 = vld [vmem:[%s165 + $0xc0] sm:$0xff]
      %v4528 = vld [vmem:[%s165 + $0xc8] sm:$0xff]
      %v4529 = vld [vmem:[%s165 + $0xd0] sm:$0xff]
      %v4530 = vld [vmem:[%s165 + $0xd8] sm:$0xff]
      %v4531 = vld [vmem:[%s165 + $0xe0] sm:$0xff]
      %v4532 = vld [vmem:[%s165 + $0xe8] sm:$0xff]
      %v4533 = vld [vmem:[%s165 + $0xf0] sm:$0xff]
      %v4534 = vld [vmem:[%s165 + $0xf8] sm:$0xff]
      %v4535 = vadd.f32 %v4503, %v4471
      %v4536 = vadd.f32 %v4504, %v4472
      %v4537 = vadd.f32 %v4505, %v4473
      %v4538 = vadd.f32 %v4506, %v4474
      %v4539 = vadd.f32 %v4507, %v4475
      %v4540 = vadd.f32 %v4508, %v4476
      %v4541 = vadd.f32 %v4509, %v4477
      %v4542 = vadd.f32 %v4510, %v4478
      %v4543 = vadd.f32 %v4511, %v4479
      %v4544 = vadd.f32 %v4512, %v4480
      %v4545 = vadd.f32 %v4513, %v4481
      %v4546 = vadd.f32 %v4514, %v4482
      %v4547 = vadd.f32 %v4515, %v4483
      %v4548 = vadd.f32 %v4516, %v4484
      %v4549 = vadd.f32 %v4517, %v4485
      %v4550 = vadd.f32 %v4518, %v4486
      %v4551 = vadd.f32 %v4519, %v4487
      %v4552 = vadd.f32 %v4520, %v4488
      %v4553 = vadd.f32 %v4521, %v4489
      %v4554 = vadd.f32 %v4522, %v4490
      %v4555 = vadd.f32 %v4523, %v4491
      %v4556 = vadd.f32 %v4524, %v4492
      %v4557 = vadd.f32 %v4525, %v4493
      %v4558 = vadd.f32 %v4526, %v4494
      %v4559 = vadd.f32 %v4527, %v4495
      %v4560 = vadd.f32 %v4528, %v4496
      %v4561 = vadd.f32 %v4529, %v4497
      %v4562 = vadd.f32 %v4530, %v4498
      %v4563 = vadd.f32 %v4531, %v4499
      %v4564 = vadd.f32 %v4532, %v4500
      %v4565 = vadd.f32 %v4533, %v4501
      %v4566 = vadd.f32 %v4534, %v4502
      %4567 = vst.msk [vmem:[%s170] sm:$0xff] %vm171, %v4535
      %4568 = vst.msk [vmem:[%s170 + $0x8] sm:$0xff] %vm171, %v4536
      %4569 = vst.msk [vmem:[%s170 + $0x10] sm:$0xff] %vm171, %v4537
      %4570 = vst.msk [vmem:[%s170 + $0x18] sm:$0xff] %vm171, %v4538
      %4571 = vst.msk [vmem:[%s170 + $0x20] sm:$0xff] %vm171, %v4539
      %4572 = vst.msk [vmem:[%s170 + $0x28] sm:$0xff] %vm171, %v4540
      %4573 = vst.msk [vmem:[%s170 + $0x30] sm:$0xff] %vm171, %v4541
      %4574 = vst.msk [vmem:[%s170 + $0x38] sm:$0xff] %vm171, %v4542
      %4575 = vst.msk [vmem:[%s170 + $0x40] sm:$0xff] %vm171, %v4543
      %4576 = vst.msk [vmem:[%s170 + $0x48] sm:$0xff] %vm171, %v4544
      %4577 = vst.msk [vmem:[%s170 + $0x50] sm:$0xff] %vm171, %v4545
      %4578 = vst.msk [vmem:[%s170 + $0x58] sm:$0xff] %vm171, %v4546
      %4579 = vst.msk [vmem:[%s170 + $0x60] sm:$0xff] %vm171, %v4547
      %4580 = vst.msk [vmem:[%s170 + $0x68] sm:$0xff] %vm171, %v4548
      %4581 = vst.msk [vmem:[%s170 + $0x70] sm:$0xff] %vm171, %v4549
      %4582 = vst.msk [vmem:[%s170 + $0x78] sm:$0xff] %vm171, %v4550
      %4583 = vst.msk [vmem:[%s170 + $0x80] sm:$0xff] %vm171, %v4551
      %4584 = vst.msk [vmem:[%s170 + $0x88] sm:$0xff] %vm171, %v4552
      %4585 = vst.msk [vmem:[%s170 + $0x90] sm:$0xff] %vm171, %v4553
      %4586 = vst.msk [vmem:[%s170 + $0x98] sm:$0xff] %vm171, %v4554
      %4587 = vst.msk [vmem:[%s170 + $0xa0] sm:$0xff] %vm171, %v4555
      %4588 = vst.msk [vmem:[%s170 + $0xa8] sm:$0xff] %vm171, %v4556
      %4589 = vst.msk [vmem:[%s170 + $0xb0] sm:$0xff] %vm171, %v4557
      %4590 = vst.msk [vmem:[%s170 + $0xb8] sm:$0xff] %vm171, %v4558
      %4591 = vst.msk [vmem:[%s170 + $0xc0] sm:$0xff] %vm171, %v4559
      %4592 = vst.msk [vmem:[%s170 + $0xc8] sm:$0xff] %vm171, %v4560
      %4593 = vst.msk [vmem:[%s170 + $0xd0] sm:$0xff] %vm171, %v4561
      %4594 = vst.msk [vmem:[%s170 + $0xd8] sm:$0xff] %vm171, %v4562
      %4595 = vst.msk [vmem:[%s170 + $0xe0] sm:$0xff] %vm171, %v4563
      %4596 = vst.msk [vmem:[%s170 + $0xe8] sm:$0xff] %vm171, %v4564
      %4597 = vst.msk [vmem:[%s170 + $0xf0] sm:$0xff] %vm171, %v4565
      %4598 = vst.msk [vmem:[%s170 + $0xf8] sm:$0xff] %vm171, %v4566
      %p4599 = scmp.lt.s32.totalorder %s14, 1
      %s4600 = scalar_select %p4599, %s14, 1
      %s4601 = smul.addr %s4600, 32
      %s4602 = smul.addr %s4601, 8
      %s4603 = scalar_lea.vmem %s3, %s4602
      // Predicated region
      $region33: #{tpu_custom_call.1} parent=31 // pred_check
        %p4604 = pneg %p100
      $region34: #{tpu_custom_call.1} parent=31 // pred_check_branch
        %4606 = sbr.rel (%p4604) target = $region36
      $region35: #{tpu_custom_call.1} parent=31 // pred_region
        _
      $region36: #{tpu_custom_call.1} parent=31 // pred_fallthru
        _
    $region32: #{tpu_custom_call.1} parent=5 // pred_fallthru
      _
    %p4607 = scmp.le.s32.totalorder 2, %s9
    // Predicated region
    $region37: #{tpu_custom_call.1} parent=5 // pred_check
      %p4608 = pneg %p4607
    $region38: #{tpu_custom_call.1} parent=5 // pred_check_branch
      %4610 = sbr.rel (%p4608) target = $region40
    $region39: #{tpu_custom_call.1} parent=5 // pred_region
      %s4611 = ssub.s32 %s9, 2
      // Predicated region
      $region41: #{tpu_custom_call.1} parent=39 // pred_check
        %p4612 = pneg %p106
      $region42: #{tpu_custom_call.1} parent=39 // pred_check_branch
        %4614 = sbr.rel (%p4612) target = $region44
      $region43: #{tpu_custom_call.1} parent=39 // pred_region
        %p4615 = scmp.lt.s32.totalorder %s15, 1
        %s4616 = scalar_select %p4615, %s15, 1
        %s4617 = smul.addr %s4616, 32
        %s4618 = smul.addr %s4617, 8
        %s4619 = scalar_lea.vmem %s3, %s4618
      $region44: #{tpu_custom_call.1} parent=39 // pred_fallthru
        _
    $region40: #{tpu_custom_call.1} parent=5 // pred_fallthru
      _
  $region6: #{tpu_custom_call.1} parent=0 // loop_footer
    %s13 = sadd.s32 1, %s9
  $region7: #{tpu_custom_call.1} parent=0 // loop_footer_branch
    %8 = sbr.rel target = $region3
  $region8: #{tpu_custom_call.1} parent=0 // loop_exit
    _

</llo_original>
